<compile_context>
chip_gen: v6e
topology: v6e:2x2x1
jax: 0.10.0
libtpu: 0.0.40
codegen_flags: <defaults>
</compile_context>

<pallas_src>
import math

import jax
import jax.numpy as jnp
from jax.experimental import pallas as pl
from jax.experimental.pallas import tpu as pltpu

D_NODE = 256
N_HEAD = 8
FF_FACTOR = 1          # dim_feedforward = ff_factor * d_node
MASK_NEG = -1e30       # additive key-padding mask value (finite "-inf")
LN_EPS = 1e-5          # PyTorch TransformerDecoderLayer default layer_norm_eps


# ---------------------------------------------------------------------------
# sinusoidal energy ("time") embedding  -- tiny, stays in plain JAX glue
# ---------------------------------------------------------------------------
def get_time_embedding(t, dim, max_positions=2056):
    # TODO(synk): get_time_embedding() is not shown in the source file; this is
    # the standard DDPM sinusoidal embedding (sin || cos, log-spaced freqs).
    half = dim // 2
    freqs = jnp.exp(-math.log(max_positions)
                    * jnp.arange(half, dtype=jnp.float32) / (half - 1))
    args = t.astype(jnp.float32)[:, None] * freqs[None, :]
    return jnp.concatenate([jnp.sin(args), jnp.cos(args)], axis=-1)  # (B, dim)


# ---------------------------------------------------------------------------
# fused TransformerDecoderLayer kernel (one (batch, query-tile) per grid step)
# ---------------------------------------------------------------------------
def _decoder_layer_kernel(x_ref, madd_ref, ca_ref,
                          wattn_ref, battn_ref,
                          wff1_ref, bff1_ref, wff2_ref, bff2_ref,
                          ln_ref, out_ref, kv_ref):
    L = x_ref.shape[1]
    D = x_ref.shape[2]
    TQ = out_ref.shape[1]
    H = N_HEAD
    HD = D // H
    scale = 1.0 / math.sqrt(HD)
    qi = pl.program_id(1)

    # ---- K/V projection: computed once per batch (q-tile 0), cached (bf16) --
    @pl.when(qi == 0)
    def _():
        xk = x_ref[0].astype(jnp.bfloat16)                        # (L, D)
        wkv = wattn_ref[:, D:3 * D]                               # (D, 2D) bf16, fused K|V
        kv = jnp.dot(xk, wkv, preferred_element_type=jnp.float32)
        kv = kv + battn_ref[:, D:3 * D]                           # f32 bias add
        kv_ref[...] = kv.astype(jnp.bfloat16)

    def layer_norm(x, row):                                       # f32 statistics
        g = ln_ref[row:row + 1, :]
        b = ln_ref[row + 3:row + 4, :]
        mu = jnp.mean(x, axis=-1, keepdims=True)
        xc = x - mu
        var = jnp.mean(xc * xc, axis=-1, keepdims=True)
        return xc * jax.lax.rsqrt(var + LN_EPS) * g + b

    # ---- query tile sliced from the resident full-sequence block ------------
    row0 = pl.multiple_of(qi * TQ, TQ)
    xq = x_ref[0, pl.ds(row0, TQ), :].astype(jnp.float32)         # (TQ, D) residual (f32)

    q = jnp.dot(xq.astype(jnp.bfloat16), wattn_ref[:, 0:D],
                preferred_element_type=jnp.float32) + battn_ref[:, 0:D]
    q = q * scale                                                  # fold 1/sqrt(HD) into q
    q_bf = q.astype(jnp.bfloat16)

    madd = jnp.broadcast_to(madd_ref[0], (TQ, L))                  # hoisted mask broadcast

    # ---- 8-head self-attention with per-head out-proj accumulation ----------
    sa = jnp.zeros((TQ, D), jnp.float32)
    for hh in range(H):                                            # static unroll
        lo = hh * HD
        qh = q_bf[:, lo:lo + HD]                                   # (TQ, HD) bf16
        kh = kv_ref[:, lo:lo + HD]                                 # (L, HD)  bf16
        vh = kv_ref[:, D + lo:D + lo + HD]                         # (L, HD)  bf16
        s = jax.lax.dot_general(qh, kh, (((1,), (1,)), ((), ())),
                                preferred_element_type=jnp.float32)   # (TQ, L) f32
        s = s + madd
        m = jnp.max(s, axis=-1, keepdims=True)
        p = jnp.exp(s - m)                                         # f32 (EUP/VPU)
        denom = jnp.sum(p, axis=-1, keepdims=True)
        o = jnp.dot(p.astype(jnp.bfloat16), vh,
                    preferred_element_type=jnp.float32)            # (TQ, HD)
        o = o * pl.reciprocal(denom, approx=True)                  # deferred softmax norm
        woh = wattn_ref[lo:lo + HD, 3 * D:4 * D]                   # (HD, D) bf16
        sa = sa + jnp.dot(o.astype(jnp.bfloat16), woh,
                          preferred_element_type=jnp.float32)      # accumulate out-proj
    sa = sa + battn_ref[:, 3 * D:4 * D]

    x = layer_norm(xq + sa, 0)

    # ---- cross-attention over the length-1 energy memory --------------------
    # softmax over a single key == 1; out_proj(v_proj(memory)) precomputed
    # in the wrapper and passed as ca (B,1,D).
    x = layer_norm(x + ca_ref[0], 1)

    # ---- feed-forward --------------------------------------------------------
    h1 = jnp.dot(x.astype(jnp.bfloat16), wff1_ref[...],
                 preferred_element_type=jnp.float32) + bff1_ref[...]
    h1 = jnp.maximum(h1, 0.0)
    ff = jnp.dot(h1.astype(jnp.bfloat16), wff2_ref[...],
                 preferred_element_type=jnp.float32) + bff2_ref[...]
    x = layer_norm(x + ff, 2)

    out_ref[0] = x.astype(out_ref.dtype)


# ---------------------------------------------------------------------------
# parameter init (weights stored as (in, out) == transpose of PyTorch (out,in))
# ---------------------------------------------------------------------------
def init_params(key, d_node=D_NODE, n_head=N_HEAD, ff_factor=FF_FACTOR):
    del n_head  # only d_node determines shapes
    d_ff = ff_factor * d_node
    ks = jax.random.split(key, 6)

    def linear(k, fan_in, fan_out):
        kw, kb = jax.random.split(k)
        bound = 1.0 / math.sqrt(fan_in)
        w = jax.random.uniform(kw, (fan_in, fan_out), jnp.float32, -bound, bound)
        b = jax.random.uniform(kb, (1, fan_out), jnp.float32, -bound, bound)
        return w, b

    w_qkv, b_qkv = linear(ks[0], d_node, 3 * d_node)   # self-attn in_proj
    w_o, b_o = linear(ks[1], d_node, d_node)           # self-attn out_proj
    w_vc, b_vc = linear(ks[2], d_node, d_node)         # cross-attn value proj
    w_oc, b_oc = linear(ks[3], d_node, d_node)         # cross-attn out_proj
    w_ff1, b_ff1 = linear(ks[4], d_node, d_ff)
    w_ff2, b_ff2 = linear(ks[5], d_ff, d_node)
    return dict(
        w_qkv=w_qkv, b_qkv=b_qkv, w_o=w_o, b_o=b_o,
        w_vc=w_vc, b_vc=b_vc, w_oc=w_oc, b_oc=b_oc,
        w_ff1=w_ff1, b_ff1=b_ff1, w_ff2=w_ff2, b_ff2=b_ff2,
        ln_g=jnp.ones((3, d_node), jnp.float32),       # norm1 / norm2 / norm3
        ln_b=jnp.zeros((3, d_node), jnp.float32))


# ---------------------------------------------------------------------------
# tiling: pick a query tile (multiple of 8, <= 256) and pad L up to a multiple
# ---------------------------------------------------------------------------
def _choose_tiling(L, cap=256):
    if L <= cap:
        tq = max(8, ((L + 7) // 8) * 8)
        return tq, tq                       # single query tile, L padded to TQ
    for t in range(cap, 7, -8):             # prefer an exact divisor (no padding)
        if L % t == 0:
            return L, t
    l_pad = ((L + cap - 1) // cap) * cap
    return l_pad, cap


# ---------------------------------------------------------------------------
# forward wrapper
# ---------------------------------------------------------------------------
def energy_adapter_node_forward(params, node, energy, mask=None):
    """Pallas equivalent of Energy_Adapter_Node.forward (eval mode).

    node:   (B, L, d_node) float32
    energy: (B,) float
    mask:   (B, L) with 1 = valid, 0 = padded (the reference inverts it into
            tgt_key_padding_mask)
    """
    B, L, D = node.shape
    assert D == params['w_qkv'].shape[0]
    assert D % N_HEAD == 0 and D % 128 == 0

    # glue (tiny, plain JAX): energy embedding + exact single-key cross-attn out
    emb = get_time_embedding(energy, D, max_positions=2056)[:, None, :]          # (B,1,D)
    ca = (emb @ params['w_vc'] + params['b_vc']) @ params['w_oc'] + params['b_oc']  # (B,1,D)

    # pad L so the query tile is (8,128)-aligned and VMEM-bounded
    L_pad, TQ = _choose_tiling(L)
    pad = L_pad - L
    node_p = jnp.pad(node, ((0, 0), (0, pad), (0, 0))) if pad else node
    valid = (jnp.ones((B, L), jnp.float32) if mask is None
             else mask.astype(jnp.float32))
    if pad:
        valid = jnp.pad(valid, ((0, 0), (0, pad)))        # padded keys -> masked out
    mask_add = ((1.0 - valid) * MASK_NEG)[:, None, :]     # (B, 1, L_pad) additive bias

    # pack weights (bf16 for the MXU); biases / LayerNorm params stay f32
    w_attn = jnp.concatenate([params['w_qkv'], params['w_o']], axis=1).astype(jnp.bfloat16)
    b_attn = jnp.concatenate([params['b_qkv'], params['b_o']], axis=1)           # (1, 4D) f32
    w_ff1 = params['w_ff1'].astype(jnp.bfloat16)
    w_ff2 = params['w_ff2'].astype(jnp.bfloat16)
    ln_gb = jnp.concatenate([params['ln_g'], params['ln_b']], axis=0)            # (6, D) f32

    grid = (B, L_pad // TQ)

    def const_spec(a):
        return pl.BlockSpec(a.shape, lambda b, q, _n=a.ndim: (0,) * _n)

    out = pl.pallas_call(
        _decoder_layer_kernel,
        out_shape=jax.ShapeDtypeStruct((B, L_pad, D), node.dtype),
        grid=grid,
        in_specs=[
            pl.BlockSpec((1, L_pad, D), lambda b, q: (b, 0, 0)),   # full sequence (resident per b)
            pl.BlockSpec((1, 1, L_pad), lambda b, q: (b, 0, 0)),   # additive key-padding mask
            pl.BlockSpec((1, 1, D), lambda b, q: (b, 0, 0)),       # precomputed cross-attn output
            const_spec(w_attn), const_spec(b_attn),
            const_spec(w_ff1), const_spec(params['b_ff1']),
            const_spec(w_ff2), const_spec(params['b_ff2']),
            const_spec(ln_gb),
        ],
        out_specs=pl.BlockSpec((1, TQ, D), lambda b, q: (b, q, 0)),
        scratch_shapes=[pltpu.VMEM((L_pad, 2 * D), jnp.bfloat16)],  # cached K|V per batch
        compiler_params=pltpu.CompilerParams(
            # batch parallel (v7x megacore splits on B); q arbitrary so the
            # K/V scratch written at q==0 is valid for all later q tiles.
            dimension_semantics=("parallel", "arbitrary"),
            vmem_limit_bytes=48 * 1024 * 1024),
    )(node_p, mask_add, ca, w_attn, b_attn, w_ff1, params['b_ff1'],
      w_ff2, params['b_ff2'], ln_gb)
    return out[:, :L, :] if pad else out


# ---------------------------------------------------------------------------
# pure-JAX f32 reference (same math, no Pallas) for a sanity check
# ---------------------------------------------------------------------------
def _reference_forward(params, node, energy, mask=None):
    B, L, D = node.shape
    H, HD = N_HEAD, D // N_HEAD
    emb = get_time_embedding(energy, D, max_positions=2056)[:, None, :]
    madd = (jnp.zeros((B, L), jnp.float32) if mask is None
            else (1.0 - mask.astype(jnp.float32)) * MASK_NEG)

    def ln(x, row):
        g = params['ln_g'][row:row + 1]
        b = params['ln_b'][row:row + 1]
        mu = jnp.mean(x, axis=-1, keepdims=True)
        xc = x - mu
        var = jnp.mean(xc * xc, axis=-1, keepdims=True)
        return xc * jax.lax.rsqrt(var + LN_EPS) * g + b

    x = node.astype(jnp.float32)
    qkv = x @ params['w_qkv'] + params['b_qkv']
    q, k, v = qkv[..., :D], qkv[..., D:2 * D], qkv[..., 2 * D:]
    qh = q.reshape(B, L, H, HD).transpose(0, 2, 1, 3)
    kh = k.reshape(B, L, H, HD).transpose(0, 2, 1, 3)
    vh = v.reshape(B, L, H, HD).transpose(0, 2, 1, 3)
    s = jnp.einsum('bhqd,bhkd->bhqk', qh, kh) / math.sqrt(HD)
    s = s + madd[:, None, None, :]
    p = jax.nn.softmax(s, axis=-1)
    o = jnp.einsum('bhqk,bhkd->bhqd', p, vh).transpose(0, 2, 1, 3).reshape(B, L, D)
    x = ln(x + (o @ params['w_o'] + params['b_o']), 0)
    ca = (emb @ params['w_vc'] + params['b_vc']) @ params['w_oc'] + params['b_oc']
    x = ln(x + ca, 1)
    h = jax.nn.relu(x @ params['w_ff1'] + params['b_ff1'])
    x = ln(x + (h @ params['w_ff2'] + params['b_ff2']), 2)
    return x


if __name__ == "__main__":
    key = jax.random.PRNGKey(0)
    kp, kn, ke, kn2 = jax.random.split(key, 4)

    B, L = 2, 16
    params = init_params(kp)

    node = jax.random.normal(kn, (B, L, D_NODE), jnp.float32)
    energy = jax.random.uniform(ke, (B,), jnp.float32, 0.0, 100.0)
    # mask: 1 = valid residue, 0 = padded (second batch has 5 padded positions)
    mask = (jnp.arange(L)[None, :] < jnp.array([L, L - 5])[:, None]).astype(jnp.float32)

    out = energy_adapter_node_forward(params, node, energy, mask)
    out = jax.block_until_ready(out)
    assert out.shape == (B, L, D_NODE)
    assert bool(jnp.all(jnp.isfinite(out)))

    ref = _reference_forward(params, node, energy, mask)
    err = float(jnp.max(jnp.abs(out - ref)))
    assert err < 1e-1, f"kernel vs reference mismatch: max abs err = {err}"

    # second check: awkward L (exercises the padding + key-mask-extension path)
    L2 = 13
    node2 = jax.random.normal(kn2, (B, L2, D_NODE), jnp.float32)
    out2 = jax.block_until_ready(energy_adapter_node_forward(params, node2, energy, None))
    ref2 = _reference_forward(params, node2, energy, None)
    err2 = float(jnp.max(jnp.abs(out2 - ref2)))
    assert out2.shape == (B, L2, D_NODE)
    assert err2 < 1e-1, f"padded-path mismatch: max abs err = {err2}"

    print("KERNEL_OK")
</pallas_src>

<mosaic_0001>
module attributes {stable_mosaic.version = 11 : i64} {
  func.func @_decoder_layer_kernel(%arg0: i32, %arg1: i32, %arg2: memref<1x16x256xf32, #tpu.memory_space<vmem>>, %arg3: memref<1x1x16xf32, #tpu.memory_space<vmem>>, %arg4: memref<1x1x256xf32, #tpu.memory_space<vmem>>, %arg5: memref<256x1024xbf16, #tpu.memory_space<vmem>>, %arg6: memref<1x1024xf32, #tpu.memory_space<vmem>>, %arg7: memref<256x256xbf16, #tpu.memory_space<vmem>>, %arg8: memref<1x256xf32, #tpu.memory_space<vmem>>, %arg9: memref<256x256xbf16, #tpu.memory_space<vmem>>, %arg10: memref<1x256xf32, #tpu.memory_space<vmem>>, %arg11: memref<6x256xf32, #tpu.memory_space<vmem>>, %arg12: memref<1x16x256xf32, #tpu.memory_space<vmem>>, %arg13: memref<16x512xbf16, #tpu.memory_space<vmem>>) attributes {dimension_semantics = [#tpu.dimension_semantics<parallel>, #tpu.dimension_semantics<arbitrary>], iteration_bounds = array<i64: 2, 1>, scalar_prefetch = 0 : i64, scratch_operands = 1 : i64, tpu.core_type = #tpu.core_type<tc>, window_params = [{transform_indices = @transform_0, window_bounds = array<i64: 1, 16, 256>}, {transform_indices = @transform_1, window_bounds = array<i64: 1, 1, 16>}, {transform_indices = @transform_2, window_bounds = array<i64: 1, 1, 256>}, {pipeline_mode = #tpu.pipeline_mode<synchronous>, transform_indices = @transform_3, window_bounds = array<i64: 256, 1024>}, {pipeline_mode = #tpu.pipeline_mode<synchronous>, transform_indices = @transform_4, window_bounds = array<i64: 1, 1024>}, {pipeline_mode = #tpu.pipeline_mode<synchronous>, transform_indices = @transform_5, window_bounds = array<i64: 256, 256>}, {pipeline_mode = #tpu.pipeline_mode<synchronous>, transform_indices = @transform_6, window_bounds = array<i64: 1, 256>}, {pipeline_mode = #tpu.pipeline_mode<synchronous>, transform_indices = @transform_7, window_bounds = array<i64: 256, 256>}, {pipeline_mode = #tpu.pipeline_mode<synchronous>, transform_indices = @transform_8, window_bounds = array<i64: 1, 256>}, {pipeline_mode = #tpu.pipeline_mode<synchronous>, transform_indices = @transform_9, window_bounds = array<i64: 6, 256>}, {transform_indices = @transform_10, window_bounds = array<i64: 1, 16, 256>}]} {
    %c0_i32 = arith.constant 0 : i32
    %0 = arith.cmpi eq, %arg1, %c0_i32 : i32
    %1 = arith.extui %0 : i1 to i32
    %c0_i32_0 = arith.constant 0 : i32
    %2 = arith.cmpi ne, %1, %c0_i32_0 : i32
    scf.if %2 {
      %c0_124 = arith.constant 0 : index
      %c0_125 = arith.constant 0 : index
      %c0_126 = arith.constant 0 : index
      %282 = vector.load %arg2[%c0_124, %c0_125, %c0_126] : memref<1x16x256xf32, #tpu.memory_space<vmem>>, vector<1x16x256xf32>
      %283 = vector.shape_cast %282 : vector<1x16x256xf32> to vector<16x256xf32>
      %284 = arith.truncf %283 : vector<16x256xf32> to vector<16x256xbf16>
      %c0_127 = arith.constant 0 : index
      %c256_128 = arith.constant 256 : index
      %285 = vector.load %arg5[%c0_127, %c256_128] : memref<256x1024xbf16, #tpu.memory_space<vmem>>, vector<256x512xbf16>
      %cst_129 = arith.constant dense<0.000000e+00> : vector<16x512xf32>
      %286 = tpu.matmul %284, %285, %cst_129 {dimension_numbers = #tpu.dot_dimension_numbers<[1], [0], [0], [1], [0, 0, 1, 1], [], []>} : vector<16x256xbf16>, vector<256x512xbf16>, vector<16x512xf32> -> vector<16x512xf32>
      %c0_130 = arith.constant 0 : index
      %c256_131 = arith.constant 256 : index
      %287 = vector.load %arg6[%c0_130, %c256_131] : memref<1x1024xf32, #tpu.memory_space<vmem>>, vector<1x512xf32>
      %288 = vector.broadcast %287 : vector<1x512xf32> to vector<16x512xf32>
      %289 = arith.addf %286, %288 : vector<16x512xf32>
      %290 = arith.truncf %289 : vector<16x512xf32> to vector<16x512xbf16>
      %c0_132 = arith.constant 0 : index
      %c0_133 = arith.constant 0 : index
      %291 = vector.load %arg13[%c0_132, %c0_133] : memref<16x512xbf16, #tpu.memory_space<vmem>>, vector<16x512xbf16>
      tpu.vector_store %arg13[%c0_132, %c0_133], %290 {strides = array<i32>} : memref<16x512xbf16, #tpu.memory_space<vmem>>, vector<16x512xbf16>,
    } else {
    }
    %c16_i32 = arith.constant 16 : i32
    %3 = arith.muli %arg1, %c16_i32 : i32
    %4 = tpu.assume_multiple %3, 16 : i32
    %c0 = arith.constant 0 : index
    %5 = arith.index_cast %4 : i32 to index
    %c0_1 = arith.constant 0 : index
    %6 = vector.load %arg2[%c0, %5, %c0_1] : memref<1x16x256xf32, #tpu.memory_space<vmem>>, vector<1x16x256xf32>
    %7 = vector.shape_cast %6 : vector<1x16x256xf32> to vector<16x256xf32>
    %8 = arith.truncf %7 : vector<16x256xf32> to vector<16x256xbf16>
    %c0_2 = arith.constant 0 : index
    %c0_3 = arith.constant 0 : index
    %9 = vector.load %arg5[%c0_2, %c0_3] : memref<256x1024xbf16, #tpu.memory_space<vmem>>, vector<256x256xbf16>
    %cst = arith.constant dense<0.000000e+00> : vector<16x256xf32>
    %10 = tpu.matmul %8, %9, %cst {dimension_numbers = #tpu.dot_dimension_numbers<[1], [0], [0], [1], [0, 0, 1, 1], [], []>} : vector<16x256xbf16>, vector<256x256xbf16>, vector<16x256xf32> -> vector<16x256xf32>
    %c0_4 = arith.constant 0 : index
    %c0_5 = arith.constant 0 : index
    %11 = vector.load %arg6[%c0_4, %c0_5] : memref<1x1024xf32, #tpu.memory_space<vmem>>, vector<1x256xf32>
    %12 = vector.broadcast %11 : vector<1x256xf32> to vector<16x256xf32>
    %13 = arith.addf %10, %12 : vector<16x256xf32>
    %cst_6 = arith.constant 0.176776692 : f32
    %14 = vector.broadcast %cst_6 : f32 to vector<16x256xf32>
    %15 = arith.mulf %13, %14 : vector<16x256xf32>
    %16 = arith.truncf %15 : vector<16x256xf32> to vector<16x256xbf16>
    %c0_7 = arith.constant 0 : index
    %c0_8 = arith.constant 0 : index
    %c0_9 = arith.constant 0 : index
    %17 = vector.load %arg3[%c0_7, %c0_8, %c0_9] : memref<1x1x16xf32, #tpu.memory_space<vmem>>, vector<1x1x16xf32>
    %18 = vector.shape_cast %17 : vector<1x1x16xf32> to vector<1x16xf32>
    %19 = vector.shape_cast %18 : vector<1x16xf32> to vector<1x16xf32>
    %20 = vector.broadcast %19 : vector<1x16xf32> to vector<16x16xf32>
    %cst_10 = arith.constant 0.000000e+00 : f32
    %21 = vector.broadcast %cst_10 : f32 to vector<16x256xf32>
    %22 = vector.extract_strided_slice %16 {offsets = [0, 0], sizes = [16, 32], strides = [1, 1]} : vector<16x256xbf16> to vector<16x32xbf16>
    %c0_11 = arith.constant 0 : index
    %c0_12 = arith.constant 0 : index
    %23 = vector.load %arg13[%c0_11, %c0_12] : memref<16x512xbf16, #tpu.memory_space<vmem>>, vector<16x32xbf16>
    %c0_13 = arith.constant 0 : index
    %c256 = arith.constant 256 : index
    %24 = vector.load %arg13[%c0_13, %c256] : memref<16x512xbf16, #tpu.memory_space<vmem>>, vector<16x32xbf16>
    %cst_14 = arith.constant dense<0.000000e+00> : vector<16x16xf32>
    %25 = tpu.matmul %22, %23, %cst_14 {dimension_numbers = #tpu.dot_dimension_numbers<[1], [1], [0], [0], [0, 0, 1, 0], [], []>} : vector<16x32xbf16>, vector<16x32xbf16>, vector<16x16xf32> -> vector<16x16xf32>
    %26 = arith.addf %25, %20 : vector<16x16xf32>
    %cst_15 = arith.constant dense<0xFF800000> : vector<16xf32>
    %27 = vector.multi_reduction <maximumf>, %26, %cst_15 [1] : vector<16x16xf32> to vector<16xf32>
    %28 = vector.shape_cast %27 : vector<16xf32> to vector<16x1xf32>
    %29 = vector.broadcast %28 : vector<16x1xf32> to vector<16x16xf32>
    %30 = arith.subf %26, %29 : vector<16x16xf32>
    %31 = math.exp %30 : vector<16x16xf32>
    %cst_16 = arith.constant dense<0.000000e+00> : vector<16xf32>
    %32 = vector.multi_reduction <add>, %31, %cst_16 [1] : vector<16x16xf32> to vector<16xf32>
    %33 = vector.shape_cast %32 : vector<16xf32> to vector<16x1xf32>
    %34 = arith.truncf %31 : vector<16x16xf32> to vector<16x16xbf16>
    %cst_17 = arith.constant dense<0.000000e+00> : vector<16x32xf32>
    %35 = tpu.matmul %34, %24, %cst_17 {dimension_numbers = #tpu.dot_dimension_numbers<[1], [0], [0], [1], [0, 0, 1, 1], [], []>} : vector<16x16xbf16>, vector<16x32xbf16>, vector<16x32xf32> -> vector<16x32xf32>
    %36 = tpu.reciprocal %33 {approx = true} : vector<16x1xf32> -> vector<16x1xf32>
    %37 = vector.broadcast %36 : vector<16x1xf32> to vector<16x32xf32>
    %38 = arith.mulf %35, %37 : vector<16x32xf32>
    %c0_18 = arith.constant 0 : index
    %c768 = arith.constant 768 : index
    %39 = vector.load %arg5[%c0_18, %c768] : memref<256x1024xbf16, #tpu.memory_space<vmem>>, vector<32x256xbf16>
    %40 = arith.truncf %38 : vector<16x32xf32> to vector<16x32xbf16>
    %cst_19 = arith.constant dense<0.000000e+00> : vector<16x256xf32>
    %41 = tpu.matmul %40, %39, %cst_19 {dimension_numbers = #tpu.dot_dimension_numbers<[1], [0], [0], [1], [0, 0, 1, 1], [], []>} : vector<16x32xbf16>, vector<32x256xbf16>, vector<16x256xf32> -> vector<16x256xf32>
    %42 = arith.addf %21, %41 : vector<16x256xf32>
    %43 = vector.extract_strided_slice %16 {offsets = [0, 32], sizes = [16, 32], strides = [1, 1]} : vector<16x256xbf16> to vector<16x32xbf16>
    %c0_20 = arith.constant 0 : index
    %c32 = arith.constant 32 : index
    %44 = vector.load %arg13[%c0_20, %c32] : memref<16x512xbf16, #tpu.memory_space<vmem>>, vector<16x32xbf16>
    %c0_21 = arith.constant 0 : index
    %c288 = arith.constant 288 : index
    %45 = vector.load %arg13[%c0_21, %c288] : memref<16x512xbf16, #tpu.memory_space<vmem>>, vector<16x32xbf16>
    %cst_22 = arith.constant dense<0.000000e+00> : vector<16x16xf32>
    %46 = tpu.matmul %43, %44, %cst_22 {dimension_numbers = #tpu.dot_dimension_numbers<[1], [1], [0], [0], [0, 0, 1, 0], [], []>} : vector<16x32xbf16>, vector<16x32xbf16>, vector<16x16xf32> -> vector<16x16xf32>
    %47 = arith.addf %46, %20 : vector<16x16xf32>
    %cst_23 = arith.constant dense<0xFF800000> : vector<16xf32>
    %48 = vector.multi_reduction <maximumf>, %47, %cst_23 [1] : vector<16x16xf32> to vector<16xf32>
    %49 = vector.shape_cast %48 : vector<16xf32> to vector<16x1xf32>
    %50 = vector.broadcast %49 : vector<16x1xf32> to vector<16x16xf32>
    %51 = arith.subf %47, %50 : vector<16x16xf32>
    %52 = math.exp %51 : vector<16x16xf32>
    %cst_24 = arith.constant dense<0.000000e+00> : vector<16xf32>
    %53 = vector.multi_reduction <add>, %52, %cst_24 [1] : vector<16x16xf32> to vector<16xf32>
    %54 = vector.shape_cast %53 : vector<16xf32> to vector<16x1xf32>
    %55 = arith.truncf %52 : vector<16x16xf32> to vector<16x16xbf16>
    %cst_25 = arith.constant dense<0.000000e+00> : vector<16x32xf32>
    %56 = tpu.matmul %55, %45, %cst_25 {dimension_numbers = #tpu.dot_dimension_numbers<[1], [0], [0], [1], [0, 0, 1, 1], [], []>} : vector<16x16xbf16>, vector<16x32xbf16>, vector<16x32xf32> -> vector<16x32xf32>
    %57 = tpu.reciprocal %54 {approx = true} : vector<16x1xf32> -> vector<16x1xf32>
    %58 = vector.broadcast %57 : vector<16x1xf32> to vector<16x32xf32>
    %59 = arith.mulf %56, %58 : vector<16x32xf32>
    %c32_26 = arith.constant 32 : index
    %c768_27 = arith.constant 768 : index
    %60 = vector.load %arg5[%c32_26, %c768_27] : memref<256x1024xbf16, #tpu.memory_space<vmem>>, vector<32x256xbf16>
    %61 = arith.truncf %59 : vector<16x32xf32> to vector<16x32xbf16>
    %cst_28 = arith.constant dense<0.000000e+00> : vector<16x256xf32>
    %62 = tpu.matmul %61, %60, %cst_28 {dimension_numbers = #tpu.dot_dimension_numbers<[1], [0], [0], [1], [0, 0, 1, 1], [], []>} : vector<16x32xbf16>, vector<32x256xbf16>, vector<16x256xf32> -> vector<16x256xf32>
    %63 = arith.addf %42, %62 : vector<16x256xf32>
    %64 = vector.extract_strided_slice %16 {offsets = [0, 64], sizes = [16, 32], strides = [1, 1]} : vector<16x256xbf16> to vector<16x32xbf16>
    %c0_29 = arith.constant 0 : index
    %c64 = arith.constant 64 : index
    %65 = vector.load %arg13[%c0_29, %c64] : memref<16x512xbf16, #tpu.memory_space<vmem>>, vector<16x32xbf16>
    %c0_30 = arith.constant 0 : index
    %c320 = arith.constant 320 : index
    %66 = vector.load %arg13[%c0_30, %c320] : memref<16x512xbf16, #tpu.memory_space<vmem>>, vector<16x32xbf16>
    %cst_31 = arith.constant dense<0.000000e+00> : vector<16x16xf32>
    %67 = tpu.matmul %64, %65, %cst_31 {dimension_numbers = #tpu.dot_dimension_numbers<[1], [1], [0], [0], [0, 0, 1, 0], [], []>} : vector<16x32xbf16>, vector<16x32xbf16>, vector<16x16xf32> -> vector<16x16xf32>
    %68 = arith.addf %67, %20 : vector<16x16xf32>
    %cst_32 = arith.constant dense<0xFF800000> : vector<16xf32>
    %69 = vector.multi_reduction <maximumf>, %68, %cst_32 [1] : vector<16x16xf32> to vector<16xf32>
    %70 = vector.shape_cast %69 : vector<16xf32> to vector<16x1xf32>
    %71 = vector.broadcast %70 : vector<16x1xf32> to vector<16x16xf32>
    %72 = arith.subf %68, %71 : vector<16x16xf32>
    %73 = math.exp %72 : vector<16x16xf32>
    %cst_33 = arith.constant dense<0.000000e+00> : vector<16xf32>
    %74 = vector.multi_reduction <add>, %73, %cst_33 [1] : vector<16x16xf32> to vector<16xf32>
    %75 = vector.shape_cast %74 : vector<16xf32> to vector<16x1xf32>
    %76 = arith.truncf %73 : vector<16x16xf32> to vector<16x16xbf16>
    %cst_34 = arith.constant dense<0.000000e+00> : vector<16x32xf32>
    %77 = tpu.matmul %76, %66, %cst_34 {dimension_numbers = #tpu.dot_dimension_numbers<[1], [0], [0], [1], [0, 0, 1, 1], [], []>} : vector<16x16xbf16>, vector<16x32xbf16>, vector<16x32xf32> -> vector<16x32xf32>
    %78 = tpu.reciprocal %75 {approx = true} : vector<16x1xf32> -> vector<16x1xf32>
    %79 = vector.broadcast %78 : vector<16x1xf32> to vector<16x32xf32>
    %80 = arith.mulf %77, %79 : vector<16x32xf32>
    %c64_35 = arith.constant 64 : index
    %c768_36 = arith.constant 768 : index
    %81 = vector.load %arg5[%c64_35, %c768_36] : memref<256x1024xbf16, #tpu.memory_space<vmem>>, vector<32x256xbf16>
    %82 = arith.truncf %80 : vector<16x32xf32> to vector<16x32xbf16>
    %cst_37 = arith.constant dense<0.000000e+00> : vector<16x256xf32>
    %83 = tpu.matmul %82, %81, %cst_37 {dimension_numbers = #tpu.dot_dimension_numbers<[1], [0], [0], [1], [0, 0, 1, 1], [], []>} : vector<16x32xbf16>, vector<32x256xbf16>, vector<16x256xf32> -> vector<16x256xf32>
    %84 = arith.addf %63, %83 : vector<16x256xf32>
    %85 = vector.extract_strided_slice %16 {offsets = [0, 96], sizes = [16, 32], strides = [1, 1]} : vector<16x256xbf16> to vector<16x32xbf16>
    %c0_38 = arith.constant 0 : index
    %c96 = arith.constant 96 : index
    %86 = vector.load %arg13[%c0_38, %c96] : memref<16x512xbf16, #tpu.memory_space<vmem>>, vector<16x32xbf16>
    %c0_39 = arith.constant 0 : index
    %c352 = arith.constant 352 : index
    %87 = vector.load %arg13[%c0_39, %c352] : memref<16x512xbf16, #tpu.memory_space<vmem>>, vector<16x32xbf16>
    %cst_40 = arith.constant dense<0.000000e+00> : vector<16x16xf32>
    %88 = tpu.matmul %85, %86, %cst_40 {dimension_numbers = #tpu.dot_dimension_numbers<[1], [1], [0], [0], [0, 0, 1, 0], [], []>} : vector<16x32xbf16>, vector<16x32xbf16>, vector<16x16xf32> -> vector<16x16xf32>
    %89 = arith.addf %88, %20 : vector<16x16xf32>
    %cst_41 = arith.constant dense<0xFF800000> : vector<16xf32>
    %90 = vector.multi_reduction <maximumf>, %89, %cst_41 [1] : vector<16x16xf32> to vector<16xf32>
    %91 = vector.shape_cast %90 : vector<16xf32> to vector<16x1xf32>
    %92 = vector.broadcast %91 : vector<16x1xf32> to vector<16x16xf32>
    %93 = arith.subf %89, %92 : vector<16x16xf32>
    %94 = math.exp %93 : vector<16x16xf32>
    %cst_42 = arith.constant dense<0.000000e+00> : vector<16xf32>
    %95 = vector.multi_reduction <add>, %94, %cst_42 [1] : vector<16x16xf32> to vector<16xf32>
    %96 = vector.shape_cast %95 : vector<16xf32> to vector<16x1xf32>
    %97 = arith.truncf %94 : vector<16x16xf32> to vector<16x16xbf16>
    %cst_43 = arith.constant dense<0.000000e+00> : vector<16x32xf32>
    %98 = tpu.matmul %97, %87, %cst_43 {dimension_numbers = #tpu.dot_dimension_numbers<[1], [0], [0], [1], [0, 0, 1, 1], [], []>} : vector<16x16xbf16>, vector<16x32xbf16>, vector<16x32xf32> -> vector<16x32xf32>
    %99 = tpu.reciprocal %96 {approx = true} : vector<16x1xf32> -> vector<16x1xf32>
    %100 = vector.broadcast %99 : vector<16x1xf32> to vector<16x32xf32>
    %101 = arith.mulf %98, %100 : vector<16x32xf32>
    %c96_44 = arith.constant 96 : index
    %c768_45 = arith.constant 768 : index
    %102 = vector.load %arg5[%c96_44, %c768_45] : memref<256x1024xbf16, #tpu.memory_space<vmem>>, vector<32x256xbf16>
    %103 = arith.truncf %101 : vector<16x32xf32> to vector<16x32xbf16>
    %cst_46 = arith.constant dense<0.000000e+00> : vector<16x256xf32>
    %104 = tpu.matmul %103, %102, %cst_46 {dimension_numbers = #tpu.dot_dimension_numbers<[1], [0], [0], [1], [0, 0, 1, 1], [], []>} : vector<16x32xbf16>, vector<32x256xbf16>, vector<16x256xf32> -> vector<16x256xf32>
    %105 = arith.addf %84, %104 : vector<16x256xf32>
    %106 = vector.extract_strided_slice %16 {offsets = [0, 128], sizes = [16, 32], strides = [1, 1]} : vector<16x256xbf16> to vector<16x32xbf16>
    %c0_47 = arith.constant 0 : index
    %c128 = arith.constant 128 : index
    %107 = vector.load %arg13[%c0_47, %c128] : memref<16x512xbf16, #tpu.memory_space<vmem>>, vector<16x32xbf16>
    %c0_48 = arith.constant 0 : index
    %c384 = arith.constant 384 : index
    %108 = vector.load %arg13[%c0_48, %c384] : memref<16x512xbf16, #tpu.memory_space<vmem>>, vector<16x32xbf16>
    %cst_49 = arith.constant dense<0.000000e+00> : vector<16x16xf32>
    %109 = tpu.matmul %106, %107, %cst_49 {dimension_numbers = #tpu.dot_dimension_numbers<[1], [1], [0], [0], [0, 0, 1, 0], [], []>} : vector<16x32xbf16>, vector<16x32xbf16>, vector<16x16xf32> -> vector<16x16xf32>
    %110 = arith.addf %109, %20 : vector<16x16xf32>
    %cst_50 = arith.constant dense<0xFF800000> : vector<16xf32>
    %111 = vector.multi_reduction <maximumf>, %110, %cst_50 [1] : vector<16x16xf32> to vector<16xf32>
    %112 = vector.shape_cast %111 : vector<16xf32> to vector<16x1xf32>
    %113 = vector.broadcast %112 : vector<16x1xf32> to vector<16x16xf32>
    %114 = arith.subf %110, %113 : vector<16x16xf32>
    %115 = math.exp %114 : vector<16x16xf32>
    %cst_51 = arith.constant dense<0.000000e+00> : vector<16xf32>
    %116 = vector.multi_reduction <add>, %115, %cst_51 [1] : vector<16x16xf32> to vector<16xf32>
    %117 = vector.shape_cast %116 : vector<16xf32> to vector<16x1xf32>
    %118 = arith.truncf %115 : vector<16x16xf32> to vector<16x16xbf16>
    %cst_52 = arith.constant dense<0.000000e+00> : vector<16x32xf32>
    %119 = tpu.matmul %118, %108, %cst_52 {dimension_numbers = #tpu.dot_dimension_numbers<[1], [0], [0], [1], [0, 0, 1, 1], [], []>} : vector<16x16xbf16>, vector<16x32xbf16>, vector<16x32xf32> -> vector<16x32xf32>
    %120 = tpu.reciprocal %117 {approx = true} : vector<16x1xf32> -> vector<16x1xf32>
    %121 = vector.broadcast %120 : vector<16x1xf32> to vector<16x32xf32>
    %122 = arith.mulf %119, %121 : vector<16x32xf32>
    %c128_53 = arith.constant 128 : index
    %c768_54 = arith.constant 768 : index
    %123 = vector.load %arg5[%c128_53, %c768_54] : memref<256x1024xbf16, #tpu.memory_space<vmem>>, vector<32x256xbf16>
    %124 = arith.truncf %122 : vector<16x32xf32> to vector<16x32xbf16>
    %cst_55 = arith.constant dense<0.000000e+00> : vector<16x256xf32>
    %125 = tpu.matmul %124, %123, %cst_55 {dimension_numbers = #tpu.dot_dimension_numbers<[1], [0], [0], [1], [0, 0, 1, 1], [], []>} : vector<16x32xbf16>, vector<32x256xbf16>, vector<16x256xf32> -> vector<16x256xf32>
    %126 = arith.addf %105, %125 : vector<16x256xf32>
    %127 = vector.extract_strided_slice %16 {offsets = [0, 160], sizes = [16, 32], strides = [1, 1]} : vector<16x256xbf16> to vector<16x32xbf16>
    %c0_56 = arith.constant 0 : index
    %c160 = arith.constant 160 : index
    %128 = vector.load %arg13[%c0_56, %c160] : memref<16x512xbf16, #tpu.memory_space<vmem>>, vector<16x32xbf16>
    %c0_57 = arith.constant 0 : index
    %c416 = arith.constant 416 : index
    %129 = vector.load %arg13[%c0_57, %c416] : memref<16x512xbf16, #tpu.memory_space<vmem>>, vector<16x32xbf16>
    %cst_58 = arith.constant dense<0.000000e+00> : vector<16x16xf32>
    %130 = tpu.matmul %127, %128, %cst_58 {dimension_numbers = #tpu.dot_dimension_numbers<[1], [1], [0], [0], [0, 0, 1, 0], [], []>} : vector<16x32xbf16>, vector<16x32xbf16>, vector<16x16xf32> -> vector<16x16xf32>
    %131 = arith.addf %130, %20 : vector<16x16xf32>
    %cst_59 = arith.constant dense<0xFF800000> : vector<16xf32>
    %132 = vector.multi_reduction <maximumf>, %131, %cst_59 [1] : vector<16x16xf32> to vector<16xf32>
    %133 = vector.shape_cast %132 : vector<16xf32> to vector<16x1xf32>
    %134 = vector.broadcast %133 : vector<16x1xf32> to vector<16x16xf32>
    %135 = arith.subf %131, %134 : vector<16x16xf32>
    %136 = math.exp %135 : vector<16x16xf32>
    %cst_60 = arith.constant dense<0.000000e+00> : vector<16xf32>
    %137 = vector.multi_reduction <add>, %136, %cst_60 [1] : vector<16x16xf32> to vector<16xf32>
    %138 = vector.shape_cast %137 : vector<16xf32> to vector<16x1xf32>
    %139 = arith.truncf %136 : vector<16x16xf32> to vector<16x16xbf16>
    %cst_61 = arith.constant dense<0.000000e+00> : vector<16x32xf32>
    %140 = tpu.matmul %139, %129, %cst_61 {dimension_numbers = #tpu.dot_dimension_numbers<[1], [0], [0], [1], [0, 0, 1, 1], [], []>} : vector<16x16xbf16>, vector<16x32xbf16>, vector<16x32xf32> -> vector<16x32xf32>
    %141 = tpu.reciprocal %138 {approx = true} : vector<16x1xf32> -> vector<16x1xf32>
    %142 = vector.broadcast %141 : vector<16x1xf32> to vector<16x32xf32>
    %143 = arith.mulf %140, %142 : vector<16x32xf32>
    %c160_62 = arith.constant 160 : index
    %c768_63 = arith.constant 768 : index
    %144 = vector.load %arg5[%c160_62, %c768_63] : memref<256x1024xbf16, #tpu.memory_space<vmem>>, vector<32x256xbf16>
    %145 = arith.truncf %143 : vector<16x32xf32> to vector<16x32xbf16>
    %cst_64 = arith.constant dense<0.000000e+00> : vector<16x256xf32>
    %146 = tpu.matmul %145, %144, %cst_64 {dimension_numbers = #tpu.dot_dimension_numbers<[1], [0], [0], [1], [0, 0, 1, 1], [], []>} : vector<16x32xbf16>, vector<32x256xbf16>, vector<16x256xf32> -> vector<16x256xf32>
    %147 = arith.addf %126, %146 : vector<16x256xf32>
    %148 = vector.extract_strided_slice %16 {offsets = [0, 192], sizes = [16, 32], strides = [1, 1]} : vector<16x256xbf16> to vector<16x32xbf16>
    %c0_65 = arith.constant 0 : index
    %c192 = arith.constant 192 : index
    %149 = vector.load %arg13[%c0_65, %c192] : memref<16x512xbf16, #tpu.memory_space<vmem>>, vector<16x32xbf16>
    %c0_66 = arith.constant 0 : index
    %c448 = arith.constant 448 : index
    %150 = vector.load %arg13[%c0_66, %c448] : memref<16x512xbf16, #tpu.memory_space<vmem>>, vector<16x32xbf16>
    %cst_67 = arith.constant dense<0.000000e+00> : vector<16x16xf32>
    %151 = tpu.matmul %148, %149, %cst_67 {dimension_numbers = #tpu.dot_dimension_numbers<[1], [1], [0], [0], [0, 0, 1, 0], [], []>} : vector<16x32xbf16>, vector<16x32xbf16>, vector<16x16xf32> -> vector<16x16xf32>
    %152 = arith.addf %151, %20 : vector<16x16xf32>
    %cst_68 = arith.constant dense<0xFF800000> : vector<16xf32>
    %153 = vector.multi_reduction <maximumf>, %152, %cst_68 [1] : vector<16x16xf32> to vector<16xf32>
    %154 = vector.shape_cast %153 : vector<16xf32> to vector<16x1xf32>
    %155 = vector.broadcast %154 : vector<16x1xf32> to vector<16x16xf32>
    %156 = arith.subf %152, %155 : vector<16x16xf32>
    %157 = math.exp %156 : vector<16x16xf32>
    %cst_69 = arith.constant dense<0.000000e+00> : vector<16xf32>
    %158 = vector.multi_reduction <add>, %157, %cst_69 [1] : vector<16x16xf32> to vector<16xf32>
    %159 = vector.shape_cast %158 : vector<16xf32> to vector<16x1xf32>
    %160 = arith.truncf %157 : vector<16x16xf32> to vector<16x16xbf16>
    %cst_70 = arith.constant dense<0.000000e+00> : vector<16x32xf32>
    %161 = tpu.matmul %160, %150, %cst_70 {dimension_numbers = #tpu.dot_dimension_numbers<[1], [0], [0], [1], [0, 0, 1, 1], [], []>} : vector<16x16xbf16>, vector<16x32xbf16>, vector<16x32xf32> -> vector<16x32xf32>
    %162 = tpu.reciprocal %159 {approx = true} : vector<16x1xf32> -> vector<16x1xf32>
    %163 = vector.broadcast %162 : vector<16x1xf32> to vector<16x32xf32>
    %164 = arith.mulf %161, %163 : vector<16x32xf32>
    %c192_71 = arith.constant 192 : index
    %c768_72 = arith.constant 768 : index
    %165 = vector.load %arg5[%c192_71, %c768_72] : memref<256x1024xbf16, #tpu.memory_space<vmem>>, vector<32x256xbf16>
    %166 = arith.truncf %164 : vector<16x32xf32> to vector<16x32xbf16>
    %cst_73 = arith.constant dense<0.000000e+00> : vector<16x256xf32>
    %167 = tpu.matmul %166, %165, %cst_73 {dimension_numbers = #tpu.dot_dimension_numbers<[1], [0], [0], [1], [0, 0, 1, 1], [], []>} : vector<16x32xbf16>, vector<32x256xbf16>, vector<16x256xf32> -> vector<16x256xf32>
    %168 = arith.addf %147, %167 : vector<16x256xf32>
    %169 = vector.extract_strided_slice %16 {offsets = [0, 224], sizes = [16, 32], strides = [1, 1]} : vector<16x256xbf16> to vector<16x32xbf16>
    %c0_74 = arith.constant 0 : index
    %c224 = arith.constant 224 : index
    %170 = vector.load %arg13[%c0_74, %c224] : memref<16x512xbf16, #tpu.memory_space<vmem>>, vector<16x32xbf16>
    %c0_75 = arith.constant 0 : index
    %c480 = arith.constant 480 : index
    %171 = vector.load %arg13[%c0_75, %c480] : memref<16x512xbf16, #tpu.memory_space<vmem>>, vector<16x32xbf16>
    %cst_76 = arith.constant dense<0.000000e+00> : vector<16x16xf32>
    %172 = tpu.matmul %169, %170, %cst_76 {dimension_numbers = #tpu.dot_dimension_numbers<[1], [1], [0], [0], [0, 0, 1, 0], [], []>} : vector<16x32xbf16>, vector<16x32xbf16>, vector<16x16xf32> -> vector<16x16xf32>
    %173 = arith.addf %172, %20 : vector<16x16xf32>
    %cst_77 = arith.constant dense<0xFF800000> : vector<16xf32>
    %174 = vector.multi_reduction <maximumf>, %173, %cst_77 [1] : vector<16x16xf32> to vector<16xf32>
    %175 = vector.shape_cast %174 : vector<16xf32> to vector<16x1xf32>
    %176 = vector.broadcast %175 : vector<16x1xf32> to vector<16x16xf32>
    %177 = arith.subf %173, %176 : vector<16x16xf32>
    %178 = math.exp %177 : vector<16x16xf32>
    %cst_78 = arith.constant dense<0.000000e+00> : vector<16xf32>
    %179 = vector.multi_reduction <add>, %178, %cst_78 [1] : vector<16x16xf32> to vector<16xf32>
    %180 = vector.shape_cast %179 : vector<16xf32> to vector<16x1xf32>
    %181 = arith.truncf %178 : vector<16x16xf32> to vector<16x16xbf16>
    %cst_79 = arith.constant dense<0.000000e+00> : vector<16x32xf32>
    %182 = tpu.matmul %181, %171, %cst_79 {dimension_numbers = #tpu.dot_dimension_numbers<[1], [0], [0], [1], [0, 0, 1, 1], [], []>} : vector<16x16xbf16>, vector<16x32xbf16>, vector<16x32xf32> -> vector<16x32xf32>
    %183 = tpu.reciprocal %180 {approx = true} : vector<16x1xf32> -> vector<16x1xf32>
    %184 = vector.broadcast %183 : vector<16x1xf32> to vector<16x32xf32>
    %185 = arith.mulf %182, %184 : vector<16x32xf32>
    %c224_80 = arith.constant 224 : index
    %c768_81 = arith.constant 768 : index
    %186 = vector.load %arg5[%c224_80, %c768_81] : memref<256x1024xbf16, #tpu.memory_space<vmem>>, vector<32x256xbf16>
    %187 = arith.truncf %185 : vector<16x32xf32> to vector<16x32xbf16>
    %cst_82 = arith.constant dense<0.000000e+00> : vector<16x256xf32>
    %188 = tpu.matmul %187, %186, %cst_82 {dimension_numbers = #tpu.dot_dimension_numbers<[1], [0], [0], [1], [0, 0, 1, 1], [], []>} : vector<16x32xbf16>, vector<32x256xbf16>, vector<16x256xf32> -> vector<16x256xf32>
    %189 = arith.addf %168, %188 : vector<16x256xf32>
    %c0_83 = arith.constant 0 : index
    %c768_84 = arith.constant 768 : index
    %190 = vector.load %arg6[%c0_83, %c768_84] : memref<1x1024xf32, #tpu.memory_space<vmem>>, vector<1x256xf32>
    %191 = vector.broadcast %190 : vector<1x256xf32> to vector<16x256xf32>
    %192 = arith.addf %189, %191 : vector<16x256xf32>
    %193 = arith.addf %7, %192 : vector<16x256xf32>
    %c0_85 = arith.constant 0 : index
    %c0_86 = arith.constant 0 : index
    %194 = vector.load %arg11[%c0_85, %c0_86] : memref<6x256xf32, #tpu.memory_space<vmem>>, vector<1x256xf32>
    %c3 = arith.constant 3 : index
    %c0_87 = arith.constant 0 : index
    %195 = vector.load %arg11[%c3, %c0_87] : memref<6x256xf32, #tpu.memory_space<vmem>>, vector<1x256xf32>
    %cst_88 = arith.constant dense<0.000000e+00> : vector<16xf32>
    %196 = vector.multi_reduction <add>, %193, %cst_88 [1] : vector<16x256xf32> to vector<16xf32>
    %197 = vector.shape_cast %196 : vector<16xf32> to vector<16x1xf32>
    %cst_89 = arith.constant 2.560000e+02 : f32
    %198 = vector.broadcast %cst_89 : f32 to vector<16x1xf32>
    %199 = arith.divf %197, %198 : vector<16x1xf32>
    %200 = vector.broadcast %199 : vector<16x1xf32> to vector<16x256xf32>
    %201 = arith.subf %193, %200 : vector<16x256xf32>
    %202 = arith.mulf %201, %201 : vector<16x256xf32>
    %cst_90 = arith.constant dense<0.000000e+00> : vector<16xf32>
    %203 = vector.multi_reduction <add>, %202, %cst_90 [1] : vector<16x256xf32> to vector<16xf32>
    %204 = vector.shape_cast %203 : vector<16xf32> to vector<16x1xf32>
    %cst_91 = arith.constant 2.560000e+02 : f32
    %205 = vector.broadcast %cst_91 : f32 to vector<16x1xf32>
    %206 = arith.divf %204, %205 : vector<16x1xf32>
    %cst_92 = arith.constant 9.99999974E-6 : f32
    %207 = vector.broadcast %cst_92 : f32 to vector<16x1xf32>
    %208 = arith.addf %206, %207 : vector<16x1xf32>
    %209 = math.rsqrt %208 : vector<16x1xf32>
    %210 = vector.broadcast %209 : vector<16x1xf32> to vector<16x256xf32>
    %211 = arith.mulf %201, %210 : vector<16x256xf32>
    %212 = vector.broadcast %194 : vector<1x256xf32> to vector<16x256xf32>
    %213 = arith.mulf %211, %212 : vector<16x256xf32>
    %214 = vector.broadcast %195 : vector<1x256xf32> to vector<16x256xf32>
    %215 = arith.addf %213, %214 : vector<16x256xf32>
    %c0_93 = arith.constant 0 : index
    %c0_94 = arith.constant 0 : index
    %c0_95 = arith.constant 0 : index
    %216 = vector.load %arg4[%c0_93, %c0_94, %c0_95] : memref<1x1x256xf32, #tpu.memory_space<vmem>>, vector<1x1x256xf32>
    %217 = vector.shape_cast %216 : vector<1x1x256xf32> to vector<1x256xf32>
    %218 = vector.broadcast %217 : vector<1x256xf32> to vector<16x256xf32>
    %219 = arith.addf %215, %218 : vector<16x256xf32>
    %c1 = arith.constant 1 : index
    %c0_96 = arith.constant 0 : index
    %220 = vector.load %arg11[%c1, %c0_96] : memref<6x256xf32, #tpu.memory_space<vmem>>, vector<1x256xf32>
    %c4 = arith.constant 4 : index
    %c0_97 = arith.constant 0 : index
    %221 = vector.load %arg11[%c4, %c0_97] : memref<6x256xf32, #tpu.memory_space<vmem>>, vector<1x256xf32>
    %cst_98 = arith.constant dense<0.000000e+00> : vector<16xf32>
    %222 = vector.multi_reduction <add>, %219, %cst_98 [1] : vector<16x256xf32> to vector<16xf32>
    %223 = vector.shape_cast %222 : vector<16xf32> to vector<16x1xf32>
    %cst_99 = arith.constant 2.560000e+02 : f32
    %224 = vector.broadcast %cst_99 : f32 to vector<16x1xf32>
    %225 = arith.divf %223, %224 : vector<16x1xf32>
    %226 = vector.broadcast %225 : vector<16x1xf32> to vector<16x256xf32>
    %227 = arith.subf %219, %226 : vector<16x256xf32>
    %228 = arith.mulf %227, %227 : vector<16x256xf32>
    %cst_100 = arith.constant dense<0.000000e+00> : vector<16xf32>
    %229 = vector.multi_reduction <add>, %228, %cst_100 [1] : vector<16x256xf32> to vector<16xf32>
    %230 = vector.shape_cast %229 : vector<16xf32> to vector<16x1xf32>
    %cst_101 = arith.constant 2.560000e+02 : f32
    %231 = vector.broadcast %cst_101 : f32 to vector<16x1xf32>
    %232 = arith.divf %230, %231 : vector<16x1xf32>
    %cst_102 = arith.constant 9.99999974E-6 : f32
    %233 = vector.broadcast %cst_102 : f32 to vector<16x1xf32>
    %234 = arith.addf %232, %233 : vector<16x1xf32>
    %235 = math.rsqrt %234 : vector<16x1xf32>
    %236 = vector.broadcast %235 : vector<16x1xf32> to vector<16x256xf32>
    %237 = arith.mulf %227, %236 : vector<16x256xf32>
    %238 = vector.broadcast %220 : vector<1x256xf32> to vector<16x256xf32>
    %239 = arith.mulf %237, %238 : vector<16x256xf32>
    %240 = vector.broadcast %221 : vector<1x256xf32> to vector<16x256xf32>
    %241 = arith.addf %239, %240 : vector<16x256xf32>
    %242 = arith.truncf %241 : vector<16x256xf32> to vector<16x256xbf16>
    %c0_103 = arith.constant 0 : index
    %c0_104 = arith.constant 0 : index
    %243 = vector.load %arg7[%c0_103, %c0_104] : memref<256x256xbf16, #tpu.memory_space<vmem>>, vector<256x256xbf16>
    %cst_105 = arith.constant dense<0.000000e+00> : vector<16x256xf32>
    %244 = tpu.matmul %242, %243, %cst_105 {dimension_numbers = #tpu.dot_dimension_numbers<[1], [0], [0], [1], [0, 0, 1, 1], [], []>} : vector<16x256xbf16>, vector<256x256xbf16>, vector<16x256xf32> -> vector<16x256xf32>
    %c0_106 = arith.constant 0 : index
    %c0_107 = arith.constant 0 : index
    %245 = vector.load %arg8[%c0_106, %c0_107] : memref<1x256xf32, #tpu.memory_space<vmem>>, vector<1x256xf32>
    %246 = vector.broadcast %245 : vector<1x256xf32> to vector<16x256xf32>
    %247 = arith.addf %244, %246 : vector<16x256xf32>
    %cst_108 = arith.constant 0.000000e+00 : f32
    %248 = vector.broadcast %cst_108 : f32 to vector<16x256xf32>
    %249 = arith.maximumf %247, %248 : vector<16x256xf32>
    %250 = arith.truncf %249 : vector<16x256xf32> to vector<16x256xbf16>
    %c0_109 = arith.constant 0 : index
    %c0_110 = arith.constant 0 : index
    %251 = vector.load %arg9[%c0_109, %c0_110] : memref<256x256xbf16, #tpu.memory_space<vmem>>, vector<256x256xbf16>
    %cst_111 = arith.constant dense<0.000000e+00> : vector<16x256xf32>
    %252 = tpu.matmul %250, %251, %cst_111 {dimension_numbers = #tpu.dot_dimension_numbers<[1], [0], [0], [1], [0, 0, 1, 1], [], []>} : vector<16x256xbf16>, vector<256x256xbf16>, vector<16x256xf32> -> vector<16x256xf32>
    %c0_112 = arith.constant 0 : index
    %c0_113 = arith.constant 0 : index
    %253 = vector.load %arg10[%c0_112, %c0_113] : memref<1x256xf32, #tpu.memory_space<vmem>>, vector<1x256xf32>
    %254 = vector.broadcast %253 : vector<1x256xf32> to vector<16x256xf32>
    %255 = arith.addf %252, %254 : vector<16x256xf32>
    %256 = arith.addf %241, %255 : vector<16x256xf32>
    %c2 = arith.constant 2 : index
    %c0_114 = arith.constant 0 : index
    %257 = vector.load %arg11[%c2, %c0_114] : memref<6x256xf32, #tpu.memory_space<vmem>>, vector<1x256xf32>
    %c5 = arith.constant 5 : index
    %c0_115 = arith.constant 0 : index
    %258 = vector.load %arg11[%c5, %c0_115] : memref<6x256xf32, #tpu.memory_space<vmem>>, vector<1x256xf32>
    %cst_116 = arith.constant dense<0.000000e+00> : vector<16xf32>
    %259 = vector.multi_reduction <add>, %256, %cst_116 [1] : vector<16x256xf32> to vector<16xf32>
    %260 = vector.shape_cast %259 : vector<16xf32> to vector<16x1xf32>
    %cst_117 = arith.constant 2.560000e+02 : f32
    %261 = vector.broadcast %cst_117 : f32 to vector<16x1xf32>
    %262 = arith.divf %260, %261 : vector<16x1xf32>
    %263 = vector.broadcast %262 : vector<16x1xf32> to vector<16x256xf32>
    %264 = arith.subf %256, %263 : vector<16x256xf32>
    %265 = arith.mulf %264, %264 : vector<16x256xf32>
    %cst_118 = arith.constant dense<0.000000e+00> : vector<16xf32>
    %266 = vector.multi_reduction <add>, %265, %cst_118 [1] : vector<16x256xf32> to vector<16xf32>
    %267 = vector.shape_cast %266 : vector<16xf32> to vector<16x1xf32>
    %cst_119 = arith.constant 2.560000e+02 : f32
    %268 = vector.broadcast %cst_119 : f32 to vector<16x1xf32>
    %269 = arith.divf %267, %268 : vector<16x1xf32>
    %cst_120 = arith.constant 9.99999974E-6 : f32
    %270 = vector.broadcast %cst_120 : f32 to vector<16x1xf32>
    %271 = arith.addf %269, %270 : vector<16x1xf32>
    %272 = math.rsqrt %271 : vector<16x1xf32>
    %273 = vector.broadcast %272 : vector<16x1xf32> to vector<16x256xf32>
    %274 = arith.mulf %264, %273 : vector<16x256xf32>
    %275 = vector.broadcast %257 : vector<1x256xf32> to vector<16x256xf32>
    %276 = arith.mulf %274, %275 : vector<16x256xf32>
    %277 = vector.broadcast %258 : vector<1x256xf32> to vector<16x256xf32>
    %278 = arith.addf %276, %277 : vector<16x256xf32>
    %c0_121 = arith.constant 0 : index
    %c0_122 = arith.constant 0 : index
    %c0_123 = arith.constant 0 : index
    %279 = vector.load %arg12[%c0_121, %c0_122, %c0_123] : memref<1x16x256xf32, #tpu.memory_space<vmem>>, vector<1x16x256xf32>
    %280 = vector.shape_cast %279 : vector<1x16x256xf32> to vector<16x256xf32>
    %281 = vector.shape_cast %278 : vector<16x256xf32> to vector<1x16x256xf32>
    tpu.vector_store %arg12[%c0_121, %c0_122, %c0_123], %281 {strides = array<i32>} : memref<1x16x256xf32, #tpu.memory_space<vmem>>, vector<1x16x256xf32>,
    return
  }
  func.func @transform_0(%arg0: i32, %arg1: i32) -> (i32, i32, i32) {
    %c0_i32 = arith.constant 0 : i32
    %c0_i32_0 = arith.constant 0 : i32
    %c0_i32_1 = arith.constant 0 : i32
    return %arg0, %c0_i32, %c0_i32_0 : i32, i32, i32
  }
  func.func @transform_1(%arg0: i32, %arg1: i32) -> (i32, i32, i32) {
    %c0_i32 = arith.constant 0 : i32
    %c0_i32_0 = arith.constant 0 : i32
    %c0_i32_1 = arith.constant 0 : i32
    return %arg0, %c0_i32, %c0_i32_0 : i32, i32, i32
  }
  func.func @transform_2(%arg0: i32, %arg1: i32) -> (i32, i32, i32) {
    %c0_i32 = arith.constant 0 : i32
    %c0_i32_0 = arith.constant 0 : i32
    %c0_i32_1 = arith.constant 0 : i32
    return %arg0, %c0_i32, %c0_i32_0 : i32, i32, i32
  }
  func.func @transform_3(%arg0: i32, %arg1: i32) -> (i32, i32) {
    %c0_i32 = arith.constant 0 : i32
    %c0_i32_0 = arith.constant 0 : i32
    %c0_i32_1 = arith.constant 0 : i32
    return %c0_i32, %c0_i32_0 : i32, i32
  }
  func.func @transform_4(%arg0: i32, %arg1: i32) -> (i32, i32) {
    %c0_i32 = arith.constant 0 : i32
    %c0_i32_0 = arith.constant 0 : i32
    %c0_i32_1 = arith.constant 0 : i32
    return %c0_i32, %c0_i32_0 : i32, i32
  }
  func.func @transform_5(%arg0: i32, %arg1: i32) -> (i32, i32) {
    %c0_i32 = arith.constant 0 : i32
    %c0_i32_0 = arith.constant 0 : i32
    %c0_i32_1 = arith.constant 0 : i32
    return %c0_i32, %c0_i32_0 : i32, i32
  }
  func.func @transform_6(%arg0: i32, %arg1: i32) -> (i32, i32) {
    %c0_i32 = arith.constant 0 : i32
    %c0_i32_0 = arith.constant 0 : i32
    %c0_i32_1 = arith.constant 0 : i32
    return %c0_i32, %c0_i32_0 : i32, i32
  }
  func.func @transform_7(%arg0: i32, %arg1: i32) -> (i32, i32) {
    %c0_i32 = arith.constant 0 : i32
    %c0_i32_0 = arith.constant 0 : i32
    %c0_i32_1 = arith.constant 0 : i32
    return %c0_i32, %c0_i32_0 : i32, i32
  }
  func.func @transform_8(%arg0: i32, %arg1: i32) -> (i32, i32) {
    %c0_i32 = arith.constant 0 : i32
    %c0_i32_0 = arith.constant 0 : i32
    %c0_i32_1 = arith.constant 0 : i32
    return %c0_i32, %c0_i32_0 : i32, i32
  }
  func.func @transform_9(%arg0: i32, %arg1: i32) -> (i32, i32) {
    %c0_i32 = arith.constant 0 : i32
    %c0_i32_0 = arith.constant 0 : i32
    %c0_i32_1 = arith.constant 0 : i32
    return %c0_i32, %c0_i32_0 : i32, i32
  }
  func.func @transform_10(%arg0: i32, %arg1: i32) -> (i32, i32, i32) {
    %c0_i32 = arith.constant 0 : i32
    %c0_i32_0 = arith.constant 0 : i32
    return %arg0, %arg1, %c0_i32 : i32, i32, i32
  }
}

</mosaic_0001>

<llo_original>
// kernel: tpu_custom_call.1
$region0: #{tpu_custom_call.1}
  #allocation0 [shape = 'u32[]', space=smem, size = 0x4, offset = 0x4, fixed_abs, tag = 'smem constant byte address 0x4 - core index']
  #allocation1 [shape = 'u32[144,128]{1,0:T(1,128)}', space=vmem, size = 0x12000, scoped, tag = 'internal scratch']
  #allocation2 [shape = 'bf16[16,512]{1,0:T(8,128)(2,1)}', space=vmem, size = 0x4000, scoped, tag = 'scratch operand']
  %s0 = inlined_call_operand.hbm [shape: f32[2,16,256], index: 0, kind: input, shape index: {}]
  %s1 = inlined_call_operand.hbm [shape: f32[2,1,16], index: 1, kind: input, shape index: {}]
  %s2 = inlined_call_operand.hbm [shape: f32[2,1,256], index: 2, kind: input, shape index: {}]
  %s3 = inlined_call_operand.hbm [shape: bf16[256,1024], index: 3, kind: input, shape index: {}]
  %s4 = inlined_call_operand.hbm [shape: f32[1,1024], index: 4, kind: input, shape index: {}]
  %s5 = inlined_call_operand.hbm [shape: bf16[256,256], index: 5, kind: input, shape index: {}]
  %s6 = inlined_call_operand.hbm [shape: f32[1,256], index: 6, kind: input, shape index: {}]
  %s7 = inlined_call_operand.hbm [shape: bf16[256,256], index: 7, kind: input, shape index: {}]
  %s8 = inlined_call_operand.hbm [shape: f32[1,256], index: 8, kind: input, shape index: {}]
  %s9 = inlined_call_operand.vmem [shape: f32[6,256], index: 9, kind: input, shape index: {}]
  %s10 = inlined_call_operand.hbm [shape: f32[2,16,256], index: 10, kind: output, shape index: {}]
  %s11 = sld [smem:[#allocation0]]
  $region113: #{tpu_custom_call.1} parent=0
    _
  %s13 = ssub.s32 1, %s11
  %s14 = scalar_select 0, %s13, %s11
  $region1: #{tpu_custom_call.1} parent=0
    #allocation3 [shape = 'u8[32768]{0}', space=vmem, size = 0x8000, scoped, tag = 'input window, operand 0']
    #allocation4 [shape = 's32[2]{0}', space=sflag, size = 0x8, scoped, tag = 'scoped memory for tpu_custom_call.1']
    #allocation5 [shape = 's32[2]{0}', space=sflag, size = 0x8, scoped, tag = 'scoped memory for tpu_custom_call.1']
    #allocation6 [shape = 'u8[1024]{0}', space=vmem, size = 0x400, scoped, tag = 'input window, operand 1']
    #allocation7 [shape = 's32[2]{0}', space=sflag, size = 0x8, scoped, tag = 'scoped memory for tpu_custom_call.1']
    #allocation8 [shape = 'u8[2048]{0}', space=vmem, size = 0x800, scoped, tag = 'input window, operand 2']
    #allocation9 [shape = 'u8[524288]{0}', space=vmem, size = 0x80000, scoped, tag = 'input window, operand 3, single buffered']
    #allocation10 [shape = 's32[1]{0}', space=sflag, size = 0x4, scoped, tag = 'scoped memory for tpu_custom_call.1']
    #allocation11 [shape = 'u8[4096]{0}', space=vmem, size = 0x1000, scoped, tag = 'input window, operand 4, single buffered']
    #allocation12 [shape = 'u8[131072]{0}', space=vmem, size = 0x20000, scoped, tag = 'input window, operand 5, single buffered']
    #allocation13 [shape = 's32[1]{0}', space=sflag, size = 0x4, scoped, tag = 'scoped memory for tpu_custom_call.1']
    #allocation14 [shape = 'u8[1024]{0}', space=vmem, size = 0x400, scoped, tag = 'input window, operand 6, single buffered']
    #allocation15 [shape = 'u8[131072]{0}', space=vmem, size = 0x20000, scoped, tag = 'input window, operand 7, single buffered']
    #allocation16 [shape = 's32[1]{0}', space=sflag, size = 0x4, scoped, tag = 'scoped memory for tpu_custom_call.1']
    #allocation17 [shape = 'u8[1024]{0}', space=vmem, size = 0x400, scoped, tag = 'input window, operand 8, single buffered']
    #allocation18 [shape = 'u8[32768]{0}', space=vmem, size = 0x8000, scoped, tag = 'output window, operand 0']
    %15 = vsyncpa [#allocation4], 0
    %s16 = scalar_lea.sflag [#allocation4], 1
    %17 = vsyncpa %s16, 0
    %18 = vsyncpa [#allocation7], 0
    %s19 = scalar_lea.sflag [#allocation7], 1
    %20 = vsyncpa %s19, 0
    %21 = vsyncpa [#allocation10], 0
    %22 = vsyncpa [#allocation13], 0
    %23 = vsyncpa [#allocation16], 0
    %24 = vsyncpa [#allocation5], 0
    %s25 = scalar_lea.sflag [#allocation5], 1
    %26 = vsyncpa %s25, 0
    loop: start=0, step=1, limit=4
    $region2: #{tpu_custom_call.1} parent=1 // loop_pre_header
      _
    $region3: #{tpu_custom_call.1} parent=1 // loop_header
      %s28 = sphi 0, %s32
      %p29 = scmp.ge.s32.totalorder %s28, 4
      %s35 = sphi 0, %s47
      %s36 = sphi 0, %s43
      %s37 = sphi 0, %s35
      %s38 = sphi 0, %s36
      %s39 = sphi 0, %s37
      %s40 = sphi 0, %s38
      %s50 = sphi 0, %s52
      %s53 = sphi 0, %s50
      %s54 = sphi 0, %s53
      %s70 = sphi 0, %s54
      %s76 = sphi 0, %s78
      %s79 = sphi 0, %s76
      %s80 = sphi 0, %s79
      %s96 = sphi 0, %s80
      %s102 = sphi 0, %s104
      %s105 = sphi 0, %s102
      %s106 = sphi 0, %s105
      %s122 = sphi 0, %s106
      %s126 = sphi 0, %s126
      %s128 = sphi 0, %s126
      %s129 = sphi 0, %s128
      %s143 = sphi 0, %s129
      %s147 = sphi 0, %s147
      %s149 = sphi 0, %s147
      %s150 = sphi 0, %s149
      %s164 = sphi 0, %s150
      %s168 = sphi 0, %s168
      %s170 = sphi 0, %s168
      %s171 = sphi 0, %s170
      %s185 = sphi 0, %s171
      %s189 = sphi 0, %s189
      %s191 = sphi 0, %s189
      %s192 = sphi 0, %s191
      %s206 = sphi 0, %s192
      %s210 = sphi 0, %s210
      %s212 = sphi 0, %s210
      %s213 = sphi 0, %s212
      %s227 = sphi 0, %s213
      %s231 = sphi 0, %s231
      %s233 = sphi 0, %s231
      %s234 = sphi 0, %s233
      %s248 = sphi 0, %s234
      %s252 = sphi 0, %s252
      %s254 = sphi 0, %s252
      %s255 = sphi 0, %s254
      %s269 = sphi 0, %s255
      %s277 = sphi 0, %s279
      %s280 = sphi 0, %s277
      %s281 = sphi 0, %s280
      %s297 = sphi 0, %s281
    $region4: #{tpu_custom_call.1} parent=1 // loop_header_branch
      %31 = sbr.rel (%p29) target = $region8
    $region5: #{tpu_custom_call.1} parent=1 // loop_body
      %s33 = ssub.s32 %s28, 1
      %s34 = ssub.s32 %s28, 2
      %s41 = sadd.s32 1, %s36
      %p42 = scmp.ge.s32.totalorder %s41, 1
      %s43 = scalar_select %p42, 0, %s41
      %s44 = sadd.s32 1, %s35
      %s45 = scalar_select %p42, %s44, %s35
      %p46 = scmp.ge.s32.totalorder %s45, 2
      %s47 = scalar_select %p46, 0, %s45
      %s48 = ssub.s32 %s35, %s47
      %p49 = scmp.eq.s32.totalorder %s48, 0
      %s51 = sadd.s32 %s50, 1
      %s52 = scalar_select %p49, %s50, %s51
      %p55 = pneg %p49
      %p56 = scmp.eq.s32.totalorder %s28, 1
      %p57 = por %p55, %p56
      %p58 = scmp.ne.s32.totalorder %s50, %s53
      %p59 = scmp.eq.s32.totalorder %s28, 0
      %p60 = por %p58, %p59
      %p61 = scmp.ne.s32.totalorder %s50, %s53
      %p62 = scmp.eq.s32.totalorder %s33, 1
      %p63 = por %p61, %p62
      %p64 = scmp.ne.s32.totalorder %s53, %s54
      %p65 = scmp.eq.s32.totalorder %s33, 0
      %p66 = por %p64, %p65
      %p67 = scmp.ne.s32.totalorder %s53, %s54
      %p68 = scmp.eq.s32.totalorder %s34, 1
      %p69 = por %p67, %p68
      %p71 = scmp.ne.s32.totalorder %s54, %s70
      %p72 = scmp.eq.s32.totalorder %s34, 0
      %p73 = por %p71, %p72
      %s74 = ssub.s32 %s35, %s47
      %p75 = scmp.eq.s32.totalorder %s74, 0
      %s77 = sadd.s32 %s76, 1
      %s78 = scalar_select %p75, %s76, %s77
      %p81 = pneg %p75
      %p82 = scmp.eq.s32.totalorder %s28, 1
      %p83 = por %p81, %p82
      %p84 = scmp.ne.s32.totalorder %s76, %s79
      %p85 = scmp.eq.s32.totalorder %s28, 0
      %p86 = por %p84, %p85
      %p87 = scmp.ne.s32.totalorder %s76, %s79
      %p88 = scmp.eq.s32.totalorder %s33, 1
      %p89 = por %p87, %p88
      %p90 = scmp.ne.s32.totalorder %s79, %s80
      %p91 = scmp.eq.s32.totalorder %s33, 0
      %p92 = por %p90, %p91
      %p93 = scmp.ne.s32.totalorder %s79, %s80
      %p94 = scmp.eq.s32.totalorder %s34, 1
      %p95 = por %p93, %p94
      %p97 = scmp.ne.s32.totalorder %s80, %s96
      %p98 = scmp.eq.s32.totalorder %s34, 0
      %p99 = por %p97, %p98
      %s100 = ssub.s32 %s35, %s47
      %p101 = scmp.eq.s32.totalorder %s100, 0
      %s103 = sadd.s32 %s102, 1
      %s104 = scalar_select %p101, %s102, %s103
      %p107 = pneg %p101
      %p108 = scmp.eq.s32.totalorder %s28, 1
      %p109 = por %p107, %p108
      %p110 = scmp.ne.s32.totalorder %s102, %s105
      %p111 = scmp.eq.s32.totalorder %s28, 0
      %p112 = por %p110, %p111
      %p113 = scmp.ne.s32.totalorder %s102, %s105
      %p114 = scmp.eq.s32.totalorder %s33, 1
      %p115 = por %p113, %p114
      %p116 = scmp.ne.s32.totalorder %s105, %s106
      %p117 = scmp.eq.s32.totalorder %s33, 0
      %p118 = por %p116, %p117
      %p119 = scmp.ne.s32.totalorder %s105, %s106
      %p120 = scmp.eq.s32.totalorder %s34, 1
      %p121 = por %p119, %p120
      %p123 = scmp.ne.s32.totalorder %s106, %s122
      %p124 = scmp.eq.s32.totalorder %s34, 0
      %p125 = por %p123, %p124
      %s127 = sadd.s32 %s126, 1
      %p130 = scmp.eq.s32.totalorder %s28, 1
      %p131 = scmp.ne.s32.totalorder %s126, %s128
      %p132 = scmp.eq.s32.totalorder %s28, 0
      %p133 = por %p131, %p132
      %p134 = scmp.ne.s32.totalorder %s126, %s128
      %p135 = scmp.eq.s32.totalorder %s33, 1
      %p136 = por %p134, %p135
      %p137 = scmp.ne.s32.totalorder %s128, %s129
      %p138 = scmp.eq.s32.totalorder %s33, 0
      %p139 = por %p137, %p138
      %p140 = scmp.ne.s32.totalorder %s128, %s129
      %p141 = scmp.eq.s32.totalorder %s34, 1
      %p142 = por %p140, %p141
      %p144 = scmp.ne.s32.totalorder %s129, %s143
      %p145 = scmp.eq.s32.totalorder %s34, 0
      %p146 = por %p144, %p145
      %s148 = sadd.s32 %s147, 1
      %p151 = scmp.eq.s32.totalorder %s28, 1
      %p152 = scmp.ne.s32.totalorder %s147, %s149
      %p153 = scmp.eq.s32.totalorder %s28, 0
      %p154 = por %p152, %p153
      %p155 = scmp.ne.s32.totalorder %s147, %s149
      %p156 = scmp.eq.s32.totalorder %s33, 1
      %p157 = por %p155, %p156
      %p158 = scmp.ne.s32.totalorder %s149, %s150
      %p159 = scmp.eq.s32.totalorder %s33, 0
      %p160 = por %p158, %p159
      %p161 = scmp.ne.s32.totalorder %s149, %s150
      %p162 = scmp.eq.s32.totalorder %s34, 1
      %p163 = por %p161, %p162
      %p165 = scmp.ne.s32.totalorder %s150, %s164
      %p166 = scmp.eq.s32.totalorder %s34, 0
      %p167 = por %p165, %p166
      %s169 = sadd.s32 %s168, 1
      %p172 = scmp.eq.s32.totalorder %s28, 1
      %p173 = scmp.ne.s32.totalorder %s168, %s170
      %p174 = scmp.eq.s32.totalorder %s28, 0
      %p175 = por %p173, %p174
      %p176 = scmp.ne.s32.totalorder %s168, %s170
      %p177 = scmp.eq.s32.totalorder %s33, 1
      %p178 = por %p176, %p177
      %p179 = scmp.ne.s32.totalorder %s170, %s171
      %p180 = scmp.eq.s32.totalorder %s33, 0
      %p181 = por %p179, %p180
      %p182 = scmp.ne.s32.totalorder %s170, %s171
      %p183 = scmp.eq.s32.totalorder %s34, 1
      %p184 = por %p182, %p183
      %p186 = scmp.ne.s32.totalorder %s171, %s185
      %p187 = scmp.eq.s32.totalorder %s34, 0
      %p188 = por %p186, %p187
      %s190 = sadd.s32 %s189, 1
      %p193 = scmp.eq.s32.totalorder %s28, 1
      %p194 = scmp.ne.s32.totalorder %s189, %s191
      %p195 = scmp.eq.s32.totalorder %s28, 0
      %p196 = por %p194, %p195
      %p197 = scmp.ne.s32.totalorder %s189, %s191
      %p198 = scmp.eq.s32.totalorder %s33, 1
      %p199 = por %p197, %p198
      %p200 = scmp.ne.s32.totalorder %s191, %s192
      %p201 = scmp.eq.s32.totalorder %s33, 0
      %p202 = por %p200, %p201
      %p203 = scmp.ne.s32.totalorder %s191, %s192
      %p204 = scmp.eq.s32.totalorder %s34, 1
      %p205 = por %p203, %p204
      %p207 = scmp.ne.s32.totalorder %s192, %s206
      %p208 = scmp.eq.s32.totalorder %s34, 0
      %p209 = por %p207, %p208
      %s211 = sadd.s32 %s210, 1
      %p214 = scmp.eq.s32.totalorder %s28, 1
      %p215 = scmp.ne.s32.totalorder %s210, %s212
      %p216 = scmp.eq.s32.totalorder %s28, 0
      %p217 = por %p215, %p216
      %p218 = scmp.ne.s32.totalorder %s210, %s212
      %p219 = scmp.eq.s32.totalorder %s33, 1
      %p220 = por %p218, %p219
      %p221 = scmp.ne.s32.totalorder %s212, %s213
      %p222 = scmp.eq.s32.totalorder %s33, 0
      %p223 = por %p221, %p222
      %p224 = scmp.ne.s32.totalorder %s212, %s213
      %p225 = scmp.eq.s32.totalorder %s34, 1
      %p226 = por %p224, %p225
      %p228 = scmp.ne.s32.totalorder %s213, %s227
      %p229 = scmp.eq.s32.totalorder %s34, 0
      %p230 = por %p228, %p229
      %s232 = sadd.s32 %s231, 1
      %p235 = scmp.eq.s32.totalorder %s28, 1
      %p236 = scmp.ne.s32.totalorder %s231, %s233
      %p237 = scmp.eq.s32.totalorder %s28, 0
      %p238 = por %p236, %p237
      %p239 = scmp.ne.s32.totalorder %s231, %s233
      %p240 = scmp.eq.s32.totalorder %s33, 1
      %p241 = por %p239, %p240
      %p242 = scmp.ne.s32.totalorder %s233, %s234
      %p243 = scmp.eq.s32.totalorder %s33, 0
      %p244 = por %p242, %p243
      %p245 = scmp.ne.s32.totalorder %s233, %s234
      %p246 = scmp.eq.s32.totalorder %s34, 1
      %p247 = por %p245, %p246
      %p249 = scmp.ne.s32.totalorder %s234, %s248
      %p250 = scmp.eq.s32.totalorder %s34, 0
      %p251 = por %p249, %p250
      %s253 = sadd.s32 %s252, 1
      %p256 = scmp.eq.s32.totalorder %s28, 1
      %p257 = scmp.ne.s32.totalorder %s252, %s254
      %p258 = scmp.eq.s32.totalorder %s28, 0
      %p259 = por %p257, %p258
      %p260 = scmp.ne.s32.totalorder %s252, %s254
      %p261 = scmp.eq.s32.totalorder %s33, 1
      %p262 = por %p260, %p261
      %p263 = scmp.ne.s32.totalorder %s254, %s255
      %p264 = scmp.eq.s32.totalorder %s33, 0
      %p265 = por %p263, %p264
      %p266 = scmp.ne.s32.totalorder %s254, %s255
      %p267 = scmp.eq.s32.totalorder %s34, 1
      %p268 = por %p266, %p267
      %p270 = scmp.ne.s32.totalorder %s255, %s269
      %p271 = scmp.eq.s32.totalorder %s34, 0
      %p272 = por %p270, %p271
      %s273 = ssub.s32 %s35, %s47
      %s274 = ssub.s32 %s36, %s43
      %s275 = sor.u32 %s273, %s274
      %p276 = scmp.eq.s32.totalorder %s275, 0
      %s278 = sadd.s32 %s277, 1
      %s279 = scalar_select %p276, %s277, %s278
      %p282 = pneg %p276
      %p283 = scmp.eq.s32.totalorder %s28, 1
      %p284 = por %p282, %p283
      %p285 = scmp.ne.s32.totalorder %s277, %s280
      %p286 = scmp.eq.s32.totalorder %s28, 0
      %p287 = por %p285, %p286
      %p288 = scmp.ne.s32.totalorder %s277, %s280
      %p289 = scmp.eq.s32.totalorder %s33, 1
      %p290 = por %p288, %p289
      %p291 = scmp.ne.s32.totalorder %s280, %s281
      %p292 = scmp.eq.s32.totalorder %s33, 0
      %p293 = por %p291, %p292
      %p294 = scmp.ne.s32.totalorder %s280, %s281
      %p295 = scmp.eq.s32.totalorder %s34, 1
      %p296 = por %p294, %p295
      %p298 = scmp.ne.s32.totalorder %s281, %s297
      %p299 = scmp.eq.s32.totalorder %s34, 0
      %p300 = por %p298, %p299
      %p301 = scmp.le.s32.totalorder 1, %s28
      %p302 = scmp.lt.s32.totalorder %s28, 3
      %p303 = pnand %p301, %p302
      %p304 = pneg %p303
      // Predicated region
      $region9: #{tpu_custom_call.1} parent=5 // pred_check
        _
      $region10: #{tpu_custom_call.1} parent=5 // pred_check_branch
        %306 = sbr.rel (%p303) target = $region12
      $region11: #{tpu_custom_call.1} parent=5 // pred_region
        %s307 = ssub.s32 %s28, 1
        // Predicated region
        $region13: #{tpu_custom_call.1} parent=11 // pred_check
          %p308 = pneg %p139
        $region14: #{tpu_custom_call.1} parent=11 // pred_check_branch
          %310 = sbr.rel (%p308) target = $region16
        $region15: #{tpu_custom_call.1} parent=11 // pred_region
          %s312 = ssub.s32 16384, 16384
          %313 = vsyncadd [#allocation10], %s312
          %s314 = sshll.u32 [#allocation9], 4
          %s315 = int_to_ptr.vmem [resolvable:$true] %s314
          %320 = dma.hbm_to_vmem [thread:$0]  %s3, 16384, %s315, [#allocation10], 512, 512, 32
        $region16: #{tpu_custom_call.1} parent=11 // pred_fallthru
          _
        // Predicated region
        $region17: #{tpu_custom_call.1} parent=11 // pred_check
          %p321 = pneg %p160
        $region18: #{tpu_custom_call.1} parent=11 // pred_check_branch
          %323 = sbr.rel (%p321) target = $region20
        $region19: #{tpu_custom_call.1} parent=11 // pred_region
          %s325 = ssub.s32 128, 128
          %326 = vsyncadd [#allocation10], %s325
          %s328 = sshll.u32 [#allocation11], 4
          %s329 = int_to_ptr.vmem [resolvable:$true] %s328
          %331 = dma.hbm_to_vmem [thread:$0]  %s4, 128, %s329, [#allocation10]
        $region20: #{tpu_custom_call.1} parent=11 // pred_fallthru
          _
        // Predicated region
        $region21: #{tpu_custom_call.1} parent=11 // pred_check
          %p332 = pneg %p181
        $region22: #{tpu_custom_call.1} parent=11 // pred_check_branch
          %334 = sbr.rel (%p332) target = $region24
        $region23: #{tpu_custom_call.1} parent=11 // pred_region
          %s336 = ssub.s32 4096, 4096
          %337 = vsyncadd [#allocation13], %s336
          %s338 = sshll.u32 [#allocation12], 4
          %s339 = int_to_ptr.vmem [resolvable:$true] %s338
          %344 = dma.hbm_to_vmem [thread:$0]  %s5, 4096, %s339, [#allocation13], 128, 128, 8
        $region24: #{tpu_custom_call.1} parent=11 // pred_fallthru
          _
        // Predicated region
        $region25: #{tpu_custom_call.1} parent=11 // pred_check
          %p345 = pneg %p202
        $region26: #{tpu_custom_call.1} parent=11 // pred_check_branch
          %347 = sbr.rel (%p345) target = $region28
        $region27: #{tpu_custom_call.1} parent=11 // pred_region
          %s349 = ssub.s32 32, 32
          %350 = vsyncadd [#allocation13], %s349
          %s352 = sshll.u32 [#allocation14], 4
          %s353 = int_to_ptr.vmem [resolvable:$true] %s352
          %355 = dma.hbm_to_vmem [thread:$0]  %s6, 32, %s353, [#allocation13]
        $region28: #{tpu_custom_call.1} parent=11 // pred_fallthru
          _
        // Predicated region
        $region29: #{tpu_custom_call.1} parent=11 // pred_check
          %p356 = pneg %p223
        $region30: #{tpu_custom_call.1} parent=11 // pred_check_branch
          %358 = sbr.rel (%p356) target = $region32
        $region31: #{tpu_custom_call.1} parent=11 // pred_region
          %s360 = ssub.s32 4096, 4096
          %361 = vsyncadd [#allocation16], %s360
          %s362 = sshll.u32 [#allocation15], 4
          %s363 = int_to_ptr.vmem [resolvable:$true] %s362
          %368 = dma.hbm_to_vmem [thread:$0]  %s7, 4096, %s363, [#allocation16], 128, 128, 8
        $region32: #{tpu_custom_call.1} parent=11 // pred_fallthru
          _
        // Predicated region
        $region33: #{tpu_custom_call.1} parent=11 // pred_check
          %p369 = pneg %p244
        $region34: #{tpu_custom_call.1} parent=11 // pred_check_branch
          %371 = sbr.rel (%p369) target = $region36
        $region35: #{tpu_custom_call.1} parent=11 // pred_region
          %s373 = ssub.s32 32, 32
          %374 = vsyncadd [#allocation16], %s373
          %s376 = sshll.u32 [#allocation17], 4
          %s377 = int_to_ptr.vmem [resolvable:$true] %s376
          %379 = dma.hbm_to_vmem [thread:$0]  %s8, 32, %s377, [#allocation16]
        $region36: #{tpu_custom_call.1} parent=11 // pred_fallthru
          _
        // Predicated region
        $region37: #{tpu_custom_call.1} parent=11 // pred_check
          %p380 = pneg %p265
        $region38: #{tpu_custom_call.1} parent=11 // pred_check_branch
          %382 = sbr.rel (%p380) target = $region40
        $region39: #{tpu_custom_call.1} parent=11 // pred_region
          _
        $region40: #{tpu_custom_call.1} parent=11 // pred_fallthru
          _
      $region12: #{tpu_custom_call.1} parent=5 // pred_fallthru
        _
      %p383 = scmp.lt.s32.totalorder %s28, 2
      // Predicated region
      $region41: #{tpu_custom_call.1} parent=5 // pred_check
        %p384 = pneg %p383
      $region42: #{tpu_custom_call.1} parent=5 // pred_check_branch
        %386 = sbr.rel (%p384) target = $region44
      $region43: #{tpu_custom_call.1} parent=5 // pred_region
        // Predicated region
        $region45: #{tpu_custom_call.1} parent=43 // pred_check
          %p387 = pneg %p60
        $region46: #{tpu_custom_call.1} parent=43 // pred_check_branch
          %389 = sbr.rel (%p387) target = $region48
        $region47: #{tpu_custom_call.1} parent=43 // pred_region
          %s390 = sand.u32 %s50, 1
          %s391 = scalar_lea.sflag [#allocation4], %s390
          %s392 = sand.u32 %s50, 1
          %s393 = smul.addr %s392, 32
          %s394 = scalar_lea.vmem [#allocation3], %s393
          %s396 = ssub.s32 512, 512
          %397 = vsyncadd %s391, %s396
          %s398 = smul.addr %s35, 4
          %s399 = smul.addr %s398, 128
          %s400 = scalar_lea.hbm %s0, %s399
          %s401 = sshll.u32 %s394, 4
          %s402 = int_to_ptr.vmem [resolvable:$true] %s401
          %407 = dma.hbm_to_vmem [thread:$0]  %s400, 512, %s402, %s391, 256, 256, 16
        $region48: #{tpu_custom_call.1} parent=43 // pred_fallthru
          _
        // Predicated region
        $region49: #{tpu_custom_call.1} parent=43 // pred_check
          %p408 = pneg %p86
        $region50: #{tpu_custom_call.1} parent=43 // pred_check_branch
          %410 = sbr.rel (%p408) target = $region52
        $region51: #{tpu_custom_call.1} parent=43 // pred_region
          %s411 = sand.u32 %s28, 1
          %s412 = scalar_lea.sflag [#allocation7], %s411
          %s413 = sand.u32 %s76, 1
          %s414 = scalar_lea.vmem [#allocation6], %s413
          %s416 = ssub.s32 16, 16
          %417 = vsyncadd %s412, %s416
          %s418 = smul.addr %s35, 16
          %s419 = scalar_lea.hbm %s1, %s418
          %s421 = sshll.u32 %s414, 4
          %s422 = int_to_ptr.vmem [resolvable:$true] %s421
          %424 = dma.hbm_to_vmem [thread:$0]  %s419, 16, %s422, %s412
        $region52: #{tpu_custom_call.1} parent=43 // pred_fallthru
          _
        // Predicated region
        $region53: #{tpu_custom_call.1} parent=43 // pred_check
          %p425 = pneg %p112
        $region54: #{tpu_custom_call.1} parent=43 // pred_check_branch
          %427 = sbr.rel (%p425) target = $region56
        $region55: #{tpu_custom_call.1} parent=43 // pred_region
          %s428 = sand.u32 %s28, 1
          %s429 = scalar_lea.sflag [#allocation7], %s428
          %s430 = sand.u32 %s102, 1
          %s431 = smul.addr %s430, 2
          %s432 = scalar_lea.vmem [#allocation8], %s431
          %s434 = ssub.s32 32, 32
          %435 = vsyncadd %s429, %s434
          %s436 = smul.addr %s35, 2
          %s437 = smul.addr %s436, 16
          %s438 = scalar_lea.hbm %s2, %s437
          %s440 = sshll.u32 %s432, 4
          %s441 = int_to_ptr.vmem [resolvable:$true] %s440
          %443 = dma.hbm_to_vmem [thread:$0]  %s438, 32, %s441, %s429
        $region56: #{tpu_custom_call.1} parent=43 // pred_fallthru
          _
      $region44: #{tpu_custom_call.1} parent=5 // pred_fallthru
        _
      %p444 = scmp.le.s32.totalorder 1, %s28
      %p445 = scmp.lt.s32.totalorder %s28, 3
      %p446 = pnand %p444, %p445
      %p447 = pneg %p446
      // Predicated region
      $region57: #{tpu_custom_call.1} parent=5 // pred_check
        _
      $region58: #{tpu_custom_call.1} parent=5 // pred_check_branch
        %449 = sbr.rel (%p446) target = $region60
      $region59: #{tpu_custom_call.1} parent=5 // pred_region
        %s450 = ssub.s32 %s28, 1
        %s451 = sand.u32 %s53, 1
        %s452 = scalar_lea.sflag [#allocation4], %s451
        %s453 = sand.u32 %s53, 1
        %s454 = smul.addr %s453, 32
        %s455 = scalar_lea.vmem [#allocation3], %s454
        // Predicated region
        $region61: #{tpu_custom_call.1} parent=59 // pred_check
          %p456 = pneg %p66
        $region62: #{tpu_custom_call.1} parent=59 // pred_check_branch
          %458 = sbr.rel (%p456) target = $region64
        $region63: #{tpu_custom_call.1} parent=59 // pred_region
          %459 = dma.done %s452, 512
        $region64: #{tpu_custom_call.1} parent=59 // pred_fallthru
          _
        %s460 = sand.u32 %s33, 1
        %s461 = scalar_lea.sflag [#allocation7], %s460
        %s462 = sand.u32 %s79, 1
        %s463 = scalar_lea.vmem [#allocation6], %s462
        // Predicated region
        $region65: #{tpu_custom_call.1} parent=59 // pred_check
          %p464 = pneg %p92
        $region66: #{tpu_custom_call.1} parent=59 // pred_check_branch
          %466 = sbr.rel (%p464) target = $region68
        $region67: #{tpu_custom_call.1} parent=59 // pred_region
          %467 = dma.done %s461, 16
        $region68: #{tpu_custom_call.1} parent=59 // pred_fallthru
          _
        %s468 = sand.u32 %s33, 1
        %s469 = scalar_lea.sflag [#allocation7], %s468
        %s470 = sand.u32 %s105, 1
        %s471 = smul.addr %s470, 2
        %s472 = scalar_lea.vmem [#allocation8], %s471
        // Predicated region
        $region69: #{tpu_custom_call.1} parent=59 // pred_check
          %p473 = pneg %p118
        $region70: #{tpu_custom_call.1} parent=59 // pred_check_branch
          %475 = sbr.rel (%p473) target = $region72
        $region71: #{tpu_custom_call.1} parent=59 // pred_region
          %476 = dma.done %s469, 32
        $region72: #{tpu_custom_call.1} parent=59 // pred_fallthru
          _
        // Predicated region
        $region73: #{tpu_custom_call.1} parent=59 // pred_check
          %p477 = pneg %p139
        $region74: #{tpu_custom_call.1} parent=59 // pred_check_branch
          %479 = sbr.rel (%p477) target = $region76
        $region75: #{tpu_custom_call.1} parent=59 // pred_region
          %480 = dma.done [#allocation10], 16384
        $region76: #{tpu_custom_call.1} parent=59 // pred_fallthru
          _
        // Predicated region
        $region77: #{tpu_custom_call.1} parent=59 // pred_check
          %p481 = pneg %p160
        $region78: #{tpu_custom_call.1} parent=59 // pred_check_branch
          %483 = sbr.rel (%p481) target = $region80
        $region79: #{tpu_custom_call.1} parent=59 // pred_region
          %484 = dma.done [#allocation10], 128
        $region80: #{tpu_custom_call.1} parent=59 // pred_fallthru
          _
        // Predicated region
        $region81: #{tpu_custom_call.1} parent=59 // pred_check
          %p485 = pneg %p181
        $region82: #{tpu_custom_call.1} parent=59 // pred_check_branch
          %487 = sbr.rel (%p485) target = $region84
        $region83: #{tpu_custom_call.1} parent=59 // pred_region
          %488 = dma.done [#allocation13], 4096
        $region84: #{tpu_custom_call.1} parent=59 // pred_fallthru
          _
        // Predicated region
        $region85: #{tpu_custom_call.1} parent=59 // pred_check
          %p489 = pneg %p202
        $region86: #{tpu_custom_call.1} parent=59 // pred_check_branch
          %491 = sbr.rel (%p489) target = $region88
        $region87: #{tpu_custom_call.1} parent=59 // pred_region
          %492 = dma.done [#allocation13], 32
        $region88: #{tpu_custom_call.1} parent=59 // pred_fallthru
          _
        // Predicated region
        $region89: #{tpu_custom_call.1} parent=59 // pred_check
          %p493 = pneg %p223
        $region90: #{tpu_custom_call.1} parent=59 // pred_check_branch
          %495 = sbr.rel (%p493) target = $region92
        $region91: #{tpu_custom_call.1} parent=59 // pred_region
          %496 = dma.done [#allocation16], 4096
        $region92: #{tpu_custom_call.1} parent=59 // pred_fallthru
          _
        // Predicated region
        $region93: #{tpu_custom_call.1} parent=59 // pred_check
          %p497 = pneg %p244
        $region94: #{tpu_custom_call.1} parent=59 // pred_check_branch
          %499 = sbr.rel (%p497) target = $region96
        $region95: #{tpu_custom_call.1} parent=59 // pred_region
          %500 = dma.done [#allocation16], 32
        $region96: #{tpu_custom_call.1} parent=59 // pred_fallthru
          _
        %s501 = sand.u32 %s53, 1
        %s502 = scalar_lea.sflag [#allocation4], %s501
        %s503 = sand.u32 %s53, 1
        %s504 = smul.addr %s503, 32
        %s505 = scalar_lea.vmem [#allocation3], %s504
        %p506 = pneg %p66
        %p507 = pneg %p63
        %s508 = sand.u32 %s33, 1
        %s509 = scalar_lea.sflag [#allocation7], %s508
        %s510 = sand.u32 %s79, 1
        %s511 = scalar_lea.vmem [#allocation6], %s510
        %p512 = pneg %p92
        %p513 = pneg %p89
        %s514 = sand.u32 %s33, 1
        %s515 = scalar_lea.sflag [#allocation7], %s514
        %s516 = sand.u32 %s105, 1
        %s517 = smul.addr %s516, 2
        %s518 = scalar_lea.vmem [#allocation8], %s517
        %p519 = pneg %p118
        %p520 = pneg %p115
        %p521 = pneg %p139
        %p522 = pneg %p136
        %p523 = pneg %p160
        %p524 = pneg %p157
        %p525 = pneg %p181
        %p526 = pneg %p178
        %p527 = pneg %p202
        %p528 = pneg %p199
        %p529 = pneg %p223
        %p530 = pneg %p220
        %p531 = pneg %p244
        %p532 = pneg %p241
        %p533 = pneg %p265
        %p534 = pneg %p262
        %p535 = pneg %p293
        %p536 = pneg %p290
        %s537 = sand.u32 %s280, 1
        %s538 = scalar_lea.sflag [#allocation5], %s537
        %s539 = sand.u32 %s280, 1
        %s540 = smul.addr %s539, 32
        %s541 = scalar_lea.vmem [#allocation18], %s540
        %s542 = smul.u32 2, %s38
        %p544 = scmp.eq.s32.totalorder %s38, 0
        // Predicated region
        $region97: #{tpu_custom_call.1} parent=59 // pred_check
          %p545 = pneg %p544
        $region98: #{tpu_custom_call.1} parent=59 // pred_check_branch
          %547 = sbr.rel (%p545) target = $region100
        $region99: #{tpu_custom_call.1} parent=59 // pred_region
          %v548 = vld [vmem:[%s455] sm:$0xff]
          %v549 = vld [vmem:[%s455 + $0x8] sm:$0xff]
          %v550 = vld [vmem:[%s455 + $0x10] sm:$0xff]
          %v551 = vld [vmem:[%s455 + $0x18] sm:$0xff]
          %v552 = vpack.c.bf16 %v550, %v548
          %v553 = vpack.c.bf16 %v551, %v549
          %v554 = vld [vmem:[#allocation9 + $0x8] sm:$0xff]
          %v555 = vld [vmem:[#allocation9 + $0x10] sm:$0xff]
          %v556 = vld [vmem:[#allocation9 + $0x28] sm:$0xff]
          %v557 = vld [vmem:[#allocation9 + $0x30] sm:$0xff]
          %v558 = vld [vmem:[#allocation9 + $0x48] sm:$0xff]
          %v559 = vld [vmem:[#allocation9 + $0x50] sm:$0xff]
          %v560 = vld [vmem:[#allocation9 + $0x68] sm:$0xff]
          %v561 = vld [vmem:[#allocation9 + $0x70] sm:$0xff]
          %v562 = vld [vmem:[#allocation9 + $0x88] sm:$0xff]
          %v563 = vld [vmem:[#allocation9 + $0x90] sm:$0xff]
          %v564 = vld [vmem:[#allocation9 + $0xa8] sm:$0xff]
          %v565 = vld [vmem:[#allocation9 + $0xb0] sm:$0xff]
          %v566 = vld [vmem:[#allocation9 + $0xc8] sm:$0xff]
          %v567 = vld [vmem:[#allocation9 + $0xd0] sm:$0xff]
          %v568 = vld [vmem:[#allocation9 + $0xe8] sm:$0xff]
          %v569 = vld [vmem:[#allocation9 + $0xf0] sm:$0xff]
          %v570 = vld [vmem:[#allocation9 + $0x108] sm:$0xff]
          %v571 = vld [vmem:[#allocation9 + $0x110] sm:$0xff]
          %v572 = vld [vmem:[#allocation9 + $0x128] sm:$0xff]
          %v573 = vld [vmem:[#allocation9 + $0x130] sm:$0xff]
          %v574 = vld [vmem:[#allocation9 + $0x148] sm:$0xff]
          %v575 = vld [vmem:[#allocation9 + $0x150] sm:$0xff]
          %v576 = vld [vmem:[#allocation9 + $0x168] sm:$0xff]
          %v577 = vld [vmem:[#allocation9 + $0x170] sm:$0xff]
          %v578 = vld [vmem:[#allocation9 + $0x188] sm:$0xff]
          %v579 = vld [vmem:[#allocation9 + $0x190] sm:$0xff]
          %v580 = vld [vmem:[#allocation9 + $0x1a8] sm:$0xff]
          %v581 = vld [vmem:[#allocation9 + $0x1b0] sm:$0xff]
          %v582 = vld [vmem:[#allocation9 + $0x1c8] sm:$0xff]
          %v583 = vld [vmem:[#allocation9 + $0x1d0] sm:$0xff]
          %v584 = vld [vmem:[#allocation9 + $0x1e8] sm:$0xff]
          %v585 = vld [vmem:[#allocation9 + $0x1f0] sm:$0xff]
          %v586 = vld [vmem:[#allocation9 + $0x208] sm:$0xff]
          %v587 = vld [vmem:[#allocation9 + $0x210] sm:$0xff]
          %v588 = vld [vmem:[#allocation9 + $0x228] sm:$0xff]
          %v589 = vld [vmem:[#allocation9 + $0x230] sm:$0xff]
          %v590 = vld [vmem:[#allocation9 + $0x248] sm:$0xff]
          %v591 = vld [vmem:[#allocation9 + $0x250] sm:$0xff]
          %v592 = vld [vmem:[#allocation9 + $0x268] sm:$0xff]
          %v593 = vld [vmem:[#allocation9 + $0x270] sm:$0xff]
          %v594 = vld [vmem:[#allocation9 + $0x288] sm:$0xff]
          %v595 = vld [vmem:[#allocation9 + $0x290] sm:$0xff]
          %v596 = vld [vmem:[#allocation9 + $0x2a8] sm:$0xff]
          %v597 = vld [vmem:[#allocation9 + $0x2b0] sm:$0xff]
          %v598 = vld [vmem:[#allocation9 + $0x2c8] sm:$0xff]
          %v599 = vld [vmem:[#allocation9 + $0x2d0] sm:$0xff]
          %v600 = vld [vmem:[#allocation9 + $0x2e8] sm:$0xff]
          %v601 = vld [vmem:[#allocation9 + $0x2f0] sm:$0xff]
          %v602 = vld [vmem:[#allocation9 + $0x308] sm:$0xff]
          %v603 = vld [vmem:[#allocation9 + $0x310] sm:$0xff]
          %v604 = vld [vmem:[#allocation9 + $0x328] sm:$0xff]
          %v605 = vld [vmem:[#allocation9 + $0x330] sm:$0xff]
          %v606 = vld [vmem:[#allocation9 + $0x348] sm:$0xff]
          %v607 = vld [vmem:[#allocation9 + $0x350] sm:$0xff]
          %v608 = vld [vmem:[#allocation9 + $0x368] sm:$0xff]
          %v609 = vld [vmem:[#allocation9 + $0x370] sm:$0xff]
          %v610 = vld [vmem:[#allocation9 + $0x388] sm:$0xff]
          %v611 = vld [vmem:[#allocation9 + $0x390] sm:$0xff]
          %v612 = vld [vmem:[#allocation9 + $0x3a8] sm:$0xff]
          %v613 = vld [vmem:[#allocation9 + $0x3b0] sm:$0xff]
          %v614 = vld [vmem:[#allocation9 + $0x3c8] sm:$0xff]
          %v615 = vld [vmem:[#allocation9 + $0x3d0] sm:$0xff]
          %v616 = vld [vmem:[#allocation9 + $0x3e8] sm:$0xff]
          %v617 = vld [vmem:[#allocation9 + $0x3f0] sm:$0xff]
          %v618 = vld [vmem:[#allocation11 + $0x2] sm:$0xf]
          %v620 = vlaneseq
          %v621 = vshrl.u32 %v620, 7
          %v622 = vsub.s32 0, %v621
          %v623 = vrot.slane %v618, %v622
          %v624 = vlaneseq
          %v625 = vshrl.u32 %v624, 7
          %v626 = vsub.s32 1, %v625
          %v627 = vrot.slane %v618, %v626
          %v628 = vlaneseq
          %v629 = vshrl.u32 %v628, 7
          %v630 = vsub.s32 2, %v629
          %v631 = vrot.slane %v618, %v630
          %v632 = vlaneseq
          %v633 = vshrl.u32 %v632, 7
          %v634 = vsub.s32 3, %v633
          %v635 = vrot.slane %v618, %v634
          %v704 = vunpack.c.l.b16 %v554
          %v705 = vunpack.c.h.b16 %v554
          %v706 = vunpack.c.l.b16 %v555
          %v707 = vunpack.c.h.b16 %v555
          %v708 = vunpack.c.l.b16 %v556
          %v709 = vunpack.c.h.b16 %v556
          %v710 = vunpack.c.l.b16 %v557
          %v711 = vunpack.c.h.b16 %v557
          %v712 = vunpack.c.l.b16 %v558
          %v713 = vunpack.c.h.b16 %v558
          %v714 = vunpack.c.l.b16 %v559
          %v715 = vunpack.c.h.b16 %v559
          %v716 = vunpack.c.l.b16 %v560
          %v717 = vunpack.c.h.b16 %v560
          %v718 = vunpack.c.l.b16 %v561
          %v719 = vunpack.c.h.b16 %v561
          %v720 = vunpack.c.l.b16 %v562
          %v721 = vunpack.c.h.b16 %v562
          %v722 = vunpack.c.l.b16 %v563
          %v723 = vunpack.c.h.b16 %v563
          %v724 = vunpack.c.l.b16 %v564
          %v725 = vunpack.c.h.b16 %v564
          %v726 = vunpack.c.l.b16 %v565
          %v727 = vunpack.c.h.b16 %v565
          %v728 = vunpack.c.l.b16 %v566
          %v729 = vunpack.c.h.b16 %v566
          %v730 = vunpack.c.l.b16 %v567
          %v731 = vunpack.c.h.b16 %v567
          %v732 = vunpack.c.l.b16 %v568
          %v733 = vunpack.c.h.b16 %v568
          %v734 = vunpack.c.l.b16 %v569
          %v735 = vunpack.c.h.b16 %v569
          %v736 = vunpack.c.l.b16 %v570
          %v737 = vunpack.c.h.b16 %v570
          %v738 = vunpack.c.l.b16 %v571
          %v739 = vunpack.c.h.b16 %v571
          %v740 = vunpack.c.l.b16 %v572
          %v741 = vunpack.c.h.b16 %v572
          %v742 = vunpack.c.l.b16 %v573
          %v743 = vunpack.c.h.b16 %v573
          %v744 = vunpack.c.l.b16 %v574
          %v745 = vunpack.c.h.b16 %v574
          %v746 = vunpack.c.l.b16 %v575
          %v747 = vunpack.c.h.b16 %v575
          %v748 = vunpack.c.l.b16 %v576
          %v749 = vunpack.c.h.b16 %v576
          %v750 = vunpack.c.l.b16 %v577
          %v751 = vunpack.c.h.b16 %v577
          %v752 = vunpack.c.l.b16 %v578
          %v753 = vunpack.c.h.b16 %v578
          %v754 = vunpack.c.l.b16 %v579
          %v755 = vunpack.c.h.b16 %v579
          %v756 = vunpack.c.l.b16 %v580
          %v757 = vunpack.c.h.b16 %v580
          %v758 = vunpack.c.l.b16 %v581
          %v759 = vunpack.c.h.b16 %v581
          %v760 = vunpack.c.l.b16 %v582
          %v761 = vunpack.c.h.b16 %v582
          %v762 = vunpack.c.l.b16 %v583
          %v763 = vunpack.c.h.b16 %v583
          %v764 = vunpack.c.l.b16 %v584
          %v765 = vunpack.c.h.b16 %v584
          %v766 = vunpack.c.l.b16 %v585
          %v767 = vunpack.c.h.b16 %v585
          %v768 = vunpack.c.l.b16 %v586
          %v769 = vunpack.c.h.b16 %v586
          %v770 = vunpack.c.l.b16 %v587
          %v771 = vunpack.c.h.b16 %v587
          %v772 = vunpack.c.l.b16 %v588
          %v773 = vunpack.c.h.b16 %v588
          %v774 = vunpack.c.l.b16 %v589
          %v775 = vunpack.c.h.b16 %v589
          %v776 = vunpack.c.l.b16 %v590
          %v777 = vunpack.c.h.b16 %v590
          %v778 = vunpack.c.l.b16 %v591
          %v779 = vunpack.c.h.b16 %v591
          %v780 = vunpack.c.l.b16 %v592
          %v781 = vunpack.c.h.b16 %v592
          %v782 = vunpack.c.l.b16 %v593
          %v783 = vunpack.c.h.b16 %v593
          %v784 = vunpack.c.l.b16 %v594
          %v785 = vunpack.c.h.b16 %v594
          %v786 = vunpack.c.l.b16 %v595
          %v787 = vunpack.c.h.b16 %v595
          %v788 = vunpack.c.l.b16 %v596
          %v789 = vunpack.c.h.b16 %v596
          %v790 = vunpack.c.l.b16 %v597
          %v791 = vunpack.c.h.b16 %v597
          %v792 = vunpack.c.l.b16 %v598
          %v793 = vunpack.c.h.b16 %v598
          %v794 = vunpack.c.l.b16 %v599
          %v795 = vunpack.c.h.b16 %v599
          %v796 = vunpack.c.l.b16 %v600
          %v797 = vunpack.c.h.b16 %v600
          %v798 = vunpack.c.l.b16 %v601
          %v799 = vunpack.c.h.b16 %v601
          %v800 = vunpack.c.l.b16 %v602
          %v801 = vunpack.c.h.b16 %v602
          %v802 = vunpack.c.l.b16 %v603
          %v803 = vunpack.c.h.b16 %v603
          %v804 = vunpack.c.l.b16 %v604
          %v805 = vunpack.c.h.b16 %v604
          %v806 = vunpack.c.l.b16 %v605
          %v807 = vunpack.c.h.b16 %v605
          %v808 = vunpack.c.l.b16 %v606
          %v809 = vunpack.c.h.b16 %v606
          %v810 = vunpack.c.l.b16 %v607
          %v811 = vunpack.c.h.b16 %v607
          %v812 = vunpack.c.l.b16 %v608
          %v813 = vunpack.c.h.b16 %v608
          %v814 = vunpack.c.l.b16 %v609
          %v815 = vunpack.c.h.b16 %v609
          %v816 = vunpack.c.l.b16 %v610
          %v817 = vunpack.c.h.b16 %v610
          %v818 = vunpack.c.l.b16 %v611
          %v819 = vunpack.c.h.b16 %v611
          %v820 = vunpack.c.l.b16 %v612
          %v821 = vunpack.c.h.b16 %v612
          %v822 = vunpack.c.l.b16 %v613
          %v823 = vunpack.c.h.b16 %v613
          %v824 = vunpack.c.l.b16 %v614
          %v825 = vunpack.c.h.b16 %v614
          %v826 = vunpack.c.l.b16 %v615
          %v827 = vunpack.c.h.b16 %v615
          %v828 = vunpack.c.l.b16 %v616
          %v829 = vunpack.c.h.b16 %v616
          %v830 = vunpack.c.l.b16 %v617
          %v831 = vunpack.c.h.b16 %v617
          %v832 = vpack.c.b16 %v708, %v704
          %v833 = vpack.c.b16 %v709, %v705
          %v834 = vpack.c.b16 %v710, %v706
          %v835 = vpack.c.b16 %v711, %v707
          %v836 = vpack.c.b16 %v716, %v712
          %v837 = vpack.c.b16 %v717, %v713
          %v838 = vpack.c.b16 %v718, %v714
          %v839 = vpack.c.b16 %v719, %v715
          %v840 = vpack.c.b16 %v724, %v720
          %v841 = vpack.c.b16 %v725, %v721
          %v842 = vpack.c.b16 %v726, %v722
          %v843 = vpack.c.b16 %v727, %v723
          %v844 = vpack.c.b16 %v732, %v728
          %v845 = vpack.c.b16 %v733, %v729
          %v846 = vpack.c.b16 %v734, %v730
          %v847 = vpack.c.b16 %v735, %v731
          %v848 = vpack.c.b16 %v740, %v736
          %v849 = vpack.c.b16 %v741, %v737
          %v850 = vpack.c.b16 %v742, %v738
          %v851 = vpack.c.b16 %v743, %v739
          %v852 = vpack.c.b16 %v748, %v744
          %v853 = vpack.c.b16 %v749, %v745
          %v854 = vpack.c.b16 %v750, %v746
          %v855 = vpack.c.b16 %v751, %v747
          %v856 = vpack.c.b16 %v756, %v752
          %v857 = vpack.c.b16 %v757, %v753
          %v858 = vpack.c.b16 %v758, %v754
          %v859 = vpack.c.b16 %v759, %v755
          %v860 = vpack.c.b16 %v764, %v760
          %v861 = vpack.c.b16 %v765, %v761
          %v862 = vpack.c.b16 %v766, %v762
          %v863 = vpack.c.b16 %v767, %v763
          %v864 = vpack.c.b16 %v772, %v768
          %v865 = vpack.c.b16 %v773, %v769
          %v866 = vpack.c.b16 %v774, %v770
          %v867 = vpack.c.b16 %v775, %v771
          %v868 = vpack.c.b16 %v780, %v776
          %v869 = vpack.c.b16 %v781, %v777
          %v870 = vpack.c.b16 %v782, %v778
          %v871 = vpack.c.b16 %v783, %v779
          %v872 = vpack.c.b16 %v788, %v784
          %v873 = vpack.c.b16 %v789, %v785
          %v874 = vpack.c.b16 %v790, %v786
          %v875 = vpack.c.b16 %v791, %v787
          %v876 = vpack.c.b16 %v796, %v792
          %v877 = vpack.c.b16 %v797, %v793
          %v878 = vpack.c.b16 %v798, %v794
          %v879 = vpack.c.b16 %v799, %v795
          %v880 = vpack.c.b16 %v804, %v800
          %v881 = vpack.c.b16 %v805, %v801
          %v882 = vpack.c.b16 %v806, %v802
          %v883 = vpack.c.b16 %v807, %v803
          %v884 = vpack.c.b16 %v812, %v808
          %v885 = vpack.c.b16 %v813, %v809
          %v886 = vpack.c.b16 %v814, %v810
          %v887 = vpack.c.b16 %v815, %v811
          %v888 = vpack.c.b16 %v820, %v816
          %v889 = vpack.c.b16 %v821, %v817
          %v890 = vpack.c.b16 %v822, %v818
          %v891 = vpack.c.b16 %v823, %v819
          %v892 = vpack.c.b16 %v828, %v824
          %v893 = vpack.c.b16 %v829, %v825
          %v894 = vpack.c.b16 %v830, %v826
          %v895 = vpack.c.b16 %v831, %v827
          %960 = vmatprep.subr.bf16.mxu0 %v861
          %961 = vmatpush1.bf16.msra.mxu0 %v860
          %962 = vmatprep.subr.bf16.mxu0 %v857
          %963 = vmatpush1.bf16.msra.mxu0 %v856
          %964 = vmatprep.subr.bf16.mxu0 %v853
          %965 = vmatpush1.bf16.msra.mxu0 %v852
          %966 = vmatprep.subr.bf16.mxu0 %v849
          %967 = vmatpush1.bf16.msra.mxu0 %v848
          %968 = vmatprep.subr.bf16.mxu0 %v845
          %969 = vmatpush1.bf16.msra.mxu0 %v844
          %970 = vmatprep.subr.bf16.mxu0 %v841
          %971 = vmatpush1.bf16.msra.mxu0 %v840
          %972 = vmatprep.subr.bf16.mxu0 %v837
          %973 = vmatpush1.bf16.msra.mxu0 %v836
          %974 = vmatprep.subr.bf16.mxu0 %v833
          %975 = vmatpush1.bf16.msra.mxu0 %v832
          %976 = vmatprep.subr.bf16.mxu0 %v893
          %977 = vmatpush2.bf16.msra.mxu0 %v892
          %978 = vmatprep.subr.bf16.mxu0 %v889
          %979 = vmatpush2.bf16.msra.mxu0 %v888
          %980 = vmatprep.subr.bf16.mxu0 %v885
          %981 = vmatpush2.bf16.msra.mxu0 %v884
          %982 = vmatprep.subr.bf16.mxu0 %v881
          %983 = vmatpush2.bf16.msra.mxu0 %v880
          %984 = vmatprep.subr.bf16.mxu0 %v877
          %985 = vmatpush2.bf16.msra.mxu0 %v876
          %986 = vmatprep.subr.bf16.mxu0 %v873
          %987 = vmatpush2.bf16.msra.mxu0 %v872
          %988 = vmatprep.subr.bf16.mxu0 %v869
          %989 = vmatpush2.bf16.msra.mxu0 %v868
          %990 = vmatprep.subr.bf16.mxu0 %v865
          %991 = vmatpush2.bf16.msra.mxu0 %v864
          %992 = vmatprep.mubr.bf16.mxu0 %v553
          %993 = vmatmul.mubr.bf16.gmra.mxu0 %v552
          %v994 = vpop.f32.mrf.mxu0
          %v995 = vadd.f32 %v623, %v994
          %v996 = vpop.f32.mrf.mxu0
          %v997 = vadd.f32 %v627, %v996
          %v998 = vpop.f32.mrf.mxu0
          %v999 = vadd.f32 %v623, %v998
          %v1000 = vpop.f32.mrf.mxu0
          %v1001 = vadd.f32 %v627, %v1000
          %1002 = vdwg.mxu0
          %1003 = vmatprep.subr.bf16.mxu0 %v863
          %1004 = vmatpush1.bf16.msra.mxu0 %v862
          %1005 = vmatprep.subr.bf16.mxu0 %v859
          %1006 = vmatpush1.bf16.msra.mxu0 %v858
          %1007 = vmatprep.subr.bf16.mxu0 %v855
          %1008 = vmatpush1.bf16.msra.mxu0 %v854
          %1009 = vmatprep.subr.bf16.mxu0 %v851
          %1010 = vmatpush1.bf16.msra.mxu0 %v850
          %1011 = vmatprep.subr.bf16.mxu0 %v847
          %1012 = vmatpush1.bf16.msra.mxu0 %v846
          %1013 = vmatprep.subr.bf16.mxu0 %v843
          %1014 = vmatpush1.bf16.msra.mxu0 %v842
          %1015 = vmatprep.subr.bf16.mxu0 %v839
          %1016 = vmatpush1.bf16.msra.mxu0 %v838
          %1017 = vmatprep.subr.bf16.mxu0 %v835
          %1018 = vmatpush1.bf16.msra.mxu0 %v834
          %1019 = vmatprep.subr.bf16.mxu0 %v895
          %1020 = vmatpush2.bf16.msra.mxu0 %v894
          %1021 = vmatprep.subr.bf16.mxu0 %v891
          %1022 = vmatpush2.bf16.msra.mxu0 %v890
          %1023 = vmatprep.subr.bf16.mxu0 %v887
          %1024 = vmatpush2.bf16.msra.mxu0 %v886
          %1025 = vmatprep.subr.bf16.mxu0 %v883
          %1026 = vmatpush2.bf16.msra.mxu0 %v882
          %1027 = vmatprep.subr.bf16.mxu0 %v879
          %1028 = vmatpush2.bf16.msra.mxu0 %v878
          %1029 = vmatprep.subr.bf16.mxu0 %v875
          %1030 = vmatpush2.bf16.msra.mxu0 %v874
          %1031 = vmatprep.subr.bf16.mxu0 %v871
          %1032 = vmatpush2.bf16.msra.mxu0 %v870
          %1033 = vmatprep.subr.bf16.mxu0 %v867
          %1034 = vmatpush2.bf16.msra.mxu0 %v866
          %1035 = vmatprep.mubr.bf16.mxu0 %v553
          %1036 = vmatmul.mubr.bf16.gmra.mxu0 %v552
          %v1037 = vpop.f32.mrf.mxu0
          %v1038 = vadd.f32 %v631, %v1037
          %v1039 = vpop.f32.mrf.mxu0
          %v1040 = vadd.f32 %v635, %v1039
          %v1041 = vpop.f32.mrf.mxu0
          %v1042 = vadd.f32 %v631, %v1041
          %v1043 = vpop.f32.mrf.mxu0
          %v1044 = vadd.f32 %v635, %v1043
          %1045 = vdwg.mxu0
          %v1046 = vpack.c.bf16 %v999, %v995
          %v1047 = vpack.c.bf16 %v1001, %v997
          %v1048 = vpack.c.bf16 %v1042, %v1038
          %v1049 = vpack.c.bf16 %v1044, %v1040
          %v1054 = vunpack.c.l.b16 %v1046
          %v1055 = vunpack.c.l.b16 %v1047
          %v1056 = vunpack.c.l.b16 %v1048
          %v1057 = vunpack.c.l.b16 %v1049
          %v1058 = vunpack.c.h.b16 %v1046
          %v1059 = vunpack.c.h.b16 %v1047
          %v1060 = vunpack.c.h.b16 %v1048
          %v1061 = vunpack.c.h.b16 %v1049
          %v1062 = vpack.c.b16 %v1055, %v1054
          %v1063 = vpack.c.b16 %v1057, %v1056
          %v1064 = vpack.c.b16 %v1059, %v1058
          %v1065 = vpack.c.b16 %v1061, %v1060
          %1070 = vst [vmem:[#allocation2] sm:$0xff] %v1062
          %1071 = vst [vmem:[#allocation2 + $0x8] sm:$0xff] %v1063
          %1072 = vst [vmem:[#allocation2 + $0x10] sm:$0xff] %v1064
          %1073 = vst [vmem:[#allocation2 + $0x18] sm:$0xff] %v1065
        $region100: #{tpu_custom_call.1} parent=59 // pred_fallthru
          _
        %s1074 = smul.u32 %s38, 16
        %s1075 = sshra.s32 %s1074, 3
        %s1076 = sand.u32 %s1074, 7
        %s1077 = smul.u32 %s1075, 2
        %s1078 = smul.addr %s1077, 8
        %s1079 = scalar_lea.vmem %s455, %s1078 [#allocation3]
        %v1080 = vld [vmem:[%s1079] sm:$0xff]
        %v1081 = vld [vmem:[%s1079 + $0x8] sm:$0xff]
        %v1082 = vld [vmem:[%s1079 + $0x10] sm:$0xff]
        %v1083 = vld [vmem:[%s1079 + $0x18] sm:$0xff]
        %v1084 = vpack.c.bf16 %v1082, %v1080
        %v1085 = vpack.c.bf16 %v1083, %v1081
        %v1086 = vld [vmem:[#allocation9] sm:$0xff]
        %v1087 = vld [vmem:[#allocation9 + $0x20] sm:$0xff]
        %v1088 = vld [vmem:[#allocation9 + $0x40] sm:$0xff]
        %v1089 = vld [vmem:[#allocation9 + $0x60] sm:$0xff]
        %v1090 = vld [vmem:[#allocation9 + $0x80] sm:$0xff]
        %v1091 = vld [vmem:[#allocation9 + $0xa0] sm:$0xff]
        %v1092 = vld [vmem:[#allocation9 + $0xc0] sm:$0xff]
        %v1093 = vld [vmem:[#allocation9 + $0xe0] sm:$0xff]
        %v1094 = vld [vmem:[#allocation9 + $0x100] sm:$0xff]
        %v1095 = vld [vmem:[#allocation9 + $0x120] sm:$0xff]
        %v1096 = vld [vmem:[#allocation9 + $0x140] sm:$0xff]
        %v1097 = vld [vmem:[#allocation9 + $0x160] sm:$0xff]
        %v1098 = vld [vmem:[#allocation9 + $0x180] sm:$0xff]
        %v1099 = vld [vmem:[#allocation9 + $0x1a0] sm:$0xff]
        %v1100 = vld [vmem:[#allocation9 + $0x1c0] sm:$0xff]
        %v1101 = vld [vmem:[#allocation9 + $0x1e0] sm:$0xff]
        %v1102 = vld [vmem:[#allocation9 + $0x200] sm:$0xff]
        %v1103 = vld [vmem:[#allocation9 + $0x220] sm:$0xff]
        %v1104 = vld [vmem:[#allocation9 + $0x240] sm:$0xff]
        %v1105 = vld [vmem:[#allocation9 + $0x260] sm:$0xff]
        %v1106 = vld [vmem:[#allocation9 + $0x280] sm:$0xff]
        %v1107 = vld [vmem:[#allocation9 + $0x2a0] sm:$0xff]
        %v1108 = vld [vmem:[#allocation9 + $0x2c0] sm:$0xff]
        %v1109 = vld [vmem:[#allocation9 + $0x2e0] sm:$0xff]
        %v1110 = vld [vmem:[#allocation9 + $0x300] sm:$0xff]
        %v1111 = vld [vmem:[#allocation9 + $0x320] sm:$0xff]
        %v1112 = vld [vmem:[#allocation9 + $0x340] sm:$0xff]
        %v1113 = vld [vmem:[#allocation9 + $0x360] sm:$0xff]
        %v1114 = vld [vmem:[#allocation9 + $0x380] sm:$0xff]
        %v1115 = vld [vmem:[#allocation9 + $0x3a0] sm:$0xff]
        %v1116 = vld [vmem:[#allocation9 + $0x3c0] sm:$0xff]
        %v1117 = vld [vmem:[#allocation9 + $0x3e0] sm:$0xff]
        %v1118 = vld [vmem:[#allocation11] sm:$0x3]
        %v1120 = vlaneseq
        %v1121 = vshrl.u32 %v1120, 7
        %v1122 = vsub.s32 0, %v1121
        %v1123 = vrot.slane %v1118, %v1122
        %v1124 = vlaneseq
        %v1125 = vshrl.u32 %v1124, 7
        %v1126 = vsub.s32 1, %v1125
        %v1127 = vrot.slane %v1118, %v1126
        %v1162 = vunpack.c.l.b16 %v1086
        %v1163 = vunpack.c.h.b16 %v1086
        %v1164 = vunpack.c.l.b16 %v1087
        %v1165 = vunpack.c.h.b16 %v1087
        %v1166 = vunpack.c.l.b16 %v1088
        %v1167 = vunpack.c.h.b16 %v1088
        %v1168 = vunpack.c.l.b16 %v1089
        %v1169 = vunpack.c.h.b16 %v1089
        %v1170 = vunpack.c.l.b16 %v1090
        %v1171 = vunpack.c.h.b16 %v1090
        %v1172 = vunpack.c.l.b16 %v1091
        %v1173 = vunpack.c.h.b16 %v1091
        %v1174 = vunpack.c.l.b16 %v1092
        %v1175 = vunpack.c.h.b16 %v1092
        %v1176 = vunpack.c.l.b16 %v1093
        %v1177 = vunpack.c.h.b16 %v1093
        %v1178 = vunpack.c.l.b16 %v1094
        %v1179 = vunpack.c.h.b16 %v1094
        %v1180 = vunpack.c.l.b16 %v1095
        %v1181 = vunpack.c.h.b16 %v1095
        %v1182 = vunpack.c.l.b16 %v1096
        %v1183 = vunpack.c.h.b16 %v1096
        %v1184 = vunpack.c.l.b16 %v1097
        %v1185 = vunpack.c.h.b16 %v1097
        %v1186 = vunpack.c.l.b16 %v1098
        %v1187 = vunpack.c.h.b16 %v1098
        %v1188 = vunpack.c.l.b16 %v1099
        %v1189 = vunpack.c.h.b16 %v1099
        %v1190 = vunpack.c.l.b16 %v1100
        %v1191 = vunpack.c.h.b16 %v1100
        %v1192 = vunpack.c.l.b16 %v1101
        %v1193 = vunpack.c.h.b16 %v1101
        %v1194 = vunpack.c.l.b16 %v1102
        %v1195 = vunpack.c.h.b16 %v1102
        %v1196 = vunpack.c.l.b16 %v1103
        %v1197 = vunpack.c.h.b16 %v1103
        %v1198 = vunpack.c.l.b16 %v1104
        %v1199 = vunpack.c.h.b16 %v1104
        %v1200 = vunpack.c.l.b16 %v1105
        %v1201 = vunpack.c.h.b16 %v1105
        %v1202 = vunpack.c.l.b16 %v1106
        %v1203 = vunpack.c.h.b16 %v1106
        %v1204 = vunpack.c.l.b16 %v1107
        %v1205 = vunpack.c.h.b16 %v1107
        %v1206 = vunpack.c.l.b16 %v1108
        %v1207 = vunpack.c.h.b16 %v1108
        %v1208 = vunpack.c.l.b16 %v1109
        %v1209 = vunpack.c.h.b16 %v1109
        %v1210 = vunpack.c.l.b16 %v1110
        %v1211 = vunpack.c.h.b16 %v1110
        %v1212 = vunpack.c.l.b16 %v1111
        %v1213 = vunpack.c.h.b16 %v1111
        %v1214 = vunpack.c.l.b16 %v1112
        %v1215 = vunpack.c.h.b16 %v1112
        %v1216 = vunpack.c.l.b16 %v1113
        %v1217 = vunpack.c.h.b16 %v1113
        %v1218 = vunpack.c.l.b16 %v1114
        %v1219 = vunpack.c.h.b16 %v1114
        %v1220 = vunpack.c.l.b16 %v1115
        %v1221 = vunpack.c.h.b16 %v1115
        %v1222 = vunpack.c.l.b16 %v1116
        %v1223 = vunpack.c.h.b16 %v1116
        %v1224 = vunpack.c.l.b16 %v1117
        %v1225 = vunpack.c.h.b16 %v1117
        %v1226 = vpack.c.b16 %v1164, %v1162
        %v1227 = vpack.c.b16 %v1165, %v1163
        %v1228 = vpack.c.b16 %v1168, %v1166
        %v1229 = vpack.c.b16 %v1169, %v1167
        %v1230 = vpack.c.b16 %v1172, %v1170
        %v1231 = vpack.c.b16 %v1173, %v1171
        %v1232 = vpack.c.b16 %v1176, %v1174
        %v1233 = vpack.c.b16 %v1177, %v1175
        %v1234 = vpack.c.b16 %v1180, %v1178
        %v1235 = vpack.c.b16 %v1181, %v1179
        %v1236 = vpack.c.b16 %v1184, %v1182
        %v1237 = vpack.c.b16 %v1185, %v1183
        %v1238 = vpack.c.b16 %v1188, %v1186
        %v1239 = vpack.c.b16 %v1189, %v1187
        %v1240 = vpack.c.b16 %v1192, %v1190
        %v1241 = vpack.c.b16 %v1193, %v1191
        %v1242 = vpack.c.b16 %v1196, %v1194
        %v1243 = vpack.c.b16 %v1197, %v1195
        %v1244 = vpack.c.b16 %v1200, %v1198
        %v1245 = vpack.c.b16 %v1201, %v1199
        %v1246 = vpack.c.b16 %v1204, %v1202
        %v1247 = vpack.c.b16 %v1205, %v1203
        %v1248 = vpack.c.b16 %v1208, %v1206
        %v1249 = vpack.c.b16 %v1209, %v1207
        %v1250 = vpack.c.b16 %v1212, %v1210
        %v1251 = vpack.c.b16 %v1213, %v1211
        %v1252 = vpack.c.b16 %v1216, %v1214
        %v1253 = vpack.c.b16 %v1217, %v1215
        %v1254 = vpack.c.b16 %v1220, %v1218
        %v1255 = vpack.c.b16 %v1221, %v1219
        %v1256 = vpack.c.b16 %v1224, %v1222
        %v1257 = vpack.c.b16 %v1225, %v1223
        %1290 = vmatprep.subr.bf16.mxu0 %v1241
        %1291 = vmatpush1.bf16.msra.mxu0 %v1240
        %1292 = vmatprep.subr.bf16.mxu0 %v1239
        %1293 = vmatpush1.bf16.msra.mxu0 %v1238
        %1294 = vmatprep.subr.bf16.mxu0 %v1237
        %1295 = vmatpush1.bf16.msra.mxu0 %v1236
        %1296 = vmatprep.subr.bf16.mxu0 %v1235
        %1297 = vmatpush1.bf16.msra.mxu0 %v1234
        %1298 = vmatprep.subr.bf16.mxu0 %v1233
        %1299 = vmatpush1.bf16.msra.mxu0 %v1232
        %1300 = vmatprep.subr.bf16.mxu0 %v1231
        %1301 = vmatpush1.bf16.msra.mxu0 %v1230
        %1302 = vmatprep.subr.bf16.mxu0 %v1229
        %1303 = vmatpush1.bf16.msra.mxu0 %v1228
        %1304 = vmatprep.subr.bf16.mxu0 %v1227
        %1305 = vmatpush1.bf16.msra.mxu0 %v1226
        %1306 = vmatprep.subr.bf16.mxu0 %v1257
        %1307 = vmatpush2.bf16.msra.mxu0 %v1256
        %1308 = vmatprep.subr.bf16.mxu0 %v1255
        %1309 = vmatpush2.bf16.msra.mxu0 %v1254
        %1310 = vmatprep.subr.bf16.mxu0 %v1253
        %1311 = vmatpush2.bf16.msra.mxu0 %v1252
        %1312 = vmatprep.subr.bf16.mxu0 %v1251
        %1313 = vmatpush2.bf16.msra.mxu0 %v1250
        %1314 = vmatprep.subr.bf16.mxu0 %v1249
        %1315 = vmatpush2.bf16.msra.mxu0 %v1248
        %1316 = vmatprep.subr.bf16.mxu0 %v1247
        %1317 = vmatpush2.bf16.msra.mxu0 %v1246
        %1318 = vmatprep.subr.bf16.mxu0 %v1245
        %1319 = vmatpush2.bf16.msra.mxu0 %v1244
        %1320 = vmatprep.subr.bf16.mxu0 %v1243
        %1321 = vmatpush2.bf16.msra.mxu0 %v1242
        %1322 = vmatprep.mubr.bf16.mxu0 %v1085
        %1323 = vmatmul.mubr.bf16.gmra.mxu0 %v1084
        %v1324 = vpop.f32.mrf.mxu0
        %v1325 = vadd.f32 %v1123, %v1324
        %v1326 = vpop.f32.mrf.mxu0
        %v1327 = vadd.f32 %v1127, %v1326
        %v1328 = vpop.f32.mrf.mxu0
        %v1329 = vadd.f32 %v1123, %v1328
        %v1330 = vpop.f32.mrf.mxu0
        %v1331 = vadd.f32 %v1127, %v1330
        %1332 = vdwg.mxu0
        %v1333 = vmul.f32 %v1325, 0.17677669
        %v1334 = vmul.f32 %v1327, 0.17677669
        %v1335 = vmul.f32 %v1329, 0.17677669
        %v1336 = vmul.f32 %v1331, 0.17677669
        %v1337 = vpack.c.bf16 %v1335, %v1333
        %v1338 = vpack.c.bf16 %v1336, %v1334
        %v1339 = vld [vmem:[%s463] sm:$0x1]
        %v1341 = vlaneseq
        %v1342 = vshrl.u32 %v1341, 7
        %v1343 = vsub.s32 0, %v1342
        %v1344 = vrot.slane %v1339, %v1343
        %v1346 = vld [vmem:[#allocation2] sm:$0xf]
        %v1347 = vld [vmem:[#allocation2 + $0x10] sm:$0xf]
        %v1348 = vld [vmem:[#allocation2 + $0x8] sm:$0xf]
        %v1349 = vld [vmem:[#allocation2 + $0x18] sm:$0xf]
        %v1352 = vunpack.c.l.b16 %v1346
        %v1353 = vunpack.c.l.b16 %v1347
        %v1354 = vpack.c.b16 %v1353, %v1352
        %vm1355 = vcmask 261120
        %v1357 = vsel %vm1355, %v1337, 0
        %v1360 = vsel %vm1355, %v1354, 0
        %1362 = vmatprep.subr.bf16.mxu0 0
        %1363 = vmatpush1.bf16.xpose.msra.mxu0 0
        %1364 = vmatprep.subr.bf16.mxu0 0
        %1365 = vmatpush1.bf16.xpose.msra.mxu0 0
        %1366 = vmatprep.subr.bf16.mxu0 0
        %1367 = vmatpush1.bf16.xpose.msra.mxu0 0
        %1368 = vmatprep.subr.bf16.mxu0 0
        %1369 = vmatpush1.bf16.xpose.msra.mxu0 0
        %1370 = vmatprep.subr.bf16.mxu0 0
        %1371 = vmatpush1.bf16.xpose.msra.mxu0 0
        %1372 = vmatprep.subr.bf16.mxu0 0
        %1373 = vmatpush1.bf16.xpose.msra.mxu0 0
        %1374 = vmatprep.subr.bf16.mxu0 0
        %1375 = vmatpush1.bf16.xpose.msra.mxu0 0
        %1376 = vmatprep.subr.bf16.mxu0 0
        %1377 = vmatpush1.bf16.xpose.msra.mxu0 %v1360
        %1378 = vmatprep.subr.bf16.mxu0 0
        %1379 = vmatpush2.bf16.xpose.msra.mxu0 0
        %1380 = vmatprep.subr.bf16.mxu0 0
        %1381 = vmatpush2.bf16.xpose.msra.mxu0 0
        %1382 = vmatprep.subr.bf16.mxu0 0
        %1383 = vmatpush2.bf16.xpose.msra.mxu0 0
        %1384 = vmatprep.subr.bf16.mxu0 0
        %1385 = vmatpush2.bf16.xpose.msra.mxu0 0
        %1386 = vmatprep.subr.bf16.mxu0 0
        %1387 = vmatpush2.bf16.xpose.msra.mxu0 0
        %1388 = vmatprep.subr.bf16.mxu0 0
        %1389 = vmatpush2.bf16.xpose.msra.mxu0 0
        %1390 = vmatprep.subr.bf16.mxu0 0
        %1391 = vmatpush2.bf16.xpose.msra.mxu0 0
        %1392 = vmatprep.subr.bf16.mxu0 0
        %1393 = vmatpush2.bf16.xpose.msra.mxu0 0
        %1394 = vmatprep.mubr.bf16.mxu0 0
        %1395 = vmatmul.mubr.bf16.gmra.mxu0 %v1357
        %v1396 = vpop.f32.mrf.mxu0
        %v1397 = vadd.f32 %v1344, %v1396
        %v1398 = vpop.f32.mrf.mxu0
        %v1399 = vpop.f32.mrf.mxu0
        %v1400 = vadd.f32 %v1344, %v1399
        %v1401 = vpop.f32.mrf.mxu0
        %1402 = vdwg.mxu0
        %vm1403 = vcmask 130048
        %v1404 = vsel %vm1403, %v1397, -inf
        %1405 = vmax.xlane.f32.xlu0 %v1404
        %v1406 = vpop.xlane.xlu0 %1405
        %v1407 = vsel %vm1403, %v1400, -inf
        %1408 = vmax.xlane.f32.xlu0 %v1407
        %v1409 = vpop.xlane.xlu0 %1408
        %v1410 = vsub.f32 %v1397, %v1406
        %v1411 = vsub.f32 %v1400, %v1409
        %v1412 = vmul.f32 %v1410, 1.442695
        %v1413 = vpow.pop %v1412
        %v1414 = vmul.f32 %v1411, 1.442695
        %v1415 = vpow.pop %v1414
        %v1416 = vsel %vm1403, %v1413, 0.0
        %1417 = vadd.xlane.f32.xlu0 %v1416
        %v1418 = vpop.xlane.xlu0 %1417
        %v1419 = vsel %vm1403, %v1415, 0.0
        %1420 = vadd.xlane.f32.xlu0 %v1419
        %v1421 = vpop.xlane.xlu0 %1420
        %v1422 = vpack.c.bf16 %v1415, %v1413
        %v1425 = vunpack.c.l.b16 %v1348
        %v1426 = vunpack.c.l.b16 %v1349
        %v1427 = vpack.c.b16 %v1426, %v1425
        %v1430 = vsel %vm1403, %v1422, 0
        %1432 = vmatprep.subr.bf16.mxu0 0
        %1433 = vmatpush1.bf16.msra.mxu0 0
        %1434 = vmatprep.subr.bf16.mxu0 0
        %1435 = vmatpush1.bf16.msra.mxu0 0
        %1436 = vmatprep.subr.bf16.mxu0 0
        %1437 = vmatpush1.bf16.msra.mxu0 0
        %1438 = vmatprep.subr.bf16.mxu0 0
        %1439 = vmatpush1.bf16.msra.mxu0 0
        %1440 = vmatprep.subr.bf16.mxu0 0
        %1441 = vmatpush1.bf16.msra.mxu0 0
        %1442 = vmatprep.subr.bf16.mxu0 0
        %1443 = vmatpush1.bf16.msra.mxu0 0
        %1444 = vmatprep.subr.bf16.mxu0 0
        %1445 = vmatpush1.bf16.msra.mxu0 0
        %1446 = vmatprep.subr.bf16.mxu0 0
        %1447 = vmatpush1.bf16.msra.mxu0 %v1427
        %1448 = vmatprep.subr.bf16.mxu0 0
        %1449 = vmatpush2.bf16.msra.mxu0 0
        %1450 = vmatprep.subr.bf16.mxu0 0
        %1451 = vmatpush2.bf16.msra.mxu0 0
        %1452 = vmatprep.subr.bf16.mxu0 0
        %1453 = vmatpush2.bf16.msra.mxu0 0
        %1454 = vmatprep.subr.bf16.mxu0 0
        %1455 = vmatpush2.bf16.msra.mxu0 0
        %1456 = vmatprep.subr.bf16.mxu0 0
        %1457 = vmatpush2.bf16.msra.mxu0 0
        %1458 = vmatprep.subr.bf16.mxu0 0
        %1459 = vmatpush2.bf16.msra.mxu0 0
        %1460 = vmatprep.subr.bf16.mxu0 0
        %1461 = vmatpush2.bf16.msra.mxu0 0
        %1462 = vmatprep.subr.bf16.mxu0 0
        %1463 = vmatpush2.bf16.msra.mxu0 0
        %1464 = vmatprep.mubr.bf16.mxu0 0
        %1465 = vmatmul.mubr.bf16.gmra.mxu0 %v1430
        %v1466 = vpop.f32.mrf.mxu0
        %v1467 = vadd.f32 0.0, %v1466
        %v1468 = vpop.f32.mrf.mxu0
        %v1469 = vpop.f32.mrf.mxu0
        %v1470 = vadd.f32 0.0, %v1469
        %v1471 = vpop.f32.mrf.mxu0
        %1472 = vdwg.mxu0
        %v1473 = vrcp.pop %v1418
        %v1474 = vrcp.pop %v1421
        %v1475 = vmul.f32 %v1467, %v1473
        %v1476 = vmul.f32 %v1470, %v1474
        %v1477 = vld [vmem:[#allocation9 + $0x18] sm:$0xff]
        %v1478 = vld [vmem:[#allocation9 + $0x38] sm:$0xff]
        %v1479 = vld [vmem:[#allocation9 + $0x58] sm:$0xff]
        %v1480 = vld [vmem:[#allocation9 + $0x78] sm:$0xff]
        %v1481 = vpack.c.bf16 %v1476, %v1475
        %1483 = vrot.lane.b32.xlu0 %v1337, 96
        %v1484 = vpop.permute.xlu0 %1483
        %1485 = vrot.lane.b32.xlu0 %v1354, 96
        %v1486 = vpop.permute.xlu0 %1485
        %v1488 = vsel %vm1355, %v1484, 0
        %v1491 = vsel %vm1355, %v1486, 0
        %1493 = vmatprep.subr.bf16.mxu0 0
        %1494 = vmatpush1.bf16.xpose.msra.mxu0 0
        %1495 = vmatprep.subr.bf16.mxu0 0
        %1496 = vmatpush1.bf16.xpose.msra.mxu0 0
        %1497 = vmatprep.subr.bf16.mxu0 0
        %1498 = vmatpush1.bf16.xpose.msra.mxu0 0
        %1499 = vmatprep.subr.bf16.mxu0 0
        %1500 = vmatpush1.bf16.xpose.msra.mxu0 0
        %1501 = vmatprep.subr.bf16.mxu0 0
        %1502 = vmatpush1.bf16.xpose.msra.mxu0 0
        %1503 = vmatprep.subr.bf16.mxu0 0
        %1504 = vmatpush1.bf16.xpose.msra.mxu0 0
        %1505 = vmatprep.subr.bf16.mxu0 0
        %1506 = vmatpush1.bf16.xpose.msra.mxu0 0
        %1507 = vmatprep.subr.bf16.mxu0 0
        %1508 = vmatpush1.bf16.xpose.msra.mxu0 %v1491
        %1509 = vmatprep.subr.bf16.mxu0 0
        %1510 = vmatpush2.bf16.xpose.msra.mxu0 0
        %1511 = vmatprep.subr.bf16.mxu0 0
        %1512 = vmatpush2.bf16.xpose.msra.mxu0 0
        %1513 = vmatprep.subr.bf16.mxu0 0
        %1514 = vmatpush2.bf16.xpose.msra.mxu0 0
        %1515 = vmatprep.subr.bf16.mxu0 0
        %1516 = vmatpush2.bf16.xpose.msra.mxu0 0
        %1517 = vmatprep.subr.bf16.mxu0 0
        %1518 = vmatpush2.bf16.xpose.msra.mxu0 0
        %1519 = vmatprep.subr.bf16.mxu0 0
        %1520 = vmatpush2.bf16.xpose.msra.mxu0 0
        %1521 = vmatprep.subr.bf16.mxu0 0
        %1522 = vmatpush2.bf16.xpose.msra.mxu0 0
        %1523 = vmatprep.subr.bf16.mxu0 0
        %1524 = vmatpush2.bf16.xpose.msra.mxu0 0
        %1525 = vmatprep.mubr.bf16.mxu0 0
        %1526 = vmatmul.mubr.bf16.gmra.mxu0 %v1488
        %v1527 = vpop.f32.mrf.mxu0
        %v1528 = vadd.f32 %v1344, %v1527
        %v1529 = vpop.f32.mrf.mxu0
        %v1530 = vpop.f32.mrf.mxu0
        %v1531 = vadd.f32 %v1344, %v1530
        %v1532 = vpop.f32.mrf.mxu0
        %1533 = vdwg.mxu0
        %v1534 = vsel %vm1403, %v1528, -inf
        %1535 = vmax.xlane.f32.xlu0 %v1534
        %v1536 = vpop.xlane.xlu0 %1535
        %v1537 = vsel %vm1403, %v1531, -inf
        %1538 = vmax.xlane.f32.xlu0 %v1537
        %v1539 = vpop.xlane.xlu0 %1538
        %v1540 = vsub.f32 %v1528, %v1536
        %v1541 = vsub.f32 %v1531, %v1539
        %v1542 = vmul.f32 %v1540, 1.442695
        %v1543 = vpow.pop %v1542
        %v1544 = vmul.f32 %v1541, 1.442695
        %v1545 = vpow.pop %v1544
        %v1546 = vsel %vm1403, %v1543, 0.0
        %1547 = vadd.xlane.f32.xlu0 %v1546
        %v1548 = vpop.xlane.xlu0 %1547
        %v1549 = vsel %vm1403, %v1545, 0.0
        %1550 = vadd.xlane.f32.xlu0 %v1549
        %v1551 = vpop.xlane.xlu0 %1550
        %v1552 = vpack.c.bf16 %v1545, %v1543
        %1553 = vrot.lane.b32.xlu0 %v1427, 96
        %v1554 = vpop.permute.xlu0 %1553
        %v1557 = vsel %vm1403, %v1552, 0
        %1559 = vmatprep.subr.bf16.mxu0 0
        %1560 = vmatpush1.bf16.msra.mxu0 0
        %1561 = vmatprep.subr.bf16.mxu0 0
        %1562 = vmatpush1.bf16.msra.mxu0 0
        %1563 = vmatprep.subr.bf16.mxu0 0
        %1564 = vmatpush1.bf16.msra.mxu0 0
        %1565 = vmatprep.subr.bf16.mxu0 0
        %1566 = vmatpush1.bf16.msra.mxu0 0
        %1567 = vmatprep.subr.bf16.mxu0 0
        %1568 = vmatpush1.bf16.msra.mxu0 0
        %1569 = vmatprep.subr.bf16.mxu0 0
        %1570 = vmatpush1.bf16.msra.mxu0 0
        %1571 = vmatprep.subr.bf16.mxu0 0
        %1572 = vmatpush1.bf16.msra.mxu0 0
        %1573 = vmatprep.subr.bf16.mxu0 0
        %1574 = vmatpush1.bf16.msra.mxu0 %v1554
        %1575 = vmatprep.subr.bf16.mxu0 0
        %1576 = vmatpush2.bf16.msra.mxu0 0
        %1577 = vmatprep.subr.bf16.mxu0 0
        %1578 = vmatpush2.bf16.msra.mxu0 0
        %1579 = vmatprep.subr.bf16.mxu0 0
        %1580 = vmatpush2.bf16.msra.mxu0 0
        %1581 = vmatprep.subr.bf16.mxu0 0
        %1582 = vmatpush2.bf16.msra.mxu0 0
        %1583 = vmatprep.subr.bf16.mxu0 0
        %1584 = vmatpush2.bf16.msra.mxu0 0
        %1585 = vmatprep.subr.bf16.mxu0 0
        %1586 = vmatpush2.bf16.msra.mxu0 0
        %1587 = vmatprep.subr.bf16.mxu0 0
        %1588 = vmatpush2.bf16.msra.mxu0 0
        %1589 = vmatprep.subr.bf16.mxu0 0
        %1590 = vmatpush2.bf16.msra.mxu0 0
        %1591 = vmatprep.mubr.bf16.mxu0 0
        %1592 = vmatmul.mubr.bf16.gmra.mxu0 %v1557
        %v1593 = vpop.f32.mrf.mxu0
        %v1594 = vadd.f32 0.0, %v1593
        %v1595 = vpop.f32.mrf.mxu0
        %v1596 = vpop.f32.mrf.mxu0
        %v1597 = vadd.f32 0.0, %v1596
        %v1598 = vpop.f32.mrf.mxu0
        %1599 = vdwg.mxu0
        %v1600 = vrcp.pop %v1548
        %v1601 = vrcp.pop %v1551
        %v1602 = vmul.f32 %v1594, %v1600
        %v1603 = vmul.f32 %v1597, %v1601
        %v1604 = vld [vmem:[#allocation9 + $0x98] sm:$0xff]
        %v1605 = vld [vmem:[#allocation9 + $0xb8] sm:$0xff]
        %v1606 = vld [vmem:[#allocation9 + $0xd8] sm:$0xff]
        %v1607 = vld [vmem:[#allocation9 + $0xf8] sm:$0xff]
        %v1608 = vpack.c.bf16 %v1603, %v1602
        %v1613 = vunpack.c.l.b16 %v1604
        %v1614 = vunpack.c.h.b16 %v1604
        %v1615 = vunpack.c.l.b16 %v1605
        %v1616 = vunpack.c.h.b16 %v1605
        %v1617 = vunpack.c.l.b16 %v1606
        %v1618 = vunpack.c.h.b16 %v1606
        %v1619 = vunpack.c.l.b16 %v1607
        %v1620 = vunpack.c.h.b16 %v1607
        %v1621 = vpack.c.b16 %v1615, %v1613
        %v1622 = vpack.c.b16 %v1616, %v1614
        %v1623 = vpack.c.b16 %v1619, %v1617
        %v1624 = vpack.c.b16 %v1620, %v1618
        %v1630 = vsel %vm1355, %v1608, 0
        %1632 = vmatprep.subr.bf16.mxu0 0
        %1633 = vmatpush1.bf16.msra.mxu0 0
        %1634 = vmatprep.subr.bf16.mxu0 0
        %1635 = vmatpush1.bf16.msra.mxu0 0
        %1636 = vmatprep.subr.bf16.mxu0 0
        %1637 = vmatpush1.bf16.msra.mxu0 0
        %1638 = vmatprep.subr.bf16.mxu0 0
        %1639 = vmatpush1.bf16.msra.mxu0 0
        %1640 = vmatprep.subr.bf16.mxu0 0
        %1641 = vmatpush1.bf16.msra.mxu0 0
        %1642 = vmatprep.subr.bf16.mxu0 0
        %1643 = vmatpush1.bf16.msra.mxu0 0
        %1644 = vmatprep.subr.bf16.mxu0 %v1624
        %1645 = vmatpush1.bf16.msra.mxu0 %v1623
        %1646 = vmatprep.subr.bf16.mxu0 %v1622
        %1647 = vmatpush1.bf16.msra.mxu0 %v1621
        %1648 = vmatprep.subr.bf16.mxu0 0
        %1649 = vmatpush2.bf16.msra.mxu0 0
        %1650 = vmatprep.subr.bf16.mxu0 0
        %1651 = vmatpush2.bf16.msra.mxu0 0
        %1652 = vmatprep.subr.bf16.mxu0 0
        %1653 = vmatpush2.bf16.msra.mxu0 0
        %1654 = vmatprep.subr.bf16.mxu0 0
        %1655 = vmatpush2.bf16.msra.mxu0 0
        %1656 = vmatprep.subr.bf16.mxu0 0
        %1657 = vmatpush2.bf16.msra.mxu0 0
        %1658 = vmatprep.subr.bf16.mxu0 0
        %1659 = vmatpush2.bf16.msra.mxu0 0
        %1660 = vmatprep.subr.bf16.mxu0 0
        %1661 = vmatpush2.bf16.msra.mxu0 0
        %1662 = vmatprep.subr.bf16.mxu0 0
        %1663 = vmatpush2.bf16.msra.mxu0 0
        %1664 = vmatprep.mubr.bf16.mxu0 0
        %1665 = vmatmul.mubr.bf16.gmra.mxu0 %v1630
        %v1666 = vpop.f32.mrf.mxu0
        %v1667 = vadd.f32 0.0, %v1666
        %v1668 = vpop.f32.mrf.mxu0
        %v1669 = vadd.f32 0.0, %v1668
        %v1670 = vpop.f32.mrf.mxu0
        %v1671 = vadd.f32 0.0, %v1670
        %v1672 = vpop.f32.mrf.mxu0
        %v1673 = vadd.f32 0.0, %v1672
        %1674 = vdwg.mxu0
        %v1679 = vunpack.c.l.b16 %v1477
        %v1680 = vunpack.c.h.b16 %v1477
        %v1681 = vunpack.c.l.b16 %v1478
        %v1682 = vunpack.c.h.b16 %v1478
        %v1683 = vunpack.c.l.b16 %v1479
        %v1684 = vunpack.c.h.b16 %v1479
        %v1685 = vunpack.c.l.b16 %v1480
        %v1686 = vunpack.c.h.b16 %v1480
        %v1687 = vpack.c.b16 %v1681, %v1679
        %v1688 = vpack.c.b16 %v1682, %v1680
        %v1689 = vpack.c.b16 %v1685, %v1683
        %v1690 = vpack.c.b16 %v1686, %v1684
        %v1696 = vsel %vm1355, %v1481, 0
        %1698 = vmatprep.subr.bf16.mxu0 0
        %1699 = vmatpush1.bf16.msra.mxu0 0
        %1700 = vmatprep.subr.bf16.mxu0 0
        %1701 = vmatpush1.bf16.msra.mxu0 0
        %1702 = vmatprep.subr.bf16.mxu0 0
        %1703 = vmatpush1.bf16.msra.mxu0 0
        %1704 = vmatprep.subr.bf16.mxu0 0
        %1705 = vmatpush1.bf16.msra.mxu0 0
        %1706 = vmatprep.subr.bf16.mxu0 0
        %1707 = vmatpush1.bf16.msra.mxu0 0
        %1708 = vmatprep.subr.bf16.mxu0 0
        %1709 = vmatpush1.bf16.msra.mxu0 0
        %1710 = vmatprep.subr.bf16.mxu0 %v1690
        %1711 = vmatpush1.bf16.msra.mxu0 %v1689
        %1712 = vmatprep.subr.bf16.mxu0 %v1688
        %1713 = vmatpush1.bf16.msra.mxu0 %v1687
        %1714 = vmatprep.subr.bf16.mxu0 0
        %1715 = vmatpush2.bf16.msra.mxu0 0
        %1716 = vmatprep.subr.bf16.mxu0 0
        %1717 = vmatpush2.bf16.msra.mxu0 0
        %1718 = vmatprep.subr.bf16.mxu0 0
        %1719 = vmatpush2.bf16.msra.mxu0 0
        %1720 = vmatprep.subr.bf16.mxu0 0
        %1721 = vmatpush2.bf16.msra.mxu0 0
        %1722 = vmatprep.subr.bf16.mxu0 0
        %1723 = vmatpush2.bf16.msra.mxu0 0
        %1724 = vmatprep.subr.bf16.mxu0 0
        %1725 = vmatpush2.bf16.msra.mxu0 0
        %1726 = vmatprep.subr.bf16.mxu0 0
        %1727 = vmatpush2.bf16.msra.mxu0 0
        %1728 = vmatprep.subr.bf16.mxu0 0
        %1729 = vmatpush2.bf16.msra.mxu0 0
        %1730 = vmatprep.mubr.bf16.mxu0 0
        %1731 = vmatmul.mubr.bf16.gmra.mxu0 %v1696
        %v1732 = vpop.f32.mrf.mxu0
        %v1733 = vadd.f32 %v1667, %v1732
        %v1734 = vpop.f32.mrf.mxu0
        %v1735 = vadd.f32 %v1669, %v1734
        %v1736 = vpop.f32.mrf.mxu0
        %v1737 = vadd.f32 %v1671, %v1736
        %v1738 = vpop.f32.mrf.mxu0
        %v1739 = vadd.f32 %v1673, %v1738
        %1740 = vdwg.mxu0
        %1741 = vrot.lane.b32.xlu0 %v1337, 64
        %v1742 = vpop.permute.xlu0 %1741
        %1743 = vrot.lane.b32.xlu0 %v1354, 64
        %v1744 = vpop.permute.xlu0 %1743
        %v1746 = vsel %vm1355, %v1742, 0
        %v1749 = vsel %vm1355, %v1744, 0
        %1751 = vmatprep.subr.bf16.mxu0 0
        %1752 = vmatpush1.bf16.xpose.msra.mxu0 0
        %1753 = vmatprep.subr.bf16.mxu0 0
        %1754 = vmatpush1.bf16.xpose.msra.mxu0 0
        %1755 = vmatprep.subr.bf16.mxu0 0
        %1756 = vmatpush1.bf16.xpose.msra.mxu0 0
        %1757 = vmatprep.subr.bf16.mxu0 0
        %1758 = vmatpush1.bf16.xpose.msra.mxu0 0
        %1759 = vmatprep.subr.bf16.mxu0 0
        %1760 = vmatpush1.bf16.xpose.msra.mxu0 0
        %1761 = vmatprep.subr.bf16.mxu0 0
        %1762 = vmatpush1.bf16.xpose.msra.mxu0 0
        %1763 = vmatprep.subr.bf16.mxu0 0
        %1764 = vmatpush1.bf16.xpose.msra.mxu0 0
        %1765 = vmatprep.subr.bf16.mxu0 0
        %1766 = vmatpush1.bf16.xpose.msra.mxu0 %v1749
        %1767 = vmatprep.subr.bf16.mxu0 0
        %1768 = vmatpush2.bf16.xpose.msra.mxu0 0
        %1769 = vmatprep.subr.bf16.mxu0 0
        %1770 = vmatpush2.bf16.xpose.msra.mxu0 0
        %1771 = vmatprep.subr.bf16.mxu0 0
        %1772 = vmatpush2.bf16.xpose.msra.mxu0 0
        %1773 = vmatprep.subr.bf16.mxu0 0
        %1774 = vmatpush2.bf16.xpose.msra.mxu0 0
        %1775 = vmatprep.subr.bf16.mxu0 0
        %1776 = vmatpush2.bf16.xpose.msra.mxu0 0
        %1777 = vmatprep.subr.bf16.mxu0 0
        %1778 = vmatpush2.bf16.xpose.msra.mxu0 0
        %1779 = vmatprep.subr.bf16.mxu0 0
        %1780 = vmatpush2.bf16.xpose.msra.mxu0 0
        %1781 = vmatprep.subr.bf16.mxu0 0
        %1782 = vmatpush2.bf16.xpose.msra.mxu0 0
        %1783 = vmatprep.mubr.bf16.mxu0 0
        %1784 = vmatmul.mubr.bf16.gmra.mxu0 %v1746
        %v1785 = vpop.f32.mrf.mxu0
        %v1786 = vadd.f32 %v1344, %v1785
        %v1787 = vpop.f32.mrf.mxu0
        %v1788 = vpop.f32.mrf.mxu0
        %v1789 = vadd.f32 %v1344, %v1788
        %v1790 = vpop.f32.mrf.mxu0
        %1791 = vdwg.mxu0
        %v1792 = vsel %vm1403, %v1786, -inf
        %1793 = vmax.xlane.f32.xlu0 %v1792
        %v1794 = vpop.xlane.xlu0 %1793
        %v1795 = vsel %vm1403, %v1789, -inf
        %1796 = vmax.xlane.f32.xlu0 %v1795
        %v1797 = vpop.xlane.xlu0 %1796
        %v1798 = vsub.f32 %v1786, %v1794
        %v1799 = vsub.f32 %v1789, %v1797
        %v1800 = vmul.f32 %v1798, 1.442695
        %v1801 = vpow.pop %v1800
        %v1802 = vmul.f32 %v1799, 1.442695
        %v1803 = vpow.pop %v1802
        %v1804 = vsel %vm1403, %v1801, 0.0
        %1805 = vadd.xlane.f32.xlu0 %v1804
        %v1806 = vpop.xlane.xlu0 %1805
        %v1807 = vsel %vm1403, %v1803, 0.0
        %1808 = vadd.xlane.f32.xlu0 %v1807
        %v1809 = vpop.xlane.xlu0 %1808
        %v1810 = vpack.c.bf16 %v1803, %v1801
        %1811 = vrot.lane.b32.xlu0 %v1427, 64
        %v1812 = vpop.permute.xlu0 %1811
        %v1815 = vsel %vm1403, %v1810, 0
        %1817 = vmatprep.subr.bf16.mxu0 0
        %1818 = vmatpush1.bf16.msra.mxu0 0
        %1819 = vmatprep.subr.bf16.mxu0 0
        %1820 = vmatpush1.bf16.msra.mxu0 0
        %1821 = vmatprep.subr.bf16.mxu0 0
        %1822 = vmatpush1.bf16.msra.mxu0 0
        %1823 = vmatprep.subr.bf16.mxu0 0
        %1824 = vmatpush1.bf16.msra.mxu0 0
        %1825 = vmatprep.subr.bf16.mxu0 0
        %1826 = vmatpush1.bf16.msra.mxu0 0
        %1827 = vmatprep.subr.bf16.mxu0 0
        %1828 = vmatpush1.bf16.msra.mxu0 0
        %1829 = vmatprep.subr.bf16.mxu0 0
        %1830 = vmatpush1.bf16.msra.mxu0 0
        %1831 = vmatprep.subr.bf16.mxu0 0
        %1832 = vmatpush1.bf16.msra.mxu0 %v1812
        %1833 = vmatprep.subr.bf16.mxu0 0
        %1834 = vmatpush2.bf16.msra.mxu0 0
        %1835 = vmatprep.subr.bf16.mxu0 0
        %1836 = vmatpush2.bf16.msra.mxu0 0
        %1837 = vmatprep.subr.bf16.mxu0 0
        %1838 = vmatpush2.bf16.msra.mxu0 0
        %1839 = vmatprep.subr.bf16.mxu0 0
        %1840 = vmatpush2.bf16.msra.mxu0 0
        %1841 = vmatprep.subr.bf16.mxu0 0
        %1842 = vmatpush2.bf16.msra.mxu0 0
        %1843 = vmatprep.subr.bf16.mxu0 0
        %1844 = vmatpush2.bf16.msra.mxu0 0
        %1845 = vmatprep.subr.bf16.mxu0 0
        %1846 = vmatpush2.bf16.msra.mxu0 0
        %1847 = vmatprep.subr.bf16.mxu0 0
        %1848 = vmatpush2.bf16.msra.mxu0 0
        %1849 = vmatprep.mubr.bf16.mxu0 0
        %1850 = vmatmul.mubr.bf16.gmra.mxu0 %v1815
        %v1851 = vpop.f32.mrf.mxu0
        %v1852 = vadd.f32 0.0, %v1851
        %v1853 = vpop.f32.mrf.mxu0
        %v1854 = vpop.f32.mrf.mxu0
        %v1855 = vadd.f32 0.0, %v1854
        %v1856 = vpop.f32.mrf.mxu0
        %1857 = vdwg.mxu0
        %v1858 = vrcp.pop %v1806
        %v1859 = vrcp.pop %v1809
        %v1860 = vmul.f32 %v1852, %v1858
        %v1861 = vmul.f32 %v1855, %v1859
        %v1862 = vld [vmem:[#allocation9 + $0x118] sm:$0xff]
        %v1863 = vld [vmem:[#allocation9 + $0x138] sm:$0xff]
        %v1864 = vld [vmem:[#allocation9 + $0x158] sm:$0xff]
        %v1865 = vld [vmem:[#allocation9 + $0x178] sm:$0xff]
        %v1866 = vpack.c.bf16 %v1861, %v1860
        %v1871 = vunpack.c.l.b16 %v1862
        %v1872 = vunpack.c.h.b16 %v1862
        %v1873 = vunpack.c.l.b16 %v1863
        %v1874 = vunpack.c.h.b16 %v1863
        %v1875 = vunpack.c.l.b16 %v1864
        %v1876 = vunpack.c.h.b16 %v1864
        %v1877 = vunpack.c.l.b16 %v1865
        %v1878 = vunpack.c.h.b16 %v1865
        %v1879 = vpack.c.b16 %v1873, %v1871
        %v1880 = vpack.c.b16 %v1874, %v1872
        %v1881 = vpack.c.b16 %v1877, %v1875
        %v1882 = vpack.c.b16 %v1878, %v1876
        %v1888 = vsel %vm1355, %v1866, 0
        %1890 = vmatprep.subr.bf16.mxu0 0
        %1891 = vmatpush1.bf16.msra.mxu0 0
        %1892 = vmatprep.subr.bf16.mxu0 0
        %1893 = vmatpush1.bf16.msra.mxu0 0
        %1894 = vmatprep.subr.bf16.mxu0 0
        %1895 = vmatpush1.bf16.msra.mxu0 0
        %1896 = vmatprep.subr.bf16.mxu0 0
        %1897 = vmatpush1.bf16.msra.mxu0 0
        %1898 = vmatprep.subr.bf16.mxu0 0
        %1899 = vmatpush1.bf16.msra.mxu0 0
        %1900 = vmatprep.subr.bf16.mxu0 0
        %1901 = vmatpush1.bf16.msra.mxu0 0
        %1902 = vmatprep.subr.bf16.mxu0 %v1882
        %1903 = vmatpush1.bf16.msra.mxu0 %v1881
        %1904 = vmatprep.subr.bf16.mxu0 %v1880
        %1905 = vmatpush1.bf16.msra.mxu0 %v1879
        %1906 = vmatprep.subr.bf16.mxu0 0
        %1907 = vmatpush2.bf16.msra.mxu0 0
        %1908 = vmatprep.subr.bf16.mxu0 0
        %1909 = vmatpush2.bf16.msra.mxu0 0
        %1910 = vmatprep.subr.bf16.mxu0 0
        %1911 = vmatpush2.bf16.msra.mxu0 0
        %1912 = vmatprep.subr.bf16.mxu0 0
        %1913 = vmatpush2.bf16.msra.mxu0 0
        %1914 = vmatprep.subr.bf16.mxu0 0
        %1915 = vmatpush2.bf16.msra.mxu0 0
        %1916 = vmatprep.subr.bf16.mxu0 0
        %1917 = vmatpush2.bf16.msra.mxu0 0
        %1918 = vmatprep.subr.bf16.mxu0 0
        %1919 = vmatpush2.bf16.msra.mxu0 0
        %1920 = vmatprep.subr.bf16.mxu0 0
        %1921 = vmatpush2.bf16.msra.mxu0 0
        %1922 = vmatprep.mubr.bf16.mxu0 0
        %1923 = vmatmul.mubr.bf16.gmra.mxu0 %v1888
        %v1924 = vpop.f32.mrf.mxu0
        %v1925 = vadd.f32 0.0, %v1924
        %v1926 = vpop.f32.mrf.mxu0
        %v1927 = vadd.f32 0.0, %v1926
        %v1928 = vpop.f32.mrf.mxu0
        %v1929 = vadd.f32 0.0, %v1928
        %v1930 = vpop.f32.mrf.mxu0
        %v1931 = vadd.f32 0.0, %v1930
        %1932 = vdwg.mxu0
        %v1933 = vadd.f32 %v1733, %v1925
        %v1934 = vadd.f32 %v1735, %v1927
        %v1935 = vadd.f32 %v1737, %v1929
        %v1936 = vadd.f32 %v1739, %v1931
        %1937 = vrot.lane.b32.xlu0 %v1337, 32
        %v1938 = vpop.permute.xlu0 %1937
        %1939 = vrot.lane.b32.xlu0 %v1354, 32
        %v1940 = vpop.permute.xlu0 %1939
        %v1942 = vsel %vm1355, %v1938, 0
        %v1945 = vsel %vm1355, %v1940, 0
        %1947 = vmatprep.subr.bf16.mxu0 0
        %1948 = vmatpush1.bf16.xpose.msra.mxu0 0
        %1949 = vmatprep.subr.bf16.mxu0 0
        %1950 = vmatpush1.bf16.xpose.msra.mxu0 0
        %1951 = vmatprep.subr.bf16.mxu0 0
        %1952 = vmatpush1.bf16.xpose.msra.mxu0 0
        %1953 = vmatprep.subr.bf16.mxu0 0
        %1954 = vmatpush1.bf16.xpose.msra.mxu0 0
        %1955 = vmatprep.subr.bf16.mxu0 0
        %1956 = vmatpush1.bf16.xpose.msra.mxu0 0
        %1957 = vmatprep.subr.bf16.mxu0 0
        %1958 = vmatpush1.bf16.xpose.msra.mxu0 0
        %1959 = vmatprep.subr.bf16.mxu0 0
        %1960 = vmatpush1.bf16.xpose.msra.mxu0 0
        %1961 = vmatprep.subr.bf16.mxu0 0
        %1962 = vmatpush1.bf16.xpose.msra.mxu0 %v1945
        %1963 = vmatprep.subr.bf16.mxu0 0
        %1964 = vmatpush2.bf16.xpose.msra.mxu0 0
        %1965 = vmatprep.subr.bf16.mxu0 0
        %1966 = vmatpush2.bf16.xpose.msra.mxu0 0
        %1967 = vmatprep.subr.bf16.mxu0 0
        %1968 = vmatpush2.bf16.xpose.msra.mxu0 0
        %1969 = vmatprep.subr.bf16.mxu0 0
        %1970 = vmatpush2.bf16.xpose.msra.mxu0 0
        %1971 = vmatprep.subr.bf16.mxu0 0
        %1972 = vmatpush2.bf16.xpose.msra.mxu0 0
        %1973 = vmatprep.subr.bf16.mxu0 0
        %1974 = vmatpush2.bf16.xpose.msra.mxu0 0
        %1975 = vmatprep.subr.bf16.mxu0 0
        %1976 = vmatpush2.bf16.xpose.msra.mxu0 0
        %1977 = vmatprep.subr.bf16.mxu0 0
        %1978 = vmatpush2.bf16.xpose.msra.mxu0 0
        %1979 = vmatprep.mubr.bf16.mxu0 0
        %1980 = vmatmul.mubr.bf16.gmra.mxu0 %v1942
        %v1981 = vpop.f32.mrf.mxu0
        %v1982 = vadd.f32 %v1344, %v1981
        %v1983 = vpop.f32.mrf.mxu0
        %v1984 = vpop.f32.mrf.mxu0
        %v1985 = vadd.f32 %v1344, %v1984
        %v1986 = vpop.f32.mrf.mxu0
        %1987 = vdwg.mxu0
        %v1988 = vsel %vm1403, %v1982, -inf
        %1989 = vmax.xlane.f32.xlu0 %v1988
        %v1990 = vpop.xlane.xlu0 %1989
        %v1991 = vsel %vm1403, %v1985, -inf
        %1992 = vmax.xlane.f32.xlu0 %v1991
        %v1993 = vpop.xlane.xlu0 %1992
        %v1994 = vsub.f32 %v1982, %v1990
        %v1995 = vsub.f32 %v1985, %v1993
        %v1996 = vmul.f32 %v1994, 1.442695
        %v1997 = vpow.pop %v1996
        %v1998 = vmul.f32 %v1995, 1.442695
        %v1999 = vpow.pop %v1998
        %v2000 = vsel %vm1403, %v1997, 0.0
        %2001 = vadd.xlane.f32.xlu0 %v2000
        %v2002 = vpop.xlane.xlu0 %2001
        %v2003 = vsel %vm1403, %v1999, 0.0
        %2004 = vadd.xlane.f32.xlu0 %v2003
        %v2005 = vpop.xlane.xlu0 %2004
        %v2006 = vpack.c.bf16 %v1999, %v1997
        %2007 = vrot.lane.b32.xlu0 %v1427, 32
        %v2008 = vpop.permute.xlu0 %2007
        %v2011 = vsel %vm1403, %v2006, 0
        %2013 = vmatprep.subr.bf16.mxu0 0
        %2014 = vmatpush1.bf16.msra.mxu0 0
        %2015 = vmatprep.subr.bf16.mxu0 0
        %2016 = vmatpush1.bf16.msra.mxu0 0
        %2017 = vmatprep.subr.bf16.mxu0 0
        %2018 = vmatpush1.bf16.msra.mxu0 0
        %2019 = vmatprep.subr.bf16.mxu0 0
        %2020 = vmatpush1.bf16.msra.mxu0 0
        %2021 = vmatprep.subr.bf16.mxu0 0
        %2022 = vmatpush1.bf16.msra.mxu0 0
        %2023 = vmatprep.subr.bf16.mxu0 0
        %2024 = vmatpush1.bf16.msra.mxu0 0
        %2025 = vmatprep.subr.bf16.mxu0 0
        %2026 = vmatpush1.bf16.msra.mxu0 0
        %2027 = vmatprep.subr.bf16.mxu0 0
        %2028 = vmatpush1.bf16.msra.mxu0 %v2008
        %2029 = vmatprep.subr.bf16.mxu0 0
        %2030 = vmatpush2.bf16.msra.mxu0 0
        %2031 = vmatprep.subr.bf16.mxu0 0
        %2032 = vmatpush2.bf16.msra.mxu0 0
        %2033 = vmatprep.subr.bf16.mxu0 0
        %2034 = vmatpush2.bf16.msra.mxu0 0
        %2035 = vmatprep.subr.bf16.mxu0 0
        %2036 = vmatpush2.bf16.msra.mxu0 0
        %2037 = vmatprep.subr.bf16.mxu0 0
        %2038 = vmatpush2.bf16.msra.mxu0 0
        %2039 = vmatprep.subr.bf16.mxu0 0
        %2040 = vmatpush2.bf16.msra.mxu0 0
        %2041 = vmatprep.subr.bf16.mxu0 0
        %2042 = vmatpush2.bf16.msra.mxu0 0
        %2043 = vmatprep.subr.bf16.mxu0 0
        %2044 = vmatpush2.bf16.msra.mxu0 0
        %2045 = vmatprep.mubr.bf16.mxu0 0
        %2046 = vmatmul.mubr.bf16.gmra.mxu0 %v2011
        %v2047 = vpop.f32.mrf.mxu0
        %v2048 = vadd.f32 0.0, %v2047
        %v2049 = vpop.f32.mrf.mxu0
        %v2050 = vpop.f32.mrf.mxu0
        %v2051 = vadd.f32 0.0, %v2050
        %v2052 = vpop.f32.mrf.mxu0
        %2053 = vdwg.mxu0
        %v2054 = vrcp.pop %v2002
        %v2055 = vrcp.pop %v2005
        %v2056 = vmul.f32 %v2048, %v2054
        %v2057 = vmul.f32 %v2051, %v2055
        %v2058 = vld [vmem:[#allocation9 + $0x198] sm:$0xff]
        %v2059 = vld [vmem:[#allocation9 + $0x1b8] sm:$0xff]
        %v2060 = vld [vmem:[#allocation9 + $0x1d8] sm:$0xff]
        %v2061 = vld [vmem:[#allocation9 + $0x1f8] sm:$0xff]
        %v2062 = vpack.c.bf16 %v2057, %v2056
        %v2067 = vunpack.c.l.b16 %v2058
        %v2068 = vunpack.c.h.b16 %v2058
        %v2069 = vunpack.c.l.b16 %v2059
        %v2070 = vunpack.c.h.b16 %v2059
        %v2071 = vunpack.c.l.b16 %v2060
        %v2072 = vunpack.c.h.b16 %v2060
        %v2073 = vunpack.c.l.b16 %v2061
        %v2074 = vunpack.c.h.b16 %v2061
        %v2075 = vpack.c.b16 %v2069, %v2067
        %v2076 = vpack.c.b16 %v2070, %v2068
        %v2077 = vpack.c.b16 %v2073, %v2071
        %v2078 = vpack.c.b16 %v2074, %v2072
        %v2084 = vsel %vm1355, %v2062, 0
        %2086 = vmatprep.subr.bf16.mxu0 0
        %2087 = vmatpush1.bf16.msra.mxu0 0
        %2088 = vmatprep.subr.bf16.mxu0 0
        %2089 = vmatpush1.bf16.msra.mxu0 0
        %2090 = vmatprep.subr.bf16.mxu0 0
        %2091 = vmatpush1.bf16.msra.mxu0 0
        %2092 = vmatprep.subr.bf16.mxu0 0
        %2093 = vmatpush1.bf16.msra.mxu0 0
        %2094 = vmatprep.subr.bf16.mxu0 0
        %2095 = vmatpush1.bf16.msra.mxu0 0
        %2096 = vmatprep.subr.bf16.mxu0 0
        %2097 = vmatpush1.bf16.msra.mxu0 0
        %2098 = vmatprep.subr.bf16.mxu0 %v2078
        %2099 = vmatpush1.bf16.msra.mxu0 %v2077
        %2100 = vmatprep.subr.bf16.mxu0 %v2076
        %2101 = vmatpush1.bf16.msra.mxu0 %v2075
        %2102 = vmatprep.subr.bf16.mxu0 0
        %2103 = vmatpush2.bf16.msra.mxu0 0
        %2104 = vmatprep.subr.bf16.mxu0 0
        %2105 = vmatpush2.bf16.msra.mxu0 0
        %2106 = vmatprep.subr.bf16.mxu0 0
        %2107 = vmatpush2.bf16.msra.mxu0 0
        %2108 = vmatprep.subr.bf16.mxu0 0
        %2109 = vmatpush2.bf16.msra.mxu0 0
        %2110 = vmatprep.subr.bf16.mxu0 0
        %2111 = vmatpush2.bf16.msra.mxu0 0
        %2112 = vmatprep.subr.bf16.mxu0 0
        %2113 = vmatpush2.bf16.msra.mxu0 0
        %2114 = vmatprep.subr.bf16.mxu0 0
        %2115 = vmatpush2.bf16.msra.mxu0 0
        %2116 = vmatprep.subr.bf16.mxu0 0
        %2117 = vmatpush2.bf16.msra.mxu0 0
        %2118 = vmatprep.mubr.bf16.mxu0 0
        %2119 = vmatmul.mubr.bf16.gmra.mxu0 %v2084
        %v2120 = vpop.f32.mrf.mxu0
        %v2121 = vadd.f32 0.0, %v2120
        %v2122 = vpop.f32.mrf.mxu0
        %v2123 = vadd.f32 0.0, %v2122
        %v2124 = vpop.f32.mrf.mxu0
        %v2125 = vadd.f32 0.0, %v2124
        %v2126 = vpop.f32.mrf.mxu0
        %v2127 = vadd.f32 0.0, %v2126
        %2128 = vdwg.mxu0
        %v2129 = vadd.f32 %v1933, %v2121
        %v2130 = vadd.f32 %v1934, %v2123
        %v2131 = vadd.f32 %v1935, %v2125
        %v2132 = vadd.f32 %v1936, %v2127
        %v2133 = vld [vmem:[#allocation2 + $0x4] sm:$0xf]
        %v2134 = vld [vmem:[#allocation2 + $0x14] sm:$0xf]
        %v2135 = vld [vmem:[#allocation2 + $0xc] sm:$0xf]
        %v2136 = vld [vmem:[#allocation2 + $0x1c] sm:$0xf]
        %v2139 = vunpack.c.l.b16 %v2133
        %v2140 = vunpack.c.l.b16 %v2134
        %v2141 = vpack.c.b16 %v2140, %v2139
        %v2143 = vsel %vm1355, %v1338, 0
        %v2146 = vsel %vm1355, %v2141, 0
        %2148 = vmatprep.subr.bf16.mxu0 0
        %2149 = vmatpush1.bf16.xpose.msra.mxu0 0
        %2150 = vmatprep.subr.bf16.mxu0 0
        %2151 = vmatpush1.bf16.xpose.msra.mxu0 0
        %2152 = vmatprep.subr.bf16.mxu0 0
        %2153 = vmatpush1.bf16.xpose.msra.mxu0 0
        %2154 = vmatprep.subr.bf16.mxu0 0
        %2155 = vmatpush1.bf16.xpose.msra.mxu0 0
        %2156 = vmatprep.subr.bf16.mxu0 0
        %2157 = vmatpush1.bf16.xpose.msra.mxu0 0
        %2158 = vmatprep.subr.bf16.mxu0 0
        %2159 = vmatpush1.bf16.xpose.msra.mxu0 0
        %2160 = vmatprep.subr.bf16.mxu0 0
        %2161 = vmatpush1.bf16.xpose.msra.mxu0 0
        %2162 = vmatprep.subr.bf16.mxu0 0
        %2163 = vmatpush1.bf16.xpose.msra.mxu0 %v2146
        %2164 = vmatprep.subr.bf16.mxu0 0
        %2165 = vmatpush2.bf16.xpose.msra.mxu0 0
        %2166 = vmatprep.subr.bf16.mxu0 0
        %2167 = vmatpush2.bf16.xpose.msra.mxu0 0
        %2168 = vmatprep.subr.bf16.mxu0 0
        %2169 = vmatpush2.bf16.xpose.msra.mxu0 0
        %2170 = vmatprep.subr.bf16.mxu0 0
        %2171 = vmatpush2.bf16.xpose.msra.mxu0 0
        %2172 = vmatprep.subr.bf16.mxu0 0
        %2173 = vmatpush2.bf16.xpose.msra.mxu0 0
        %2174 = vmatprep.subr.bf16.mxu0 0
        %2175 = vmatpush2.bf16.xpose.msra.mxu0 0
        %2176 = vmatprep.subr.bf16.mxu0 0
        %2177 = vmatpush2.bf16.xpose.msra.mxu0 0
        %2178 = vmatprep.subr.bf16.mxu0 0
        %2179 = vmatpush2.bf16.xpose.msra.mxu0 0
        %2180 = vmatprep.mubr.bf16.mxu0 0
        %2181 = vmatmul.mubr.bf16.gmra.mxu0 %v2143
        %v2182 = vpop.f32.mrf.mxu0
        %v2183 = vadd.f32 %v1344, %v2182
        %v2184 = vpop.f32.mrf.mxu0
        %v2185 = vpop.f32.mrf.mxu0
        %v2186 = vadd.f32 %v1344, %v2185
        %v2187 = vpop.f32.mrf.mxu0
        %2188 = vdwg.mxu0
        %v2189 = vsel %vm1403, %v2183, -inf
        %2190 = vmax.xlane.f32.xlu0 %v2189
        %v2191 = vpop.xlane.xlu0 %2190
        %v2192 = vsel %vm1403, %v2186, -inf
        %2193 = vmax.xlane.f32.xlu0 %v2192
        %v2194 = vpop.xlane.xlu0 %2193
        %v2195 = vsub.f32 %v2183, %v2191
        %v2196 = vsub.f32 %v2186, %v2194
        %v2197 = vmul.f32 %v2195, 1.442695
        %v2198 = vpow.pop %v2197
        %v2199 = vmul.f32 %v2196, 1.442695
        %v2200 = vpow.pop %v2199
        %v2201 = vsel %vm1403, %v2198, 0.0
        %2202 = vadd.xlane.f32.xlu0 %v2201
        %v2203 = vpop.xlane.xlu0 %2202
        %v2204 = vsel %vm1403, %v2200, 0.0
        %2205 = vadd.xlane.f32.xlu0 %v2204
        %v2206 = vpop.xlane.xlu0 %2205
        %v2207 = vpack.c.bf16 %v2200, %v2198
        %v2210 = vunpack.c.l.b16 %v2135
        %v2211 = vunpack.c.l.b16 %v2136
        %v2212 = vpack.c.b16 %v2211, %v2210
        %v2215 = vsel %vm1403, %v2207, 0
        %2217 = vmatprep.subr.bf16.mxu0 0
        %2218 = vmatpush1.bf16.msra.mxu0 0
        %2219 = vmatprep.subr.bf16.mxu0 0
        %2220 = vmatpush1.bf16.msra.mxu0 0
        %2221 = vmatprep.subr.bf16.mxu0 0
        %2222 = vmatpush1.bf16.msra.mxu0 0
        %2223 = vmatprep.subr.bf16.mxu0 0
        %2224 = vmatpush1.bf16.msra.mxu0 0
        %2225 = vmatprep.subr.bf16.mxu0 0
        %2226 = vmatpush1.bf16.msra.mxu0 0
        %2227 = vmatprep.subr.bf16.mxu0 0
        %2228 = vmatpush1.bf16.msra.mxu0 0
        %2229 = vmatprep.subr.bf16.mxu0 0
        %2230 = vmatpush1.bf16.msra.mxu0 0
        %2231 = vmatprep.subr.bf16.mxu0 0
        %2232 = vmatpush1.bf16.msra.mxu0 %v2212
        %2233 = vmatprep.subr.bf16.mxu0 0
        %2234 = vmatpush2.bf16.msra.mxu0 0
        %2235 = vmatprep.subr.bf16.mxu0 0
        %2236 = vmatpush2.bf16.msra.mxu0 0
        %2237 = vmatprep.subr.bf16.mxu0 0
        %2238 = vmatpush2.bf16.msra.mxu0 0
        %2239 = vmatprep.subr.bf16.mxu0 0
        %2240 = vmatpush2.bf16.msra.mxu0 0
        %2241 = vmatprep.subr.bf16.mxu0 0
        %2242 = vmatpush2.bf16.msra.mxu0 0
        %2243 = vmatprep.subr.bf16.mxu0 0
        %2244 = vmatpush2.bf16.msra.mxu0 0
        %2245 = vmatprep.subr.bf16.mxu0 0
        %2246 = vmatpush2.bf16.msra.mxu0 0
        %2247 = vmatprep.subr.bf16.mxu0 0
        %2248 = vmatpush2.bf16.msra.mxu0 0
        %2249 = vmatprep.mubr.bf16.mxu0 0
        %2250 = vmatmul.mubr.bf16.gmra.mxu0 %v2215
        %v2251 = vpop.f32.mrf.mxu0
        %v2252 = vadd.f32 0.0, %v2251
        %v2253 = vpop.f32.mrf.mxu0
        %v2254 = vpop.f32.mrf.mxu0
        %v2255 = vadd.f32 0.0, %v2254
        %v2256 = vpop.f32.mrf.mxu0
        %2257 = vdwg.mxu0
        %v2258 = vrcp.pop %v2203
        %v2259 = vrcp.pop %v2206
        %v2260 = vmul.f32 %v2252, %v2258
        %v2261 = vmul.f32 %v2255, %v2259
        %v2262 = vld [vmem:[#allocation9 + $0x218] sm:$0xff]
        %v2263 = vld [vmem:[#allocation9 + $0x238] sm:$0xff]
        %v2264 = vld [vmem:[#allocation9 + $0x258] sm:$0xff]
        %v2265 = vld [vmem:[#allocation9 + $0x278] sm:$0xff]
        %v2266 = vpack.c.bf16 %v2261, %v2260
        %v2271 = vunpack.c.l.b16 %v2262
        %v2272 = vunpack.c.h.b16 %v2262
        %v2273 = vunpack.c.l.b16 %v2263
        %v2274 = vunpack.c.h.b16 %v2263
        %v2275 = vunpack.c.l.b16 %v2264
        %v2276 = vunpack.c.h.b16 %v2264
        %v2277 = vunpack.c.l.b16 %v2265
        %v2278 = vunpack.c.h.b16 %v2265
        %v2279 = vpack.c.b16 %v2273, %v2271
        %v2280 = vpack.c.b16 %v2274, %v2272
        %v2281 = vpack.c.b16 %v2277, %v2275
        %v2282 = vpack.c.b16 %v2278, %v2276
        %v2288 = vsel %vm1355, %v2266, 0
        %2290 = vmatprep.subr.bf16.mxu0 0
        %2291 = vmatpush1.bf16.msra.mxu0 0
        %2292 = vmatprep.subr.bf16.mxu0 0
        %2293 = vmatpush1.bf16.msra.mxu0 0
        %2294 = vmatprep.subr.bf16.mxu0 0
        %2295 = vmatpush1.bf16.msra.mxu0 0
        %2296 = vmatprep.subr.bf16.mxu0 0
        %2297 = vmatpush1.bf16.msra.mxu0 0
        %2298 = vmatprep.subr.bf16.mxu0 0
        %2299 = vmatpush1.bf16.msra.mxu0 0
        %2300 = vmatprep.subr.bf16.mxu0 0
        %2301 = vmatpush1.bf16.msra.mxu0 0
        %2302 = vmatprep.subr.bf16.mxu0 %v2282
        %2303 = vmatpush1.bf16.msra.mxu0 %v2281
        %2304 = vmatprep.subr.bf16.mxu0 %v2280
        %2305 = vmatpush1.bf16.msra.mxu0 %v2279
        %2306 = vmatprep.subr.bf16.mxu0 0
        %2307 = vmatpush2.bf16.msra.mxu0 0
        %2308 = vmatprep.subr.bf16.mxu0 0
        %2309 = vmatpush2.bf16.msra.mxu0 0
        %2310 = vmatprep.subr.bf16.mxu0 0
        %2311 = vmatpush2.bf16.msra.mxu0 0
        %2312 = vmatprep.subr.bf16.mxu0 0
        %2313 = vmatpush2.bf16.msra.mxu0 0
        %2314 = vmatprep.subr.bf16.mxu0 0
        %2315 = vmatpush2.bf16.msra.mxu0 0
        %2316 = vmatprep.subr.bf16.mxu0 0
        %2317 = vmatpush2.bf16.msra.mxu0 0
        %2318 = vmatprep.subr.bf16.mxu0 0
        %2319 = vmatpush2.bf16.msra.mxu0 0
        %2320 = vmatprep.subr.bf16.mxu0 0
        %2321 = vmatpush2.bf16.msra.mxu0 0
        %2322 = vmatprep.mubr.bf16.mxu0 0
        %2323 = vmatmul.mubr.bf16.gmra.mxu0 %v2288
        %v2324 = vpop.f32.mrf.mxu0
        %v2325 = vadd.f32 0.0, %v2324
        %v2326 = vpop.f32.mrf.mxu0
        %v2327 = vadd.f32 0.0, %v2326
        %v2328 = vpop.f32.mrf.mxu0
        %v2329 = vadd.f32 0.0, %v2328
        %v2330 = vpop.f32.mrf.mxu0
        %v2331 = vadd.f32 0.0, %v2330
        %2332 = vdwg.mxu0
        %v2333 = vadd.f32 %v2129, %v2325
        %v2334 = vadd.f32 %v2130, %v2327
        %v2335 = vadd.f32 %v2131, %v2329
        %v2336 = vadd.f32 %v2132, %v2331
        %2338 = vrot.lane.b32.xlu0 %v1338, 96
        %v2339 = vpop.permute.xlu0 %2338
        %2340 = vrot.lane.b32.xlu0 %v2141, 96
        %v2341 = vpop.permute.xlu0 %2340
        %v2343 = vsel %vm1355, %v2339, 0
        %v2346 = vsel %vm1355, %v2341, 0
        %2348 = vmatprep.subr.bf16.mxu0 0
        %2349 = vmatpush1.bf16.xpose.msra.mxu0 0
        %2350 = vmatprep.subr.bf16.mxu0 0
        %2351 = vmatpush1.bf16.xpose.msra.mxu0 0
        %2352 = vmatprep.subr.bf16.mxu0 0
        %2353 = vmatpush1.bf16.xpose.msra.mxu0 0
        %2354 = vmatprep.subr.bf16.mxu0 0
        %2355 = vmatpush1.bf16.xpose.msra.mxu0 0
        %2356 = vmatprep.subr.bf16.mxu0 0
        %2357 = vmatpush1.bf16.xpose.msra.mxu0 0
        %2358 = vmatprep.subr.bf16.mxu0 0
        %2359 = vmatpush1.bf16.xpose.msra.mxu0 0
        %2360 = vmatprep.subr.bf16.mxu0 0
        %2361 = vmatpush1.bf16.xpose.msra.mxu0 0
        %2362 = vmatprep.subr.bf16.mxu0 0
        %2363 = vmatpush1.bf16.xpose.msra.mxu0 %v2346
        %2364 = vmatprep.subr.bf16.mxu0 0
        %2365 = vmatpush2.bf16.xpose.msra.mxu0 0
        %2366 = vmatprep.subr.bf16.mxu0 0
        %2367 = vmatpush2.bf16.xpose.msra.mxu0 0
        %2368 = vmatprep.subr.bf16.mxu0 0
        %2369 = vmatpush2.bf16.xpose.msra.mxu0 0
        %2370 = vmatprep.subr.bf16.mxu0 0
        %2371 = vmatpush2.bf16.xpose.msra.mxu0 0
        %2372 = vmatprep.subr.bf16.mxu0 0
        %2373 = vmatpush2.bf16.xpose.msra.mxu0 0
        %2374 = vmatprep.subr.bf16.mxu0 0
        %2375 = vmatpush2.bf16.xpose.msra.mxu0 0
        %2376 = vmatprep.subr.bf16.mxu0 0
        %2377 = vmatpush2.bf16.xpose.msra.mxu0 0
        %2378 = vmatprep.subr.bf16.mxu0 0
        %2379 = vmatpush2.bf16.xpose.msra.mxu0 0
        %2380 = vmatprep.mubr.bf16.mxu0 0
        %2381 = vmatmul.mubr.bf16.gmra.mxu0 %v2343
        %v2382 = vpop.f32.mrf.mxu0
        %v2383 = vadd.f32 %v1344, %v2382
        %v2384 = vpop.f32.mrf.mxu0
        %v2385 = vpop.f32.mrf.mxu0
        %v2386 = vadd.f32 %v1344, %v2385
        %v2387 = vpop.f32.mrf.mxu0
        %2388 = vdwg.mxu0
        %v2389 = vsel %vm1403, %v2383, -inf
        %2390 = vmax.xlane.f32.xlu0 %v2389
        %v2391 = vpop.xlane.xlu0 %2390
        %v2392 = vsel %vm1403, %v2386, -inf
        %2393 = vmax.xlane.f32.xlu0 %v2392
        %v2394 = vpop.xlane.xlu0 %2393
        %v2395 = vsub.f32 %v2383, %v2391
        %v2396 = vsub.f32 %v2386, %v2394
        %v2397 = vmul.f32 %v2395, 1.442695
        %v2398 = vpow.pop %v2397
        %v2399 = vmul.f32 %v2396, 1.442695
        %v2400 = vpow.pop %v2399
        %v2401 = vsel %vm1403, %v2398, 0.0
        %2402 = vadd.xlane.f32.xlu0 %v2401
        %v2403 = vpop.xlane.xlu0 %2402
        %v2404 = vsel %vm1403, %v2400, 0.0
        %2405 = vadd.xlane.f32.xlu0 %v2404
        %v2406 = vpop.xlane.xlu0 %2405
        %v2407 = vpack.c.bf16 %v2400, %v2398
        %2408 = vrot.lane.b32.xlu0 %v2212, 96
        %v2409 = vpop.permute.xlu0 %2408
        %v2412 = vsel %vm1403, %v2407, 0
        %2414 = vmatprep.subr.bf16.mxu0 0
        %2415 = vmatpush1.bf16.msra.mxu0 0
        %2416 = vmatprep.subr.bf16.mxu0 0
        %2417 = vmatpush1.bf16.msra.mxu0 0
        %2418 = vmatprep.subr.bf16.mxu0 0
        %2419 = vmatpush1.bf16.msra.mxu0 0
        %2420 = vmatprep.subr.bf16.mxu0 0
        %2421 = vmatpush1.bf16.msra.mxu0 0
        %2422 = vmatprep.subr.bf16.mxu0 0
        %2423 = vmatpush1.bf16.msra.mxu0 0
        %2424 = vmatprep.subr.bf16.mxu0 0
        %2425 = vmatpush1.bf16.msra.mxu0 0
        %2426 = vmatprep.subr.bf16.mxu0 0
        %2427 = vmatpush1.bf16.msra.mxu0 0
        %2428 = vmatprep.subr.bf16.mxu0 0
        %2429 = vmatpush1.bf16.msra.mxu0 %v2409
        %2430 = vmatprep.subr.bf16.mxu0 0
        %2431 = vmatpush2.bf16.msra.mxu0 0
        %2432 = vmatprep.subr.bf16.mxu0 0
        %2433 = vmatpush2.bf16.msra.mxu0 0
        %2434 = vmatprep.subr.bf16.mxu0 0
        %2435 = vmatpush2.bf16.msra.mxu0 0
        %2436 = vmatprep.subr.bf16.mxu0 0
        %2437 = vmatpush2.bf16.msra.mxu0 0
        %2438 = vmatprep.subr.bf16.mxu0 0
        %2439 = vmatpush2.bf16.msra.mxu0 0
        %2440 = vmatprep.subr.bf16.mxu0 0
        %2441 = vmatpush2.bf16.msra.mxu0 0
        %2442 = vmatprep.subr.bf16.mxu0 0
        %2443 = vmatpush2.bf16.msra.mxu0 0
        %2444 = vmatprep.subr.bf16.mxu0 0
        %2445 = vmatpush2.bf16.msra.mxu0 0
        %2446 = vmatprep.mubr.bf16.mxu0 0
        %2447 = vmatmul.mubr.bf16.gmra.mxu0 %v2412
        %v2448 = vpop.f32.mrf.mxu0
        %v2449 = vadd.f32 0.0, %v2448
        %v2450 = vpop.f32.mrf.mxu0
        %v2451 = vpop.f32.mrf.mxu0
        %v2452 = vadd.f32 0.0, %v2451
        %v2453 = vpop.f32.mrf.mxu0
        %2454 = vdwg.mxu0
        %v2455 = vrcp.pop %v2403
        %v2456 = vrcp.pop %v2406
        %v2457 = vmul.f32 %v2449, %v2455
        %v2458 = vmul.f32 %v2452, %v2456
        %v2459 = vld [vmem:[#allocation9 + $0x298] sm:$0xff]
        %v2460 = vld [vmem:[#allocation9 + $0x2b8] sm:$0xff]
        %v2461 = vld [vmem:[#allocation9 + $0x2d8] sm:$0xff]
        %v2462 = vld [vmem:[#allocation9 + $0x2f8] sm:$0xff]
        %v2463 = vpack.c.bf16 %v2458, %v2457
        %v2468 = vunpack.c.l.b16 %v2459
        %v2469 = vunpack.c.h.b16 %v2459
        %v2470 = vunpack.c.l.b16 %v2460
        %v2471 = vunpack.c.h.b16 %v2460
        %v2472 = vunpack.c.l.b16 %v2461
        %v2473 = vunpack.c.h.b16 %v2461
        %v2474 = vunpack.c.l.b16 %v2462
        %v2475 = vunpack.c.h.b16 %v2462
        %v2476 = vpack.c.b16 %v2470, %v2468
        %v2477 = vpack.c.b16 %v2471, %v2469
        %v2478 = vpack.c.b16 %v2474, %v2472
        %v2479 = vpack.c.b16 %v2475, %v2473
        %v2485 = vsel %vm1355, %v2463, 0
        %2487 = vmatprep.subr.bf16.mxu0 0
        %2488 = vmatpush1.bf16.msra.mxu0 0
        %2489 = vmatprep.subr.bf16.mxu0 0
        %2490 = vmatpush1.bf16.msra.mxu0 0
        %2491 = vmatprep.subr.bf16.mxu0 0
        %2492 = vmatpush1.bf16.msra.mxu0 0
        %2493 = vmatprep.subr.bf16.mxu0 0
        %2494 = vmatpush1.bf16.msra.mxu0 0
        %2495 = vmatprep.subr.bf16.mxu0 0
        %2496 = vmatpush1.bf16.msra.mxu0 0
        %2497 = vmatprep.subr.bf16.mxu0 0
        %2498 = vmatpush1.bf16.msra.mxu0 0
        %2499 = vmatprep.subr.bf16.mxu0 %v2479
        %2500 = vmatpush1.bf16.msra.mxu0 %v2478
        %2501 = vmatprep.subr.bf16.mxu0 %v2477
        %2502 = vmatpush1.bf16.msra.mxu0 %v2476
        %2503 = vmatprep.subr.bf16.mxu0 0
        %2504 = vmatpush2.bf16.msra.mxu0 0
        %2505 = vmatprep.subr.bf16.mxu0 0
        %2506 = vmatpush2.bf16.msra.mxu0 0
        %2507 = vmatprep.subr.bf16.mxu0 0
        %2508 = vmatpush2.bf16.msra.mxu0 0
        %2509 = vmatprep.subr.bf16.mxu0 0
        %2510 = vmatpush2.bf16.msra.mxu0 0
        %2511 = vmatprep.subr.bf16.mxu0 0
        %2512 = vmatpush2.bf16.msra.mxu0 0
        %2513 = vmatprep.subr.bf16.mxu0 0
        %2514 = vmatpush2.bf16.msra.mxu0 0
        %2515 = vmatprep.subr.bf16.mxu0 0
        %2516 = vmatpush2.bf16.msra.mxu0 0
        %2517 = vmatprep.subr.bf16.mxu0 0
        %2518 = vmatpush2.bf16.msra.mxu0 0
        %2519 = vmatprep.mubr.bf16.mxu0 0
        %2520 = vmatmul.mubr.bf16.gmra.mxu0 %v2485
        %v2521 = vpop.f32.mrf.mxu0
        %v2522 = vadd.f32 0.0, %v2521
        %v2523 = vpop.f32.mrf.mxu0
        %v2524 = vadd.f32 0.0, %v2523
        %v2525 = vpop.f32.mrf.mxu0
        %v2526 = vadd.f32 0.0, %v2525
        %v2527 = vpop.f32.mrf.mxu0
        %v2528 = vadd.f32 0.0, %v2527
        %2529 = vdwg.mxu0
        %v2530 = vadd.f32 %v2333, %v2522
        %v2531 = vadd.f32 %v2334, %v2524
        %v2532 = vadd.f32 %v2335, %v2526
        %v2533 = vadd.f32 %v2336, %v2528
        %2534 = vrot.lane.b32.xlu0 %v1338, 64
        %v2535 = vpop.permute.xlu0 %2534
        %2536 = vrot.lane.b32.xlu0 %v2141, 64
        %v2537 = vpop.permute.xlu0 %2536
        %v2539 = vsel %vm1355, %v2535, 0
        %v2542 = vsel %vm1355, %v2537, 0
        %2544 = vmatprep.subr.bf16.mxu0 0
        %2545 = vmatpush1.bf16.xpose.msra.mxu0 0
        %2546 = vmatprep.subr.bf16.mxu0 0
        %2547 = vmatpush1.bf16.xpose.msra.mxu0 0
        %2548 = vmatprep.subr.bf16.mxu0 0
        %2549 = vmatpush1.bf16.xpose.msra.mxu0 0
        %2550 = vmatprep.subr.bf16.mxu0 0
        %2551 = vmatpush1.bf16.xpose.msra.mxu0 0
        %2552 = vmatprep.subr.bf16.mxu0 0
        %2553 = vmatpush1.bf16.xpose.msra.mxu0 0
        %2554 = vmatprep.subr.bf16.mxu0 0
        %2555 = vmatpush1.bf16.xpose.msra.mxu0 0
        %2556 = vmatprep.subr.bf16.mxu0 0
        %2557 = vmatpush1.bf16.xpose.msra.mxu0 0
        %2558 = vmatprep.subr.bf16.mxu0 0
        %2559 = vmatpush1.bf16.xpose.msra.mxu0 %v2542
        %2560 = vmatprep.subr.bf16.mxu0 0
        %2561 = vmatpush2.bf16.xpose.msra.mxu0 0
        %2562 = vmatprep.subr.bf16.mxu0 0
        %2563 = vmatpush2.bf16.xpose.msra.mxu0 0
        %2564 = vmatprep.subr.bf16.mxu0 0
        %2565 = vmatpush2.bf16.xpose.msra.mxu0 0
        %2566 = vmatprep.subr.bf16.mxu0 0
        %2567 = vmatpush2.bf16.xpose.msra.mxu0 0
        %2568 = vmatprep.subr.bf16.mxu0 0
        %2569 = vmatpush2.bf16.xpose.msra.mxu0 0
        %2570 = vmatprep.subr.bf16.mxu0 0
        %2571 = vmatpush2.bf16.xpose.msra.mxu0 0
        %2572 = vmatprep.subr.bf16.mxu0 0
        %2573 = vmatpush2.bf16.xpose.msra.mxu0 0
        %2574 = vmatprep.subr.bf16.mxu0 0
        %2575 = vmatpush2.bf16.xpose.msra.mxu0 0
        %2576 = vmatprep.mubr.bf16.mxu0 0
        %2577 = vmatmul.mubr.bf16.gmra.mxu0 %v2539
        %v2578 = vpop.f32.mrf.mxu0
        %v2579 = vadd.f32 %v1344, %v2578
        %v2580 = vpop.f32.mrf.mxu0
        %v2581 = vpop.f32.mrf.mxu0
        %v2582 = vadd.f32 %v1344, %v2581
        %v2583 = vpop.f32.mrf.mxu0
        %2584 = vdwg.mxu0
        %v2585 = vsel %vm1403, %v2579, -inf
        %2586 = vmax.xlane.f32.xlu0 %v2585
        %v2587 = vpop.xlane.xlu0 %2586
        %v2588 = vsel %vm1403, %v2582, -inf
        %2589 = vmax.xlane.f32.xlu0 %v2588
        %v2590 = vpop.xlane.xlu0 %2589
        %v2591 = vsub.f32 %v2579, %v2587
        %v2592 = vsub.f32 %v2582, %v2590
        %v2593 = vmul.f32 %v2591, 1.442695
        %v2594 = vpow.pop %v2593
        %v2595 = vmul.f32 %v2592, 1.442695
        %v2596 = vpow.pop %v2595
        %v2597 = vsel %vm1403, %v2594, 0.0
        %2598 = vadd.xlane.f32.xlu0 %v2597
        %v2599 = vpop.xlane.xlu0 %2598
        %v2600 = vsel %vm1403, %v2596, 0.0
        %2601 = vadd.xlane.f32.xlu0 %v2600
        %v2602 = vpop.xlane.xlu0 %2601
        %v2603 = vpack.c.bf16 %v2596, %v2594
        %2604 = vrot.lane.b32.xlu0 %v2212, 64
        %v2605 = vpop.permute.xlu0 %2604
        %v2608 = vsel %vm1403, %v2603, 0
        %2610 = vmatprep.subr.bf16.mxu0 0
        %2611 = vmatpush1.bf16.msra.mxu0 0
        %2612 = vmatprep.subr.bf16.mxu0 0
        %2613 = vmatpush1.bf16.msra.mxu0 0
        %2614 = vmatprep.subr.bf16.mxu0 0
        %2615 = vmatpush1.bf16.msra.mxu0 0
        %2616 = vmatprep.subr.bf16.mxu0 0
        %2617 = vmatpush1.bf16.msra.mxu0 0
        %2618 = vmatprep.subr.bf16.mxu0 0
        %2619 = vmatpush1.bf16.msra.mxu0 0
        %2620 = vmatprep.subr.bf16.mxu0 0
        %2621 = vmatpush1.bf16.msra.mxu0 0
        %2622 = vmatprep.subr.bf16.mxu0 0
        %2623 = vmatpush1.bf16.msra.mxu0 0
        %2624 = vmatprep.subr.bf16.mxu0 0
        %2625 = vmatpush1.bf16.msra.mxu0 %v2605
        %2626 = vmatprep.subr.bf16.mxu0 0
        %2627 = vmatpush2.bf16.msra.mxu0 0
        %2628 = vmatprep.subr.bf16.mxu0 0
        %2629 = vmatpush2.bf16.msra.mxu0 0
        %2630 = vmatprep.subr.bf16.mxu0 0
        %2631 = vmatpush2.bf16.msra.mxu0 0
        %2632 = vmatprep.subr.bf16.mxu0 0
        %2633 = vmatpush2.bf16.msra.mxu0 0
        %2634 = vmatprep.subr.bf16.mxu0 0
        %2635 = vmatpush2.bf16.msra.mxu0 0
        %2636 = vmatprep.subr.bf16.mxu0 0
        %2637 = vmatpush2.bf16.msra.mxu0 0
        %2638 = vmatprep.subr.bf16.mxu0 0
        %2639 = vmatpush2.bf16.msra.mxu0 0
        %2640 = vmatprep.subr.bf16.mxu0 0
        %2641 = vmatpush2.bf16.msra.mxu0 0
        %2642 = vmatprep.mubr.bf16.mxu0 0
        %2643 = vmatmul.mubr.bf16.gmra.mxu0 %v2608
        %v2644 = vpop.f32.mrf.mxu0
        %v2645 = vadd.f32 0.0, %v2644
        %v2646 = vpop.f32.mrf.mxu0
        %v2647 = vpop.f32.mrf.mxu0
        %v2648 = vadd.f32 0.0, %v2647
        %v2649 = vpop.f32.mrf.mxu0
        %2650 = vdwg.mxu0
        %v2651 = vrcp.pop %v2599
        %v2652 = vrcp.pop %v2602
        %v2653 = vmul.f32 %v2645, %v2651
        %v2654 = vmul.f32 %v2648, %v2652
        %v2655 = vld [vmem:[#allocation9 + $0x318] sm:$0xff]
        %v2656 = vld [vmem:[#allocation9 + $0x338] sm:$0xff]
        %v2657 = vld [vmem:[#allocation9 + $0x358] sm:$0xff]
        %v2658 = vld [vmem:[#allocation9 + $0x378] sm:$0xff]
        %v2659 = vpack.c.bf16 %v2654, %v2653
        %v2664 = vunpack.c.l.b16 %v2655
        %v2665 = vunpack.c.h.b16 %v2655
        %v2666 = vunpack.c.l.b16 %v2656
        %v2667 = vunpack.c.h.b16 %v2656
        %v2668 = vunpack.c.l.b16 %v2657
        %v2669 = vunpack.c.h.b16 %v2657
        %v2670 = vunpack.c.l.b16 %v2658
        %v2671 = vunpack.c.h.b16 %v2658
        %v2672 = vpack.c.b16 %v2666, %v2664
        %v2673 = vpack.c.b16 %v2667, %v2665
        %v2674 = vpack.c.b16 %v2670, %v2668
        %v2675 = vpack.c.b16 %v2671, %v2669
        %v2681 = vsel %vm1355, %v2659, 0
        %2683 = vmatprep.subr.bf16.mxu0 0
        %2684 = vmatpush1.bf16.msra.mxu0 0
        %2685 = vmatprep.subr.bf16.mxu0 0
        %2686 = vmatpush1.bf16.msra.mxu0 0
        %2687 = vmatprep.subr.bf16.mxu0 0
        %2688 = vmatpush1.bf16.msra.mxu0 0
        %2689 = vmatprep.subr.bf16.mxu0 0
        %2690 = vmatpush1.bf16.msra.mxu0 0
        %2691 = vmatprep.subr.bf16.mxu0 0
        %2692 = vmatpush1.bf16.msra.mxu0 0
        %2693 = vmatprep.subr.bf16.mxu0 0
        %2694 = vmatpush1.bf16.msra.mxu0 0
        %2695 = vmatprep.subr.bf16.mxu0 %v2675
        %2696 = vmatpush1.bf16.msra.mxu0 %v2674
        %2697 = vmatprep.subr.bf16.mxu0 %v2673
        %2698 = vmatpush1.bf16.msra.mxu0 %v2672
        %2699 = vmatprep.subr.bf16.mxu0 0
        %2700 = vmatpush2.bf16.msra.mxu0 0
        %2701 = vmatprep.subr.bf16.mxu0 0
        %2702 = vmatpush2.bf16.msra.mxu0 0
        %2703 = vmatprep.subr.bf16.mxu0 0
        %2704 = vmatpush2.bf16.msra.mxu0 0
        %2705 = vmatprep.subr.bf16.mxu0 0
        %2706 = vmatpush2.bf16.msra.mxu0 0
        %2707 = vmatprep.subr.bf16.mxu0 0
        %2708 = vmatpush2.bf16.msra.mxu0 0
        %2709 = vmatprep.subr.bf16.mxu0 0
        %2710 = vmatpush2.bf16.msra.mxu0 0
        %2711 = vmatprep.subr.bf16.mxu0 0
        %2712 = vmatpush2.bf16.msra.mxu0 0
        %2713 = vmatprep.subr.bf16.mxu0 0
        %2714 = vmatpush2.bf16.msra.mxu0 0
        %2715 = vmatprep.mubr.bf16.mxu0 0
        %2716 = vmatmul.mubr.bf16.gmra.mxu0 %v2681
        %v2717 = vpop.f32.mrf.mxu0
        %v2718 = vadd.f32 0.0, %v2717
        %v2719 = vpop.f32.mrf.mxu0
        %v2720 = vadd.f32 0.0, %v2719
        %v2721 = vpop.f32.mrf.mxu0
        %v2722 = vadd.f32 0.0, %v2721
        %v2723 = vpop.f32.mrf.mxu0
        %v2724 = vadd.f32 0.0, %v2723
        %2725 = vdwg.mxu0
        %v2726 = vadd.f32 %v2530, %v2718
        %v2727 = vadd.f32 %v2531, %v2720
        %v2728 = vadd.f32 %v2532, %v2722
        %v2729 = vadd.f32 %v2533, %v2724
        %2730 = vrot.lane.b32.xlu0 %v1338, 32
        %v2731 = vpop.permute.xlu0 %2730
        %2732 = vrot.lane.b32.xlu0 %v2141, 32
        %v2733 = vpop.permute.xlu0 %2732
        %v2735 = vsel %vm1355, %v2731, 0
        %v2738 = vsel %vm1355, %v2733, 0
        %2740 = vmatprep.subr.bf16.mxu0 0
        %2741 = vmatpush1.bf16.xpose.msra.mxu0 0
        %2742 = vmatprep.subr.bf16.mxu0 0
        %2743 = vmatpush1.bf16.xpose.msra.mxu0 0
        %2744 = vmatprep.subr.bf16.mxu0 0
        %2745 = vmatpush1.bf16.xpose.msra.mxu0 0
        %2746 = vmatprep.subr.bf16.mxu0 0
        %2747 = vmatpush1.bf16.xpose.msra.mxu0 0
        %2748 = vmatprep.subr.bf16.mxu0 0
        %2749 = vmatpush1.bf16.xpose.msra.mxu0 0
        %2750 = vmatprep.subr.bf16.mxu0 0
        %2751 = vmatpush1.bf16.xpose.msra.mxu0 0
        %2752 = vmatprep.subr.bf16.mxu0 0
        %2753 = vmatpush1.bf16.xpose.msra.mxu0 0
        %2754 = vmatprep.subr.bf16.mxu0 0
        %2755 = vmatpush1.bf16.xpose.msra.mxu0 %v2738
        %2756 = vmatprep.subr.bf16.mxu0 0
        %2757 = vmatpush2.bf16.xpose.msra.mxu0 0
        %2758 = vmatprep.subr.bf16.mxu0 0
        %2759 = vmatpush2.bf16.xpose.msra.mxu0 0
        %2760 = vmatprep.subr.bf16.mxu0 0
        %2761 = vmatpush2.bf16.xpose.msra.mxu0 0
        %2762 = vmatprep.subr.bf16.mxu0 0
        %2763 = vmatpush2.bf16.xpose.msra.mxu0 0
        %2764 = vmatprep.subr.bf16.mxu0 0
        %2765 = vmatpush2.bf16.xpose.msra.mxu0 0
        %2766 = vmatprep.subr.bf16.mxu0 0
        %2767 = vmatpush2.bf16.xpose.msra.mxu0 0
        %2768 = vmatprep.subr.bf16.mxu0 0
        %2769 = vmatpush2.bf16.xpose.msra.mxu0 0
        %2770 = vmatprep.subr.bf16.mxu0 0
        %2771 = vmatpush2.bf16.xpose.msra.mxu0 0
        %2772 = vmatprep.mubr.bf16.mxu0 0
        %2773 = vmatmul.mubr.bf16.gmra.mxu0 %v2735
        %v2774 = vpop.f32.mrf.mxu0
        %v2775 = vadd.f32 %v1344, %v2774
        %v2776 = vpop.f32.mrf.mxu0
        %v2777 = vpop.f32.mrf.mxu0
        %v2778 = vadd.f32 %v1344, %v2777
        %v2779 = vpop.f32.mrf.mxu0
        %2780 = vdwg.mxu0
        %v2781 = vsel %vm1403, %v2775, -inf
        %2782 = vmax.xlane.f32.xlu0 %v2781
        %v2783 = vpop.xlane.xlu0 %2782
        %v2784 = vsel %vm1403, %v2778, -inf
        %2785 = vmax.xlane.f32.xlu0 %v2784
        %v2786 = vpop.xlane.xlu0 %2785
        %v2787 = vsub.f32 %v2775, %v2783
        %v2788 = vsub.f32 %v2778, %v2786
        %v2789 = vmul.f32 %v2787, 1.442695
        %v2790 = vpow.pop %v2789
        %v2791 = vmul.f32 %v2788, 1.442695
        %v2792 = vpow.pop %v2791
        %v2793 = vsel %vm1403, %v2790, 0.0
        %2794 = vadd.xlane.f32.xlu0 %v2793
        %v2795 = vpop.xlane.xlu0 %2794
        %v2796 = vsel %vm1403, %v2792, 0.0
        %2797 = vadd.xlane.f32.xlu0 %v2796
        %v2798 = vpop.xlane.xlu0 %2797
        %v2799 = vpack.c.bf16 %v2792, %v2790
        %2800 = vrot.lane.b32.xlu0 %v2212, 32
        %v2801 = vpop.permute.xlu0 %2800
        %v2804 = vsel %vm1403, %v2799, 0
        %2806 = vmatprep.subr.bf16.mxu0 0
        %2807 = vmatpush1.bf16.msra.mxu0 0
        %2808 = vmatprep.subr.bf16.mxu0 0
        %2809 = vmatpush1.bf16.msra.mxu0 0
        %2810 = vmatprep.subr.bf16.mxu0 0
        %2811 = vmatpush1.bf16.msra.mxu0 0
        %2812 = vmatprep.subr.bf16.mxu0 0
        %2813 = vmatpush1.bf16.msra.mxu0 0
        %2814 = vmatprep.subr.bf16.mxu0 0
        %2815 = vmatpush1.bf16.msra.mxu0 0
        %2816 = vmatprep.subr.bf16.mxu0 0
        %2817 = vmatpush1.bf16.msra.mxu0 0
        %2818 = vmatprep.subr.bf16.mxu0 0
        %2819 = vmatpush1.bf16.msra.mxu0 0
        %2820 = vmatprep.subr.bf16.mxu0 0
        %2821 = vmatpush1.bf16.msra.mxu0 %v2801
        %2822 = vmatprep.subr.bf16.mxu0 0
        %2823 = vmatpush2.bf16.msra.mxu0 0
        %2824 = vmatprep.subr.bf16.mxu0 0
        %2825 = vmatpush2.bf16.msra.mxu0 0
        %2826 = vmatprep.subr.bf16.mxu0 0
        %2827 = vmatpush2.bf16.msra.mxu0 0
        %2828 = vmatprep.subr.bf16.mxu0 0
        %2829 = vmatpush2.bf16.msra.mxu0 0
        %2830 = vmatprep.subr.bf16.mxu0 0
        %2831 = vmatpush2.bf16.msra.mxu0 0
        %2832 = vmatprep.subr.bf16.mxu0 0
        %2833 = vmatpush2.bf16.msra.mxu0 0
        %2834 = vmatprep.subr.bf16.mxu0 0
        %2835 = vmatpush2.bf16.msra.mxu0 0
        %2836 = vmatprep.subr.bf16.mxu0 0
        %2837 = vmatpush2.bf16.msra.mxu0 0
        %2838 = vmatprep.mubr.bf16.mxu0 0
        %2839 = vmatmul.mubr.bf16.gmra.mxu0 %v2804
        %v2840 = vpop.f32.mrf.mxu0
        %v2841 = vadd.f32 0.0, %v2840
        %v2842 = vpop.f32.mrf.mxu0
        %v2843 = vpop.f32.mrf.mxu0
        %v2844 = vadd.f32 0.0, %v2843
        %v2845 = vpop.f32.mrf.mxu0
        %2846 = vdwg.mxu0
        %v2847 = vrcp.pop %v2795
        %v2848 = vrcp.pop %v2798
        %v2849 = vmul.f32 %v2841, %v2847
        %v2850 = vmul.f32 %v2844, %v2848
        %v2851 = vld [vmem:[#allocation9 + $0x398] sm:$0xff]
        %v2852 = vld [vmem:[#allocation9 + $0x3b8] sm:$0xff]
        %v2853 = vld [vmem:[#allocation9 + $0x3d8] sm:$0xff]
        %v2854 = vld [vmem:[#allocation9 + $0x3f8] sm:$0xff]
        %v2855 = vpack.c.bf16 %v2850, %v2849
        %v2860 = vunpack.c.l.b16 %v2851
        %v2861 = vunpack.c.h.b16 %v2851
        %v2862 = vunpack.c.l.b16 %v2852
        %v2863 = vunpack.c.h.b16 %v2852
        %v2864 = vunpack.c.l.b16 %v2853
        %v2865 = vunpack.c.h.b16 %v2853
        %v2866 = vunpack.c.l.b16 %v2854
        %v2867 = vunpack.c.h.b16 %v2854
        %v2868 = vpack.c.b16 %v2862, %v2860
        %v2869 = vpack.c.b16 %v2863, %v2861
        %v2870 = vpack.c.b16 %v2866, %v2864
        %v2871 = vpack.c.b16 %v2867, %v2865
        %v2877 = vsel %vm1355, %v2855, 0
        %2879 = vmatprep.subr.bf16.mxu0 0
        %2880 = vmatpush1.bf16.msra.mxu0 0
        %2881 = vmatprep.subr.bf16.mxu0 0
        %2882 = vmatpush1.bf16.msra.mxu0 0
        %2883 = vmatprep.subr.bf16.mxu0 0
        %2884 = vmatpush1.bf16.msra.mxu0 0
        %2885 = vmatprep.subr.bf16.mxu0 0
        %2886 = vmatpush1.bf16.msra.mxu0 0
        %2887 = vmatprep.subr.bf16.mxu0 0
        %2888 = vmatpush1.bf16.msra.mxu0 0
        %2889 = vmatprep.subr.bf16.mxu0 0
        %2890 = vmatpush1.bf16.msra.mxu0 0
        %2891 = vmatprep.subr.bf16.mxu0 %v2871
        %2892 = vmatpush1.bf16.msra.mxu0 %v2870
        %2893 = vmatprep.subr.bf16.mxu0 %v2869
        %2894 = vmatpush1.bf16.msra.mxu0 %v2868
        %2895 = vmatprep.subr.bf16.mxu0 0
        %2896 = vmatpush2.bf16.msra.mxu0 0
        %2897 = vmatprep.subr.bf16.mxu0 0
        %2898 = vmatpush2.bf16.msra.mxu0 0
        %2899 = vmatprep.subr.bf16.mxu0 0
        %2900 = vmatpush2.bf16.msra.mxu0 0
        %2901 = vmatprep.subr.bf16.mxu0 0
        %2902 = vmatpush2.bf16.msra.mxu0 0
        %2903 = vmatprep.subr.bf16.mxu0 0
        %2904 = vmatpush2.bf16.msra.mxu0 0
        %2905 = vmatprep.subr.bf16.mxu0 0
        %2906 = vmatpush2.bf16.msra.mxu0 0
        %2907 = vmatprep.subr.bf16.mxu0 0
        %2908 = vmatpush2.bf16.msra.mxu0 0
        %2909 = vmatprep.subr.bf16.mxu0 0
        %2910 = vmatpush2.bf16.msra.mxu0 0
        %2911 = vmatprep.mubr.bf16.mxu0 0
        %2912 = vmatmul.mubr.bf16.gmra.mxu0 %v2877
        %v2913 = vpop.f32.mrf.mxu0
        %v2914 = vadd.f32 0.0, %v2913
        %v2915 = vpop.f32.mrf.mxu0
        %v2916 = vadd.f32 0.0, %v2915
        %v2917 = vpop.f32.mrf.mxu0
        %v2918 = vadd.f32 0.0, %v2917
        %v2919 = vpop.f32.mrf.mxu0
        %v2920 = vadd.f32 0.0, %v2919
        %2921 = vdwg.mxu0
        %v2922 = vadd.f32 %v2726, %v2914
        %v2923 = vadd.f32 %v2727, %v2916
        %v2924 = vadd.f32 %v2728, %v2918
        %v2925 = vadd.f32 %v2729, %v2920
        %v2926 = vld [vmem:[#allocation11 + $0x6] sm:$0x3]
        %v2928 = vlaneseq
        %v2929 = vshrl.u32 %v2928, 7
        %v2930 = vsub.s32 0, %v2929
        %v2931 = vrot.slane %v2926, %v2930
        %v2932 = vlaneseq
        %v2933 = vshrl.u32 %v2932, 7
        %v2934 = vsub.s32 1, %v2933
        %v2935 = vrot.slane %v2926, %v2934
        %v2938 = vadd.f32 %v2922, %v2931
        %v2939 = vadd.f32 %v2923, %v2935
        %v2940 = vadd.f32 %v2924, %v2931
        %v2941 = vadd.f32 %v2925, %v2935
        %v2942 = vadd.f32 %v1080, %v2938
        %v2943 = vadd.f32 %v1081, %v2939
        %v2944 = vadd.f32 %v1082, %v2940
        %v2945 = vadd.f32 %v1083, %v2941
        %v2946 = vld [vmem:[%s9] ss:$8 sm:$0x3]
        %s2947 = scalar_lea.vmem %s9, 3
        %v2948 = vld [vmem:[%s2947] ss:$8 sm:$0x3]
        %v2949 = vadd.f32 %v2942, %v2943
        %2950 = vadd.xlane.f32.xlu0 %v2949
        %v2951 = vpop.xlane.xlu0 %2950
        %v2952 = vadd.f32 %v2944, %v2945
        %2953 = vadd.xlane.f32.xlu0 %v2952
        %v2954 = vpop.xlane.xlu0 %2953
        %v2955 = vrcp.pop 256.0
        %v2956 = vmul.f32 %v2951, %v2955
        %v2957 = vmul.f32 %v2954, %v2955
        %v2958 = vsub.f32 %v2942, %v2956
        %v2959 = vsub.f32 %v2943, %v2956
        %v2960 = vsub.f32 %v2944, %v2957
        %v2961 = vsub.f32 %v2945, %v2957
        %v2962 = vmul.f32 %v2958, %v2958
        %v2963 = vmul.f32 %v2959, %v2959
        %v2964 = vmul.f32 %v2960, %v2960
        %v2965 = vmul.f32 %v2961, %v2961
        %v2966 = vadd.f32 %v2962, %v2963
        %2967 = vadd.xlane.f32.xlu0 %v2966
        %v2968 = vpop.xlane.xlu0 %2967
        %v2969 = vadd.f32 %v2964, %v2965
        %2970 = vadd.xlane.f32.xlu0 %v2969
        %v2971 = vpop.xlane.xlu0 %2970
        %v2972 = vmul.f32 %v2968, %v2955
        %v2973 = vmul.f32 %v2971, %v2955
        %v2974 = vadd.f32 %v2972, 1e-05
        %v2975 = vadd.f32 %v2973, 1e-05
        %v2976 = vrsqrt.pop %v2974
        %v2977 = vrsqrt.pop %v2975
        %v2978 = vmul.f32 %v2958, %v2976
        %v2979 = vmul.f32 %v2959, %v2976
        %v2980 = vmul.f32 %v2960, %v2977
        %v2981 = vmul.f32 %v2961, %v2977
        %v2983 = vlaneseq
        %v2984 = vshrl.u32 %v2983, 7
        %v2985 = vsub.s32 0, %v2984
        %v2986 = vrot.slane %v2946, %v2985
        %v2987 = vlaneseq
        %v2988 = vshrl.u32 %v2987, 7
        %v2989 = vsub.s32 1, %v2988
        %v2990 = vrot.slane %v2946, %v2989
        %v2993 = vmul.f32 %v2978, %v2986
        %v2994 = vmul.f32 %v2979, %v2990
        %v2995 = vmul.f32 %v2980, %v2986
        %v2996 = vmul.f32 %v2981, %v2990
        %v2998 = vlaneseq
        %v2999 = vshrl.u32 %v2998, 7
        %v3000 = vsub.s32 0, %v2999
        %v3001 = vrot.slane %v2948, %v3000
        %v3002 = vlaneseq
        %v3003 = vshrl.u32 %v3002, 7
        %v3004 = vsub.s32 1, %v3003
        %v3005 = vrot.slane %v2948, %v3004
        %v3008 = vadd.f32 %v2993, %v3001
        %v3009 = vadd.f32 %v2994, %v3005
        %v3010 = vadd.f32 %v2995, %v3001
        %v3011 = vadd.f32 %v2996, %v3005
        %v3012 = vld [vmem:[%s472] sm:$0x3]
        %v3014 = vlaneseq
        %v3015 = vshrl.u32 %v3014, 7
        %v3016 = vsub.s32 0, %v3015
        %v3017 = vrot.slane %v3012, %v3016
        %v3018 = vlaneseq
        %v3019 = vshrl.u32 %v3018, 7
        %v3020 = vsub.s32 1, %v3019
        %v3021 = vrot.slane %v3012, %v3020
        %v3024 = vadd.f32 %v3008, %v3017
        %v3025 = vadd.f32 %v3009, %v3021
        %v3026 = vadd.f32 %v3010, %v3017
        %v3027 = vadd.f32 %v3011, %v3021
        %s3028 = scalar_lea.vmem %s9, 1
        %v3029 = vld [vmem:[%s3028] ss:$8 sm:$0x3]
        %s3030 = scalar_lea.vmem %s9, 4
        %v3031 = vld [vmem:[%s3030] ss:$8 sm:$0x3]
        %v3032 = vadd.f32 %v3024, %v3025
        %3033 = vadd.xlane.f32.xlu0 %v3032
        %v3034 = vpop.xlane.xlu0 %3033
        %v3035 = vadd.f32 %v3026, %v3027
        %3036 = vadd.xlane.f32.xlu0 %v3035
        %v3037 = vpop.xlane.xlu0 %3036
        %v3038 = vmul.f32 %v3034, %v2955
        %v3039 = vmul.f32 %v3037, %v2955
        %v3040 = vsub.f32 %v3024, %v3038
        %v3041 = vsub.f32 %v3025, %v3038
        %v3042 = vsub.f32 %v3026, %v3039
        %v3043 = vsub.f32 %v3027, %v3039
        %v3044 = vmul.f32 %v3040, %v3040
        %v3045 = vmul.f32 %v3041, %v3041
        %v3046 = vmul.f32 %v3042, %v3042
        %v3047 = vmul.f32 %v3043, %v3043
        %v3048 = vadd.f32 %v3044, %v3045
        %3049 = vadd.xlane.f32.xlu0 %v3048
        %v3050 = vpop.xlane.xlu0 %3049
        %v3051 = vadd.f32 %v3046, %v3047
        %3052 = vadd.xlane.f32.xlu0 %v3051
        %v3053 = vpop.xlane.xlu0 %3052
        %v3054 = vmul.f32 %v3050, %v2955
        %v3055 = vmul.f32 %v3053, %v2955
        %v3056 = vadd.f32 %v3054, 1e-05
        %v3057 = vadd.f32 %v3055, 1e-05
        %v3058 = vrsqrt.pop %v3056
        %v3059 = vrsqrt.pop %v3057
        %v3060 = vmul.f32 %v3040, %v3058
        %v3061 = vmul.f32 %v3041, %v3058
        %v3062 = vmul.f32 %v3042, %v3059
        %v3063 = vmul.f32 %v3043, %v3059
        %v3065 = vlaneseq
        %v3066 = vshrl.u32 %v3065, 7
        %v3067 = vsub.s32 0, %v3066
        %v3068 = vrot.slane %v3029, %v3067
        %v3069 = vlaneseq
        %v3070 = vshrl.u32 %v3069, 7
        %v3071 = vsub.s32 1, %v3070
        %v3072 = vrot.slane %v3029, %v3071
        %v3075 = vmul.f32 %v3060, %v3068
        %v3076 = vmul.f32 %v3061, %v3072
        %v3077 = vmul.f32 %v3062, %v3068
        %v3078 = vmul.f32 %v3063, %v3072
        %v3080 = vlaneseq
        %v3081 = vshrl.u32 %v3080, 7
        %v3082 = vsub.s32 0, %v3081
        %v3083 = vrot.slane %v3031, %v3082
        %v3084 = vlaneseq
        %v3085 = vshrl.u32 %v3084, 7
        %v3086 = vsub.s32 1, %v3085
        %v3087 = vrot.slane %v3031, %v3086
        %v3090 = vadd.f32 %v3075, %v3083
        %v3091 = vadd.f32 %v3076, %v3087
        %v3092 = vadd.f32 %v3077, %v3083
        %v3093 = vadd.f32 %v3078, %v3087
        %v3094 = vpack.c.bf16 %v3092, %v3090
        %v3095 = vpack.c.bf16 %v3093, %v3091
        %v3096 = vld [vmem:[#allocation12] sm:$0xff]
        %v3097 = vld [vmem:[#allocation12 + $0x8] sm:$0xff]
        %v3098 = vld [vmem:[#allocation12 + $0x10] sm:$0xff]
        %v3099 = vld [vmem:[#allocation12 + $0x18] sm:$0xff]
        %v3100 = vld [vmem:[#allocation12 + $0x20] sm:$0xff]
        %v3101 = vld [vmem:[#allocation12 + $0x28] sm:$0xff]
        %v3102 = vld [vmem:[#allocation12 + $0x30] sm:$0xff]
        %v3103 = vld [vmem:[#allocation12 + $0x38] sm:$0xff]
        %v3104 = vld [vmem:[#allocation12 + $0x40] sm:$0xff]
        %v3105 = vld [vmem:[#allocation12 + $0x48] sm:$0xff]
        %v3106 = vld [vmem:[#allocation12 + $0x50] sm:$0xff]
        %v3107 = vld [vmem:[#allocation12 + $0x58] sm:$0xff]
        %v3108 = vld [vmem:[#allocation12 + $0x60] sm:$0xff]
        %v3109 = vld [vmem:[#allocation12 + $0x68] sm:$0xff]
        %v3110 = vld [vmem:[#allocation12 + $0x70] sm:$0xff]
        %v3111 = vld [vmem:[#allocation12 + $0x78] sm:$0xff]
        %v3112 = vld [vmem:[#allocation12 + $0x80] sm:$0xff]
        %v3113 = vld [vmem:[#allocation12 + $0x88] sm:$0xff]
        %v3114 = vld [vmem:[#allocation12 + $0x90] sm:$0xff]
        %v3115 = vld [vmem:[#allocation12 + $0x98] sm:$0xff]
        %v3116 = vld [vmem:[#allocation12 + $0xa0] sm:$0xff]
        %v3117 = vld [vmem:[#allocation12 + $0xa8] sm:$0xff]
        %v3118 = vld [vmem:[#allocation12 + $0xb0] sm:$0xff]
        %v3119 = vld [vmem:[#allocation12 + $0xb8] sm:$0xff]
        %v3120 = vld [vmem:[#allocation12 + $0xc0] sm:$0xff]
        %v3121 = vld [vmem:[#allocation12 + $0xc8] sm:$0xff]
        %v3122 = vld [vmem:[#allocation12 + $0xd0] sm:$0xff]
        %v3123 = vld [vmem:[#allocation12 + $0xd8] sm:$0xff]
        %v3124 = vld [vmem:[#allocation12 + $0xe0] sm:$0xff]
        %v3125 = vld [vmem:[#allocation12 + $0xe8] sm:$0xff]
        %v3126 = vld [vmem:[#allocation12 + $0xf0] sm:$0xff]
        %v3127 = vld [vmem:[#allocation12 + $0xf8] sm:$0xff]
        %v3128 = vld [vmem:[#allocation14] sm:$0x3]
        %v3130 = vlaneseq
        %v3131 = vshrl.u32 %v3130, 7
        %v3132 = vsub.s32 0, %v3131
        %v3133 = vrot.slane %v3128, %v3132
        %v3134 = vlaneseq
        %v3135 = vshrl.u32 %v3134, 7
        %v3136 = vsub.s32 1, %v3135
        %v3137 = vrot.slane %v3128, %v3136
        %v3172 = vunpack.c.l.b16 %v3096
        %v3173 = vunpack.c.h.b16 %v3096
        %v3174 = vunpack.c.l.b16 %v3097
        %v3175 = vunpack.c.h.b16 %v3097
        %v3176 = vunpack.c.l.b16 %v3098
        %v3177 = vunpack.c.h.b16 %v3098
        %v3178 = vunpack.c.l.b16 %v3099
        %v3179 = vunpack.c.h.b16 %v3099
        %v3180 = vunpack.c.l.b16 %v3100
        %v3181 = vunpack.c.h.b16 %v3100
        %v3182 = vunpack.c.l.b16 %v3101
        %v3183 = vunpack.c.h.b16 %v3101
        %v3184 = vunpack.c.l.b16 %v3102
        %v3185 = vunpack.c.h.b16 %v3102
        %v3186 = vunpack.c.l.b16 %v3103
        %v3187 = vunpack.c.h.b16 %v3103
        %v3188 = vunpack.c.l.b16 %v3104
        %v3189 = vunpack.c.h.b16 %v3104
        %v3190 = vunpack.c.l.b16 %v3105
        %v3191 = vunpack.c.h.b16 %v3105
        %v3192 = vunpack.c.l.b16 %v3106
        %v3193 = vunpack.c.h.b16 %v3106
        %v3194 = vunpack.c.l.b16 %v3107
        %v3195 = vunpack.c.h.b16 %v3107
        %v3196 = vunpack.c.l.b16 %v3108
        %v3197 = vunpack.c.h.b16 %v3108
        %v3198 = vunpack.c.l.b16 %v3109
        %v3199 = vunpack.c.h.b16 %v3109
        %v3200 = vunpack.c.l.b16 %v3110
        %v3201 = vunpack.c.h.b16 %v3110
        %v3202 = vunpack.c.l.b16 %v3111
        %v3203 = vunpack.c.h.b16 %v3111
        %v3204 = vunpack.c.l.b16 %v3112
        %v3205 = vunpack.c.h.b16 %v3112
        %v3206 = vunpack.c.l.b16 %v3113
        %v3207 = vunpack.c.h.b16 %v3113
        %v3208 = vunpack.c.l.b16 %v3114
        %v3209 = vunpack.c.h.b16 %v3114
        %v3210 = vunpack.c.l.b16 %v3115
        %v3211 = vunpack.c.h.b16 %v3115
        %v3212 = vunpack.c.l.b16 %v3116
        %v3213 = vunpack.c.h.b16 %v3116
        %v3214 = vunpack.c.l.b16 %v3117
        %v3215 = vunpack.c.h.b16 %v3117
        %v3216 = vunpack.c.l.b16 %v3118
        %v3217 = vunpack.c.h.b16 %v3118
        %v3218 = vunpack.c.l.b16 %v3119
        %v3219 = vunpack.c.h.b16 %v3119
        %v3220 = vunpack.c.l.b16 %v3120
        %v3221 = vunpack.c.h.b16 %v3120
        %v3222 = vunpack.c.l.b16 %v3121
        %v3223 = vunpack.c.h.b16 %v3121
        %v3224 = vunpack.c.l.b16 %v3122
        %v3225 = vunpack.c.h.b16 %v3122
        %v3226 = vunpack.c.l.b16 %v3123
        %v3227 = vunpack.c.h.b16 %v3123
        %v3228 = vunpack.c.l.b16 %v3124
        %v3229 = vunpack.c.h.b16 %v3124
        %v3230 = vunpack.c.l.b16 %v3125
        %v3231 = vunpack.c.h.b16 %v3125
        %v3232 = vunpack.c.l.b16 %v3126
        %v3233 = vunpack.c.h.b16 %v3126
        %v3234 = vunpack.c.l.b16 %v3127
        %v3235 = vunpack.c.h.b16 %v3127
        %v3236 = vpack.c.b16 %v3174, %v3172
        %v3237 = vpack.c.b16 %v3175, %v3173
        %v3238 = vpack.c.b16 %v3178, %v3176
        %v3239 = vpack.c.b16 %v3179, %v3177
        %v3240 = vpack.c.b16 %v3182, %v3180
        %v3241 = vpack.c.b16 %v3183, %v3181
        %v3242 = vpack.c.b16 %v3186, %v3184
        %v3243 = vpack.c.b16 %v3187, %v3185
        %v3244 = vpack.c.b16 %v3190, %v3188
        %v3245 = vpack.c.b16 %v3191, %v3189
        %v3246 = vpack.c.b16 %v3194, %v3192
        %v3247 = vpack.c.b16 %v3195, %v3193
        %v3248 = vpack.c.b16 %v3198, %v3196
        %v3249 = vpack.c.b16 %v3199, %v3197
        %v3250 = vpack.c.b16 %v3202, %v3200
        %v3251 = vpack.c.b16 %v3203, %v3201
        %v3252 = vpack.c.b16 %v3206, %v3204
        %v3253 = vpack.c.b16 %v3207, %v3205
        %v3254 = vpack.c.b16 %v3210, %v3208
        %v3255 = vpack.c.b16 %v3211, %v3209
        %v3256 = vpack.c.b16 %v3214, %v3212
        %v3257 = vpack.c.b16 %v3215, %v3213
        %v3258 = vpack.c.b16 %v3218, %v3216
        %v3259 = vpack.c.b16 %v3219, %v3217
        %v3260 = vpack.c.b16 %v3222, %v3220
        %v3261 = vpack.c.b16 %v3223, %v3221
        %v3262 = vpack.c.b16 %v3226, %v3224
        %v3263 = vpack.c.b16 %v3227, %v3225
        %v3264 = vpack.c.b16 %v3230, %v3228
        %v3265 = vpack.c.b16 %v3231, %v3229
        %v3266 = vpack.c.b16 %v3234, %v3232
        %v3267 = vpack.c.b16 %v3235, %v3233
        %3300 = vmatprep.subr.bf16.mxu0 %v3251
        %3301 = vmatpush1.bf16.msra.mxu0 %v3250
        %3302 = vmatprep.subr.bf16.mxu0 %v3249
        %3303 = vmatpush1.bf16.msra.mxu0 %v3248
        %3304 = vmatprep.subr.bf16.mxu0 %v3247
        %3305 = vmatpush1.bf16.msra.mxu0 %v3246
        %3306 = vmatprep.subr.bf16.mxu0 %v3245
        %3307 = vmatpush1.bf16.msra.mxu0 %v3244
        %3308 = vmatprep.subr.bf16.mxu0 %v3243
        %3309 = vmatpush1.bf16.msra.mxu0 %v3242
        %3310 = vmatprep.subr.bf16.mxu0 %v3241
        %3311 = vmatpush1.bf16.msra.mxu0 %v3240
        %3312 = vmatprep.subr.bf16.mxu0 %v3239
        %3313 = vmatpush1.bf16.msra.mxu0 %v3238
        %3314 = vmatprep.subr.bf16.mxu0 %v3237
        %3315 = vmatpush1.bf16.msra.mxu0 %v3236
        %3316 = vmatprep.subr.bf16.mxu0 %v3267
        %3317 = vmatpush2.bf16.msra.mxu0 %v3266
        %3318 = vmatprep.subr.bf16.mxu0 %v3265
        %3319 = vmatpush2.bf16.msra.mxu0 %v3264
        %3320 = vmatprep.subr.bf16.mxu0 %v3263
        %3321 = vmatpush2.bf16.msra.mxu0 %v3262
        %3322 = vmatprep.subr.bf16.mxu0 %v3261
        %3323 = vmatpush2.bf16.msra.mxu0 %v3260
        %3324 = vmatprep.subr.bf16.mxu0 %v3259
        %3325 = vmatpush2.bf16.msra.mxu0 %v3258
        %3326 = vmatprep.subr.bf16.mxu0 %v3257
        %3327 = vmatpush2.bf16.msra.mxu0 %v3256
        %3328 = vmatprep.subr.bf16.mxu0 %v3255
        %3329 = vmatpush2.bf16.msra.mxu0 %v3254
        %3330 = vmatprep.subr.bf16.mxu0 %v3253
        %3331 = vmatpush2.bf16.msra.mxu0 %v3252
        %3332 = vmatprep.mubr.bf16.mxu0 %v3095
        %3333 = vmatmul.mubr.bf16.gmra.mxu0 %v3094
        %v3334 = vpop.f32.mrf.mxu0
        %v3335 = vadd.f32 %v3133, %v3334
        %v3336 = vpop.f32.mrf.mxu0
        %v3337 = vadd.f32 %v3137, %v3336
        %v3338 = vpop.f32.mrf.mxu0
        %v3339 = vadd.f32 %v3133, %v3338
        %v3340 = vpop.f32.mrf.mxu0
        %v3341 = vadd.f32 %v3137, %v3340
        %3342 = vdwg.mxu0
        %v3343 = vmax.f32 %v3335, 0.0
        %v3344 = vmax.f32 %v3337, 0.0
        %v3345 = vmax.f32 %v3339, 0.0
        %v3346 = vmax.f32 %v3341, 0.0
        %v3347 = vpack.c.bf16 %v3345, %v3343
        %v3348 = vpack.c.bf16 %v3346, %v3344
        %v3349 = vld [vmem:[#allocation15] sm:$0xff]
        %v3350 = vld [vmem:[#allocation15 + $0x8] sm:$0xff]
        %v3351 = vld [vmem:[#allocation15 + $0x10] sm:$0xff]
        %v3352 = vld [vmem:[#allocation15 + $0x18] sm:$0xff]
        %v3353 = vld [vmem:[#allocation15 + $0x20] sm:$0xff]
        %v3354 = vld [vmem:[#allocation15 + $0x28] sm:$0xff]
        %v3355 = vld [vmem:[#allocation15 + $0x30] sm:$0xff]
        %v3356 = vld [vmem:[#allocation15 + $0x38] sm:$0xff]
        %v3357 = vld [vmem:[#allocation15 + $0x40] sm:$0xff]
        %v3358 = vld [vmem:[#allocation15 + $0x48] sm:$0xff]
        %v3359 = vld [vmem:[#allocation15 + $0x50] sm:$0xff]
        %v3360 = vld [vmem:[#allocation15 + $0x58] sm:$0xff]
        %v3361 = vld [vmem:[#allocation15 + $0x60] sm:$0xff]
        %v3362 = vld [vmem:[#allocation15 + $0x68] sm:$0xff]
        %v3363 = vld [vmem:[#allocation15 + $0x70] sm:$0xff]
        %v3364 = vld [vmem:[#allocation15 + $0x78] sm:$0xff]
        %v3365 = vld [vmem:[#allocation15 + $0x80] sm:$0xff]
        %v3366 = vld [vmem:[#allocation15 + $0x88] sm:$0xff]
        %v3367 = vld [vmem:[#allocation15 + $0x90] sm:$0xff]
        %v3368 = vld [vmem:[#allocation15 + $0x98] sm:$0xff]
        %v3369 = vld [vmem:[#allocation15 + $0xa0] sm:$0xff]
        %v3370 = vld [vmem:[#allocation15 + $0xa8] sm:$0xff]
        %v3371 = vld [vmem:[#allocation15 + $0xb0] sm:$0xff]
        %v3372 = vld [vmem:[#allocation15 + $0xb8] sm:$0xff]
        %v3373 = vld [vmem:[#allocation15 + $0xc0] sm:$0xff]
        %v3374 = vld [vmem:[#allocation15 + $0xc8] sm:$0xff]
        %v3375 = vld [vmem:[#allocation15 + $0xd0] sm:$0xff]
        %v3376 = vld [vmem:[#allocation15 + $0xd8] sm:$0xff]
        %v3377 = vld [vmem:[#allocation15 + $0xe0] sm:$0xff]
        %v3378 = vld [vmem:[#allocation15 + $0xe8] sm:$0xff]
        %v3379 = vld [vmem:[#allocation15 + $0xf0] sm:$0xff]
        %v3380 = vld [vmem:[#allocation15 + $0xf8] sm:$0xff]
        %v3381 = vld [vmem:[#allocation17] sm:$0x3]
        %v3383 = vlaneseq
        %v3384 = vshrl.u32 %v3383, 7
        %v3385 = vsub.s32 0, %v3384
        %v3386 = vrot.slane %v3381, %v3385
        %v3387 = vlaneseq
        %v3388 = vshrl.u32 %v3387, 7
        %v3389 = vsub.s32 1, %v3388
        %v3390 = vrot.slane %v3381, %v3389
        %v3425 = vunpack.c.l.b16 %v3349
        %v3426 = vunpack.c.h.b16 %v3349
        %v3427 = vunpack.c.l.b16 %v3350
        %v3428 = vunpack.c.h.b16 %v3350
        %v3429 = vunpack.c.l.b16 %v3351
        %v3430 = vunpack.c.h.b16 %v3351
        %v3431 = vunpack.c.l.b16 %v3352
        %v3432 = vunpack.c.h.b16 %v3352
        %v3433 = vunpack.c.l.b16 %v3353
        %v3434 = vunpack.c.h.b16 %v3353
        %v3435 = vunpack.c.l.b16 %v3354
        %v3436 = vunpack.c.h.b16 %v3354
        %v3437 = vunpack.c.l.b16 %v3355
        %v3438 = vunpack.c.h.b16 %v3355
        %v3439 = vunpack.c.l.b16 %v3356
        %v3440 = vunpack.c.h.b16 %v3356
        %v3441 = vunpack.c.l.b16 %v3357
        %v3442 = vunpack.c.h.b16 %v3357
        %v3443 = vunpack.c.l.b16 %v3358
        %v3444 = vunpack.c.h.b16 %v3358
        %v3445 = vunpack.c.l.b16 %v3359
        %v3446 = vunpack.c.h.b16 %v3359
        %v3447 = vunpack.c.l.b16 %v3360
        %v3448 = vunpack.c.h.b16 %v3360
        %v3449 = vunpack.c.l.b16 %v3361
        %v3450 = vunpack.c.h.b16 %v3361
        %v3451 = vunpack.c.l.b16 %v3362
        %v3452 = vunpack.c.h.b16 %v3362
        %v3453 = vunpack.c.l.b16 %v3363
        %v3454 = vunpack.c.h.b16 %v3363
        %v3455 = vunpack.c.l.b16 %v3364
        %v3456 = vunpack.c.h.b16 %v3364
        %v3457 = vunpack.c.l.b16 %v3365
        %v3458 = vunpack.c.h.b16 %v3365
        %v3459 = vunpack.c.l.b16 %v3366
        %v3460 = vunpack.c.h.b16 %v3366
        %v3461 = vunpack.c.l.b16 %v3367
        %v3462 = vunpack.c.h.b16 %v3367
        %v3463 = vunpack.c.l.b16 %v3368
        %v3464 = vunpack.c.h.b16 %v3368
        %v3465 = vunpack.c.l.b16 %v3369
        %v3466 = vunpack.c.h.b16 %v3369
        %v3467 = vunpack.c.l.b16 %v3370
        %v3468 = vunpack.c.h.b16 %v3370
        %v3469 = vunpack.c.l.b16 %v3371
        %v3470 = vunpack.c.h.b16 %v3371
        %v3471 = vunpack.c.l.b16 %v3372
        %v3472 = vunpack.c.h.b16 %v3372
        %v3473 = vunpack.c.l.b16 %v3373
        %v3474 = vunpack.c.h.b16 %v3373
        %v3475 = vunpack.c.l.b16 %v3374
        %v3476 = vunpack.c.h.b16 %v3374
        %v3477 = vunpack.c.l.b16 %v3375
        %v3478 = vunpack.c.h.b16 %v3375
        %v3479 = vunpack.c.l.b16 %v3376
        %v3480 = vunpack.c.h.b16 %v3376
        %v3481 = vunpack.c.l.b16 %v3377
        %v3482 = vunpack.c.h.b16 %v3377
        %v3483 = vunpack.c.l.b16 %v3378
        %v3484 = vunpack.c.h.b16 %v3378
        %v3485 = vunpack.c.l.b16 %v3379
        %v3486 = vunpack.c.h.b16 %v3379
        %v3487 = vunpack.c.l.b16 %v3380
        %v3488 = vunpack.c.h.b16 %v3380
        %v3489 = vpack.c.b16 %v3427, %v3425
        %v3490 = vpack.c.b16 %v3428, %v3426
        %v3491 = vpack.c.b16 %v3431, %v3429
        %v3492 = vpack.c.b16 %v3432, %v3430
        %v3493 = vpack.c.b16 %v3435, %v3433
        %v3494 = vpack.c.b16 %v3436, %v3434
        %v3495 = vpack.c.b16 %v3439, %v3437
        %v3496 = vpack.c.b16 %v3440, %v3438
        %v3497 = vpack.c.b16 %v3443, %v3441
        %v3498 = vpack.c.b16 %v3444, %v3442
        %v3499 = vpack.c.b16 %v3447, %v3445
        %v3500 = vpack.c.b16 %v3448, %v3446
        %v3501 = vpack.c.b16 %v3451, %v3449
        %v3502 = vpack.c.b16 %v3452, %v3450
        %v3503 = vpack.c.b16 %v3455, %v3453
        %v3504 = vpack.c.b16 %v3456, %v3454
        %v3505 = vpack.c.b16 %v3459, %v3457
        %v3506 = vpack.c.b16 %v3460, %v3458
        %v3507 = vpack.c.b16 %v3463, %v3461
        %v3508 = vpack.c.b16 %v3464, %v3462
        %v3509 = vpack.c.b16 %v3467, %v3465
        %v3510 = vpack.c.b16 %v3468, %v3466
        %v3511 = vpack.c.b16 %v3471, %v3469
        %v3512 = vpack.c.b16 %v3472, %v3470
        %v3513 = vpack.c.b16 %v3475, %v3473
        %v3514 = vpack.c.b16 %v3476, %v3474
        %v3515 = vpack.c.b16 %v3479, %v3477
        %v3516 = vpack.c.b16 %v3480, %v3478
        %v3517 = vpack.c.b16 %v3483, %v3481
        %v3518 = vpack.c.b16 %v3484, %v3482
        %v3519 = vpack.c.b16 %v3487, %v3485
        %v3520 = vpack.c.b16 %v3488, %v3486
        %3553 = vmatprep.subr.bf16.mxu0 %v3504
        %3554 = vmatpush1.bf16.msra.mxu0 %v3503
        %3555 = vmatprep.subr.bf16.mxu0 %v3502
        %3556 = vmatpush1.bf16.msra.mxu0 %v3501
        %3557 = vmatprep.subr.bf16.mxu0 %v3500
        %3558 = vmatpush1.bf16.msra.mxu0 %v3499
        %3559 = vmatprep.subr.bf16.mxu0 %v3498
        %3560 = vmatpush1.bf16.msra.mxu0 %v3497
        %3561 = vmatprep.subr.bf16.mxu0 %v3496
        %3562 = vmatpush1.bf16.msra.mxu0 %v3495
        %3563 = vmatprep.subr.bf16.mxu0 %v3494
        %3564 = vmatpush1.bf16.msra.mxu0 %v3493
        %3565 = vmatprep.subr.bf16.mxu0 %v3492
        %3566 = vmatpush1.bf16.msra.mxu0 %v3491
        %3567 = vmatprep.subr.bf16.mxu0 %v3490
        %3568 = vmatpush1.bf16.msra.mxu0 %v3489
        %3569 = vmatprep.subr.bf16.mxu0 %v3520
        %3570 = vmatpush2.bf16.msra.mxu0 %v3519
        %3571 = vmatprep.subr.bf16.mxu0 %v3518
        %3572 = vmatpush2.bf16.msra.mxu0 %v3517
        %3573 = vmatprep.subr.bf16.mxu0 %v3516
        %3574 = vmatpush2.bf16.msra.mxu0 %v3515
        %3575 = vmatprep.subr.bf16.mxu0 %v3514
        %3576 = vmatpush2.bf16.msra.mxu0 %v3513
        %3577 = vmatprep.subr.bf16.mxu0 %v3512
        %3578 = vmatpush2.bf16.msra.mxu0 %v3511
        %3579 = vmatprep.subr.bf16.mxu0 %v3510
        %3580 = vmatpush2.bf16.msra.mxu0 %v3509
        %3581 = vmatprep.subr.bf16.mxu0 %v3508
        %3582 = vmatpush2.bf16.msra.mxu0 %v3507
        %3583 = vmatprep.subr.bf16.mxu0 %v3506
        %3584 = vmatpush2.bf16.msra.mxu0 %v3505
        %3585 = vmatprep.mubr.bf16.mxu0 %v3348
        %3586 = vmatmul.mubr.bf16.gmra.mxu0 %v3347
        %v3587 = vpop.f32.mrf.mxu0
        %v3588 = vadd.f32 %v3386, %v3587
        %v3589 = vpop.f32.mrf.mxu0
        %v3590 = vadd.f32 %v3390, %v3589
        %v3591 = vpop.f32.mrf.mxu0
        %v3592 = vadd.f32 %v3386, %v3591
        %v3593 = vpop.f32.mrf.mxu0
        %v3594 = vadd.f32 %v3390, %v3593
        %3595 = vdwg.mxu0
        %v3596 = vadd.f32 %v3090, %v3588
        %v3597 = vadd.f32 %v3091, %v3590
        %v3598 = vadd.f32 %v3092, %v3592
        %v3599 = vadd.f32 %v3093, %v3594
        %s3600 = scalar_lea.vmem %s9, 2
        %v3601 = vld [vmem:[%s3600] ss:$8 sm:$0x3]
        %s3602 = scalar_lea.vmem %s9, 5
        %v3603 = vld [vmem:[%s3602] ss:$8 sm:$0x3]
        %v3604 = vadd.f32 %v3596, %v3597
        %3605 = vadd.xlane.f32.xlu0 %v3604
        %v3606 = vpop.xlane.xlu0 %3605
        %v3607 = vadd.f32 %v3598, %v3599
        %3608 = vadd.xlane.f32.xlu0 %v3607
        %v3609 = vpop.xlane.xlu0 %3608
        %v3610 = vmul.f32 %v3606, %v2955
        %v3611 = vmul.f32 %v3609, %v2955
        %v3612 = vsub.f32 %v3596, %v3610
        %v3613 = vsub.f32 %v3597, %v3610
        %v3614 = vsub.f32 %v3598, %v3611
        %v3615 = vsub.f32 %v3599, %v3611
        %v3616 = vmul.f32 %v3612, %v3612
        %v3617 = vmul.f32 %v3613, %v3613
        %v3618 = vmul.f32 %v3614, %v3614
        %v3619 = vmul.f32 %v3615, %v3615
        %v3620 = vadd.f32 %v3616, %v3617
        %3621 = vadd.xlane.f32.xlu0 %v3620
        %v3622 = vpop.xlane.xlu0 %3621
        %v3623 = vadd.f32 %v3618, %v3619
        %3624 = vadd.xlane.f32.xlu0 %v3623
        %v3625 = vpop.xlane.xlu0 %3624
        %v3626 = vmul.f32 %v3622, %v2955
        %v3627 = vmul.f32 %v3625, %v2955
        %v3628 = vadd.f32 %v3626, 1e-05
        %v3629 = vadd.f32 %v3627, 1e-05
        %v3630 = vrsqrt.pop %v3628
        %v3631 = vrsqrt.pop %v3629
        %v3632 = vmul.f32 %v3612, %v3630
        %v3633 = vmul.f32 %v3613, %v3630
        %v3634 = vmul.f32 %v3614, %v3631
        %v3635 = vmul.f32 %v3615, %v3631
        %v3637 = vlaneseq
        %v3638 = vshrl.u32 %v3637, 7
        %v3639 = vsub.s32 0, %v3638
        %v3640 = vrot.slane %v3601, %v3639
        %v3641 = vlaneseq
        %v3642 = vshrl.u32 %v3641, 7
        %v3643 = vsub.s32 1, %v3642
        %v3644 = vrot.slane %v3601, %v3643
        %v3647 = vmul.f32 %v3632, %v3640
        %v3648 = vmul.f32 %v3633, %v3644
        %v3649 = vmul.f32 %v3634, %v3640
        %v3650 = vmul.f32 %v3635, %v3644
        %v3652 = vlaneseq
        %v3653 = vshrl.u32 %v3652, 7
        %v3654 = vsub.s32 0, %v3653
        %v3655 = vrot.slane %v3603, %v3654
        %v3656 = vlaneseq
        %v3657 = vshrl.u32 %v3656, 7
        %v3658 = vsub.s32 1, %v3657
        %v3659 = vrot.slane %v3603, %v3658
        %v3662 = vadd.f32 %v3647, %v3655
        %v3663 = vadd.f32 %v3648, %v3659
        %v3664 = vadd.f32 %v3649, %v3655
        %v3665 = vadd.f32 %v3650, %v3659
        %3666 = vst [vmem:[%s541] sm:$0xff] %v3662
        %3667 = vst [vmem:[%s541 + $0x8] sm:$0xff] %v3663
        %3668 = vst [vmem:[%s541 + $0x10] sm:$0xff] %v3664
        %3669 = vst [vmem:[%s541 + $0x18] sm:$0xff] %v3665
        %s3670 = sand.u32 %s280, 1
        %s3671 = scalar_lea.sflag [#allocation5], %s3670
        %s3672 = sand.u32 %s280, 1
        %s3673 = smul.addr %s3672, 32
        %s3674 = scalar_lea.vmem [#allocation18], %s3673
        // Predicated region
        $region101: #{tpu_custom_call.1} parent=59 // pred_check
          %p3675 = pneg %p290
        $region102: #{tpu_custom_call.1} parent=59 // pred_check_branch
          %3677 = sbr.rel (%p3675) target = $region104
        $region103: #{tpu_custom_call.1} parent=59 // pred_region
          %s3678 = smul.u32 2, %s38
          %s3680 = ssub.s32 512, 512
          %3681 = vsyncadd %s3671, %s3680
          %s3682 = smul.addr %s3678, 2
          %s3683 = smul.addr %s37, 4
          %s3684 = sadd.s32 %s3682, %s3683
          %s3685 = smul.addr %s3684, 128
          %s3686 = scalar_lea.hbm %s10, %s3685
          %s3687 = sshll.u32 %s3674, 4
          %s3688 = int_to_ptr.vmem [resolvable:$true] %s3687
          %3693 = dma.vmem_to_hbm [thread:$0]  %s3688, 512, %s3686, %s3671, 256, 256, 16
        $region104: #{tpu_custom_call.1} parent=59 // pred_fallthru
          _
      $region60: #{tpu_custom_call.1} parent=5 // pred_fallthru
        _
      %p3694 = scmp.le.s32.totalorder 2, %s28
      // Predicated region
      $region105: #{tpu_custom_call.1} parent=5 // pred_check
        %p3695 = pneg %p3694
      $region106: #{tpu_custom_call.1} parent=5 // pred_check_branch
        %3697 = sbr.rel (%p3695) target = $region108
      $region107: #{tpu_custom_call.1} parent=5 // pred_region
        %s3698 = ssub.s32 %s28, 2
        // Predicated region
        $region109: #{tpu_custom_call.1} parent=107 // pred_check
          %p3699 = pneg %p296
        $region110: #{tpu_custom_call.1} parent=107 // pred_check_branch
          %3701 = sbr.rel (%p3699) target = $region112
        $region111: #{tpu_custom_call.1} parent=107 // pred_region
          %s3702 = sand.u32 %s281, 1
          %s3703 = scalar_lea.sflag [#allocation5], %s3702
          %s3704 = sand.u32 %s281, 1
          %s3705 = smul.addr %s3704, 32
          %s3706 = scalar_lea.vmem [#allocation18], %s3705
          %3707 = dma.done %s3703, 512
        $region112: #{tpu_custom_call.1} parent=107 // pred_fallthru
          _
      $region108: #{tpu_custom_call.1} parent=5 // pred_fallthru
        _
    $region6: #{tpu_custom_call.1} parent=1 // loop_footer
      %s32 = sadd.s32 1, %s28
    $region7: #{tpu_custom_call.1} parent=1 // loop_footer_branch
      %27 = sbr.rel target = $region3
    $region8: #{tpu_custom_call.1} parent=1 // loop_exit
      _
    %3708 = vsyncpa [#allocation4], 1
    %s3709 = scalar_lea.sflag [#allocation4], 1
    %3710 = vsyncpa %s3709, 1
    %3711 = vsyncpa [#allocation7], 1
    %s3712 = scalar_lea.sflag [#allocation7], 1
    %3713 = vsyncpa %s3712, 1
    %3714 = vsyncpa [#allocation10], 1
    %3715 = vsyncpa [#allocation13], 1
    %3716 = vsyncpa [#allocation16], 1
    %3717 = vsyncpa [#allocation5], 1
    %s3718 = scalar_lea.sflag [#allocation5], 1
    %3719 = vsyncpa %s3718, 1

</llo_original>
